<compile_context>
chip_gen: v7x
topology: tpu7x:2x2x1
jax: 0.10.0
libtpu: 0.0.40
codegen_flags: <defaults>
</compile_context>

<pallas_src>
import functools
import math

import jax
import jax.numpy as jnp
import numpy as np
from jax.experimental import pallas as pl
from jax.experimental.pallas import tpu as pltpu

# Small, test-friendly sizes (module default channels=128; we use 32 here).
C = 32                   # channels
K = 3                    # kernel_size
L = 64                   # input sequence length
L1 = L - (K - 1)         # 62  after conv1 (valid)
P1 = L1 // 2             # 31  after maxpool1
L2 = P1 - (K - 1)        # 29  after conv2
P2 = L2 // 2             # 14  after maxpool2
L3 = P2 - (K - 1)        # 12  after conv3

LANE_PACK = 4            # batch rows packed along lanes: 4 * C = 128 lanes
NLANES = LANE_PACK * C   # 128
TAPLANES = K * LANE_PACK  # 12 lanes of the im2col'd conv1 input
H2_PAD = 32              # per-group scratch rows for conv2 output (29 -> 32)
MAX_GROUPS_PER_STEP = 4  # 4-row groups handled per grid step (static unroll)


def _elu(x):
    # PyTorch nn.ELU with alpha=1.0
    return jnp.where(x > 0, x, jnp.exp(x) - 1.0)


def encode_kernel(x_ref, w1_ref, b1_ref, w2_ref, b2_ref, w3_ref, b3_ref,
                  o_ref, h2_scr, *, groups_per_step):
    # x_ref:  (groups_per_step, 2, P1, 12) -- parity (even/odd conv1 output)
    #         on axis 1, time on sublanes, (tap, batch-lane) on lanes.
    # w1_ref: (12, 128) fused-tap, block-diagonal conv1 weight
    # w2_ref / w3_ref: (3*128, 128) fused-tap, block-diagonal conv weights
    # b*_ref: (1, 128)
    # o_ref:  (groups_per_step, L3, 128)
    w1 = w1_ref[...]
    b1 = b1_ref[...]
    w2 = w2_ref[...]
    b2 = b2_ref[...]
    w3 = w3_ref[...]
    b3 = b3_ref[...]

    for u in range(groups_per_step):              # static unroll over groups
        # ---- conv1 + ELU + maxpool1: one matmul per parity, then a max.
        se = jnp.dot(x_ref[u, 0, :, :], w1,
                     preferred_element_type=jnp.float32) + b1      # (P1, 128)
        so = jnp.dot(x_ref[u, 1, :, :], w1,
                     preferred_element_type=jnp.float32) + b1      # (P1, 128)
        p1 = jnp.maximum(_elu(se), _elu(so))                        # (P1, 128)

        # ---- conv2 + ELU: 3 taps fused into one MXU matmul (K = 384, N = 128)
        p1cat = jnp.concatenate(
            [p1[0:L2], p1[1:L2 + 1], p1[2:L2 + 2]], axis=1)         # (L2, 384)
        h2 = _elu(jnp.dot(p1cat, w2, preferred_element_type=jnp.float32) + b2)

        # ---- maxpool2: stage in VMEM and re-read with stride 2 (strided
        # slicing of values is not supported on TPU; strided ref reads are).
        srow = u * H2_PAD
        h2_scr[pl.ds(srow, L2), :] = h2
        p2 = jnp.maximum(h2_scr[pl.ds(srow, P2, stride=2), :],
                         h2_scr[pl.ds(srow + 1, P2, stride=2), :])  # (P2, 128)

        # ---- conv3 + ELU (fused taps); lane-dense (L3, 128) output store.
        p2cat = jnp.concatenate(
            [p2[0:L3], p2[1:L3 + 1], p2[2:L3 + 2]], axis=1)         # (L3, 384)
        o_ref[u] = _elu(
            jnp.dot(p2cat, w3, preferred_element_type=jnp.float32) + b3)


@jax.jit
def encode_pallas(x_ncl, w1, b1, w2, b2, w3, b3):
    """x_ncl: (B, 1, L) like PyTorch. Weights in PyTorch layout (Cout, Cin, K)."""
    B = x_ncl.shape[0]
    f32 = jnp.float32

    g_raw = -(-B // LANE_PACK)                    # raw number of 4-row groups
    gps = min(MAX_GROUPS_PER_STEP, g_raw)         # groups per grid step
    n_groups = -(-g_raw // gps) * gps             # padded group count
    bp = n_groups * LANE_PACK                     # padded batch

    # ---- pack input: group g holds batch rows 4g..4g+3
    x2 = x_ncl[:, 0, :].astype(f32)                               # (B, L)
    x2 = jnp.pad(x2, ((0, bp - B), (0, 0)))
    x_g = x2.reshape(n_groups, LANE_PACK, L)                      # (G, 4, L)

    # ---- wrapper-side im2col in maxpool-parity form for conv1:
    #   x_packed[g, p, t, dk*4 + j] = x[4g+j, 2t + p + dk]
    parities = []
    for p in range(2):
        per_tap = [x_g[:, :, p + dk: p + dk + 2 * (P1 - 1) + 1: 2]
                   for dk in range(K)]                            # K x (G,4,P1)
        t_arr = jnp.stack(per_tap, axis=1)                        # (G, K, 4, P1)
        t_arr = t_arr.transpose(0, 3, 1, 2)                       # (G, P1, K, 4)
        parities.append(t_arr.reshape(n_groups, P1, TAPLANES))
    x_packed = jnp.stack(parities, axis=1)                        # (G, 2, P1, 12)

    # ---- build lane-packed weights (block-diagonal over the 4 batch lanes)
    eye = jnp.eye(LANE_PACK, dtype=f32)
    w1k = jnp.transpose(w1[:, 0, :], (1, 0)).astype(f32)          # (K, C)
    # rows of w1p: index dk*4 + j; cols: j*C + c  ->  w1[c, 0, dk]
    w1p = jnp.concatenate(
        [jnp.kron(eye, w1k[dk][None, :]) for dk in range(K)], axis=0)  # (12,128)

    def fuse(w):  # w: (Cout, Cin, K) torch layout -> (3*128, 128)
        return jnp.concatenate(
            [jnp.kron(eye, jnp.transpose(w[:, :, dk], (1, 0)).astype(f32))
             for dk in range(K)], axis=0)

    w2p, w3p = fuse(w2), fuse(w3)
    b1e = jnp.tile(b1.astype(f32), LANE_PACK).reshape(1, NLANES)
    b2e = jnp.tile(b2.astype(f32), LANE_PACK).reshape(1, NLANES)
    b3e = jnp.tile(b3.astype(f32), LANE_PACK).reshape(1, NLANES)

    grid = (n_groups // gps,)
    out = pl.pallas_call(
        functools.partial(encode_kernel, groups_per_step=gps),
        out_shape=jax.ShapeDtypeStruct((n_groups, L3, NLANES), f32),
        grid_spec=pltpu.PrefetchScalarGridSpec(
            num_scalar_prefetch=0,
            grid=grid,
            in_specs=[
                pl.BlockSpec((gps, 2, P1, TAPLANES), lambda i: (i, 0, 0, 0)),  # x
                pl.BlockSpec((TAPLANES, NLANES), lambda i: (0, 0)),            # w1p
                pl.BlockSpec((1, NLANES), lambda i: (0, 0)),                   # b1
                pl.BlockSpec((K * NLANES, NLANES), lambda i: (0, 0)),          # w2p
                pl.BlockSpec((1, NLANES), lambda i: (0, 0)),                   # b2
                pl.BlockSpec((K * NLANES, NLANES), lambda i: (0, 0)),          # w3p
                pl.BlockSpec((1, NLANES), lambda i: (0, 0)),                   # b3
            ],
            out_specs=pl.BlockSpec((gps, L3, NLANES), lambda i: (i, 0, 0)),
            scratch_shapes=[pltpu.VMEM((gps * H2_PAD, NLANES), f32)],
        ),
        compiler_params=pltpu.CompilerParams(
            dimension_semantics=("parallel",)),
    )(x_packed, w1p, b1e, w2p, b2e, w3p, b3e)

    # ---- unpack lanes back to PyTorch NCL: (B, C, L3)
    out = out.reshape(n_groups, L3, LANE_PACK, C).transpose(0, 2, 3, 1)
    return out.reshape(bp, C, L3)[:B]


def encode_ref(x_ncl, w1, b1, w2, b2, w3, b3):
    """Pure-JAX reference mirroring PyTorch semantics (NCL layout)."""
    def conv(x, w, b):
        y = jax.lax.conv_general_dilated(
            x, w, window_strides=(1,), padding='VALID',
            dimension_numbers=('NCH', 'OIH', 'NCH'))
        return y + b[None, :, None]

    def pool(x):
        lc = x.shape[-1] // 2
        return x[..., :2 * lc].reshape(x.shape[0], x.shape[1], lc, 2).max(-1)

    h = _elu(conv(x_ncl, w1, b1)); h = pool(h)
    h = _elu(conv(h, w2, b2));     h = pool(h)
    h = _elu(conv(h, w3, b3))
    return h


if __name__ == "__main__":
    key = jax.random.PRNGKey(0)
    kx, k1, k2, k3, kb1, kb2, kb3 = jax.random.split(key, 7)
    B = 24
    x = jax.random.normal(kx, (B, 1, L), jnp.float32)
    # Deterministic synthetic parameters (PyTorch Conv1d layout: (Cout, Cin, K))
    w1 = jax.random.normal(k1, (C, 1, K), jnp.float32) * 0.3
    b1 = jax.random.normal(kb1, (C,), jnp.float32) * 0.1
    w2 = jax.random.normal(k2, (C, C, K), jnp.float32) * (1.0 / math.sqrt(C * K))
    b2 = jax.random.normal(kb2, (C,), jnp.float32) * 0.1
    w3 = jax.random.normal(k3, (C, C, K), jnp.float32) * (1.0 / math.sqrt(C * K))
    b3 = jax.random.normal(kb3, (C,), jnp.float32) * 0.1

    out = encode_pallas(x, w1, b1, w2, b2, w3, b3)
    out = jax.block_until_ready(out)
    assert out.shape == (B, C, L3), out.shape

    ref = encode_ref(x, w1, b1, w2, b2, w3, b3)
    np.testing.assert_allclose(np.asarray(out), np.asarray(ref),
                               rtol=1e-3, atol=1e-3)
    print("KERNEL_OK")
</pallas_src>

<mosaic_0001>
module attributes {stable_mosaic.version = 11 : i64} {
  func.func @encode_kernel(%arg0: i32, %arg1: memref<4x2x31x12xf32, #tpu.memory_space<vmem>>, %arg2: memref<12x128xf32, #tpu.memory_space<vmem>>, %arg3: memref<1x128xf32, #tpu.memory_space<vmem>>, %arg4: memref<384x128xf32, #tpu.memory_space<vmem>>, %arg5: memref<1x128xf32, #tpu.memory_space<vmem>>, %arg6: memref<384x128xf32, #tpu.memory_space<vmem>>, %arg7: memref<1x128xf32, #tpu.memory_space<vmem>>, %arg8: memref<4x12x128xf32, #tpu.memory_space<vmem>>, %arg9: memref<128x128xf32, #tpu.memory_space<vmem>>) attributes {dimension_semantics = [#tpu.dimension_semantics<parallel>], iteration_bounds = array<i64: 2>, scalar_prefetch = 0 : i64, scratch_operands = 1 : i64, tpu.core_type = #tpu.core_type<tc>, window_params = [{transform_indices = @transform_0, window_bounds = array<i64: 4, 2, 31, 12>}, {pipeline_mode = #tpu.pipeline_mode<synchronous>, transform_indices = @transform_1, window_bounds = array<i64: 12, 128>}, {pipeline_mode = #tpu.pipeline_mode<synchronous>, transform_indices = @transform_2, window_bounds = array<i64: 1, 128>}, {pipeline_mode = #tpu.pipeline_mode<synchronous>, transform_indices = @transform_3, window_bounds = array<i64: 384, 128>}, {pipeline_mode = #tpu.pipeline_mode<synchronous>, transform_indices = @transform_4, window_bounds = array<i64: 1, 128>}, {pipeline_mode = #tpu.pipeline_mode<synchronous>, transform_indices = @transform_5, window_bounds = array<i64: 384, 128>}, {pipeline_mode = #tpu.pipeline_mode<synchronous>, transform_indices = @transform_6, window_bounds = array<i64: 1, 128>}, {transform_indices = @transform_7, window_bounds = array<i64: 4, 12, 128>}]} {
    %c0 = arith.constant 0 : index
    %c0_0 = arith.constant 0 : index
    %0 = vector.load %arg2[%c0, %c0_0] : memref<12x128xf32, #tpu.memory_space<vmem>>, vector<12x128xf32>
    %c0_1 = arith.constant 0 : index
    %c0_2 = arith.constant 0 : index
    %1 = vector.load %arg3[%c0_1, %c0_2] : memref<1x128xf32, #tpu.memory_space<vmem>>, vector<1x128xf32>
    %c0_3 = arith.constant 0 : index
    %c0_4 = arith.constant 0 : index
    %2 = vector.load %arg4[%c0_3, %c0_4] : memref<384x128xf32, #tpu.memory_space<vmem>>, vector<384x128xf32>
    %c0_5 = arith.constant 0 : index
    %c0_6 = arith.constant 0 : index
    %3 = vector.load %arg5[%c0_5, %c0_6] : memref<1x128xf32, #tpu.memory_space<vmem>>, vector<1x128xf32>
    %c0_7 = arith.constant 0 : index
    %c0_8 = arith.constant 0 : index
    %4 = vector.load %arg6[%c0_7, %c0_8] : memref<384x128xf32, #tpu.memory_space<vmem>>, vector<384x128xf32>
    %c0_9 = arith.constant 0 : index
    %c0_10 = arith.constant 0 : index
    %5 = vector.load %arg7[%c0_9, %c0_10] : memref<1x128xf32, #tpu.memory_space<vmem>>, vector<1x128xf32>
    %c0_11 = arith.constant 0 : index
    %c0_12 = arith.constant 0 : index
    %c0_13 = arith.constant 0 : index
    %c0_14 = arith.constant 0 : index
    %6 = vector.load %arg1[%c0_11, %c0_12, %c0_13, %c0_14] : memref<4x2x31x12xf32, #tpu.memory_space<vmem>>, vector<1x1x31x12xf32>
    %7 = vector.shape_cast %6 : vector<1x1x31x12xf32> to vector<31x12xf32>
    %cst = arith.constant dense<0.000000e+00> : vector<31x128xf32>
    %8 = tpu.matmul %7, %0, %cst {dimension_numbers = #tpu.dot_dimension_numbers<[1], [0], [0], [1], [0, 0, 1, 1], [], []>} : vector<31x12xf32>, vector<12x128xf32>, vector<31x128xf32> -> vector<31x128xf32>
    %9 = vector.broadcast %1 : vector<1x128xf32> to vector<31x128xf32>
    %10 = arith.addf %8, %9 : vector<31x128xf32>
    %c0_15 = arith.constant 0 : index
    %c1 = arith.constant 1 : index
    %c0_16 = arith.constant 0 : index
    %c0_17 = arith.constant 0 : index
    %11 = vector.load %arg1[%c0_15, %c1, %c0_16, %c0_17] : memref<4x2x31x12xf32, #tpu.memory_space<vmem>>, vector<1x1x31x12xf32>
    %12 = vector.shape_cast %11 : vector<1x1x31x12xf32> to vector<31x12xf32>
    %cst_18 = arith.constant dense<0.000000e+00> : vector<31x128xf32>
    %13 = tpu.matmul %12, %0, %cst_18 {dimension_numbers = #tpu.dot_dimension_numbers<[1], [0], [0], [1], [0, 0, 1, 1], [], []>} : vector<31x12xf32>, vector<12x128xf32>, vector<31x128xf32> -> vector<31x128xf32>
    %14 = vector.broadcast %1 : vector<1x128xf32> to vector<31x128xf32>
    %15 = arith.addf %13, %14 : vector<31x128xf32>
    %cst_19 = arith.constant 0.000000e+00 : f32
    %16 = vector.broadcast %cst_19 : f32 to vector<31x128xf32>
    %17 = arith.cmpf ogt, %10, %16 : vector<31x128xf32>
    %18 = math.exp %10 : vector<31x128xf32>
    %cst_20 = arith.constant 1.000000e+00 : f32
    %19 = vector.broadcast %cst_20 : f32 to vector<31x128xf32>
    %20 = arith.subf %18, %19 : vector<31x128xf32>
    %21 = arith.select %17, %10, %20 : vector<31x128xi1>, vector<31x128xf32>
    %cst_21 = arith.constant 0.000000e+00 : f32
    %22 = vector.broadcast %cst_21 : f32 to vector<31x128xf32>
    %23 = arith.cmpf ogt, %15, %22 : vector<31x128xf32>
    %24 = math.exp %15 : vector<31x128xf32>
    %cst_22 = arith.constant 1.000000e+00 : f32
    %25 = vector.broadcast %cst_22 : f32 to vector<31x128xf32>
    %26 = arith.subf %24, %25 : vector<31x128xf32>
    %27 = arith.select %23, %15, %26 : vector<31x128xi1>, vector<31x128xf32>
    %28 = arith.maximumf %21, %27 : vector<31x128xf32>
    %29 = vector.extract_strided_slice %28 {offsets = [0, 0], sizes = [29, 128], strides = [1, 1]} : vector<31x128xf32> to vector<29x128xf32>
    %30 = vector.extract_strided_slice %28 {offsets = [1, 0], sizes = [29, 128], strides = [1, 1]} : vector<31x128xf32> to vector<29x128xf32>
    %31 = vector.extract_strided_slice %28 {offsets = [2, 0], sizes = [29, 128], strides = [1, 1]} : vector<31x128xf32> to vector<29x128xf32>
    %32 = tpu.concatenate %29, %30, %31 in 1 : vector<29x128xf32>, vector<29x128xf32>, vector<29x128xf32> -> vector<29x384xf32>
    %cst_23 = arith.constant dense<0.000000e+00> : vector<29x128xf32>
    %33 = tpu.matmul %32, %2, %cst_23 {dimension_numbers = #tpu.dot_dimension_numbers<[1], [0], [0], [1], [0, 0, 1, 1], [], []>} : vector<29x384xf32>, vector<384x128xf32>, vector<29x128xf32> -> vector<29x128xf32>
    %34 = vector.broadcast %3 : vector<1x128xf32> to vector<29x128xf32>
    %35 = arith.addf %33, %34 : vector<29x128xf32>
    %cst_24 = arith.constant 0.000000e+00 : f32
    %36 = vector.broadcast %cst_24 : f32 to vector<29x128xf32>
    %37 = arith.cmpf ogt, %35, %36 : vector<29x128xf32>
    %38 = math.exp %35 : vector<29x128xf32>
    %cst_25 = arith.constant 1.000000e+00 : f32
    %39 = vector.broadcast %cst_25 : f32 to vector<29x128xf32>
    %40 = arith.subf %38, %39 : vector<29x128xf32>
    %41 = arith.select %37, %35, %40 : vector<29x128xi1>, vector<29x128xf32>
    %c0_26 = arith.constant 0 : index
    %c0_27 = arith.constant 0 : index
    %42 = vector.load %arg9[%c0_26, %c0_27] : memref<128x128xf32, #tpu.memory_space<vmem>>, vector<29x128xf32>
    tpu.vector_store %arg9[%c0_26, %c0_27], %41 {strides = array<i32>} : memref<128x128xf32, #tpu.memory_space<vmem>>, vector<29x128xf32>,
    %c0_28 = arith.constant 0 : index
    %c0_29 = arith.constant 0 : index
    %43 = tpu.strided_load %arg9[%c0_28, %c0_29] {strides = array<i32: 2, 1>} : memref<128x128xf32, #tpu.memory_space<vmem>>, vector<14x128xf32>
    %c1_30 = arith.constant 1 : index
    %c0_31 = arith.constant 0 : index
    %44 = tpu.strided_load %arg9[%c1_30, %c0_31] {strides = array<i32: 2, 1>} : memref<128x128xf32, #tpu.memory_space<vmem>>, vector<14x128xf32>
    %45 = arith.maximumf %43, %44 : vector<14x128xf32>
    %46 = vector.extract_strided_slice %45 {offsets = [0, 0], sizes = [12, 128], strides = [1, 1]} : vector<14x128xf32> to vector<12x128xf32>
    %47 = vector.extract_strided_slice %45 {offsets = [1, 0], sizes = [12, 128], strides = [1, 1]} : vector<14x128xf32> to vector<12x128xf32>
    %48 = vector.extract_strided_slice %45 {offsets = [2, 0], sizes = [12, 128], strides = [1, 1]} : vector<14x128xf32> to vector<12x128xf32>
    %49 = tpu.concatenate %46, %47, %48 in 1 : vector<12x128xf32>, vector<12x128xf32>, vector<12x128xf32> -> vector<12x384xf32>
    %cst_32 = arith.constant dense<0.000000e+00> : vector<12x128xf32>
    %50 = tpu.matmul %49, %4, %cst_32 {dimension_numbers = #tpu.dot_dimension_numbers<[1], [0], [0], [1], [0, 0, 1, 1], [], []>} : vector<12x384xf32>, vector<384x128xf32>, vector<12x128xf32> -> vector<12x128xf32>
    %51 = vector.broadcast %5 : vector<1x128xf32> to vector<12x128xf32>
    %52 = arith.addf %50, %51 : vector<12x128xf32>
    %cst_33 = arith.constant 0.000000e+00 : f32
    %53 = vector.broadcast %cst_33 : f32 to vector<12x128xf32>
    %54 = arith.cmpf ogt, %52, %53 : vector<12x128xf32>
    %55 = math.exp %52 : vector<12x128xf32>
    %cst_34 = arith.constant 1.000000e+00 : f32
    %56 = vector.broadcast %cst_34 : f32 to vector<12x128xf32>
    %57 = arith.subf %55, %56 : vector<12x128xf32>
    %58 = arith.select %54, %52, %57 : vector<12x128xi1>, vector<12x128xf32>
    %c0_35 = arith.constant 0 : index
    %c0_36 = arith.constant 0 : index
    %c0_37 = arith.constant 0 : index
    %59 = vector.load %arg8[%c0_35, %c0_36, %c0_37] : memref<4x12x128xf32, #tpu.memory_space<vmem>>, vector<1x12x128xf32>
    %60 = vector.shape_cast %59 : vector<1x12x128xf32> to vector<12x128xf32>
    %61 = vector.shape_cast %58 : vector<12x128xf32> to vector<1x12x128xf32>
    tpu.vector_store %arg8[%c0_35, %c0_36, %c0_37], %61 {strides = array<i32>} : memref<4x12x128xf32, #tpu.memory_space<vmem>>, vector<1x12x128xf32>,
    %c1_38 = arith.constant 1 : index
    %c0_39 = arith.constant 0 : index
    %c0_40 = arith.constant 0 : index
    %c0_41 = arith.constant 0 : index
    %62 = vector.load %arg1[%c1_38, %c0_39, %c0_40, %c0_41] : memref<4x2x31x12xf32, #tpu.memory_space<vmem>>, vector<1x1x31x12xf32>
    %63 = vector.shape_cast %62 : vector<1x1x31x12xf32> to vector<31x12xf32>
    %cst_42 = arith.constant dense<0.000000e+00> : vector<31x128xf32>
    %64 = tpu.matmul %63, %0, %cst_42 {dimension_numbers = #tpu.dot_dimension_numbers<[1], [0], [0], [1], [0, 0, 1, 1], [], []>} : vector<31x12xf32>, vector<12x128xf32>, vector<31x128xf32> -> vector<31x128xf32>
    %65 = vector.broadcast %1 : vector<1x128xf32> to vector<31x128xf32>
    %66 = arith.addf %64, %65 : vector<31x128xf32>
    %c1_43 = arith.constant 1 : index
    %c1_44 = arith.constant 1 : index
    %c0_45 = arith.constant 0 : index
    %c0_46 = arith.constant 0 : index
    %67 = vector.load %arg1[%c1_43, %c1_44, %c0_45, %c0_46] : memref<4x2x31x12xf32, #tpu.memory_space<vmem>>, vector<1x1x31x12xf32>
    %68 = vector.shape_cast %67 : vector<1x1x31x12xf32> to vector<31x12xf32>
    %cst_47 = arith.constant dense<0.000000e+00> : vector<31x128xf32>
    %69 = tpu.matmul %68, %0, %cst_47 {dimension_numbers = #tpu.dot_dimension_numbers<[1], [0], [0], [1], [0, 0, 1, 1], [], []>} : vector<31x12xf32>, vector<12x128xf32>, vector<31x128xf32> -> vector<31x128xf32>
    %70 = vector.broadcast %1 : vector<1x128xf32> to vector<31x128xf32>
    %71 = arith.addf %69, %70 : vector<31x128xf32>
    %cst_48 = arith.constant 0.000000e+00 : f32
    %72 = vector.broadcast %cst_48 : f32 to vector<31x128xf32>
    %73 = arith.cmpf ogt, %66, %72 : vector<31x128xf32>
    %74 = math.exp %66 : vector<31x128xf32>
    %cst_49 = arith.constant 1.000000e+00 : f32
    %75 = vector.broadcast %cst_49 : f32 to vector<31x128xf32>
    %76 = arith.subf %74, %75 : vector<31x128xf32>
    %77 = arith.select %73, %66, %76 : vector<31x128xi1>, vector<31x128xf32>
    %cst_50 = arith.constant 0.000000e+00 : f32
    %78 = vector.broadcast %cst_50 : f32 to vector<31x128xf32>
    %79 = arith.cmpf ogt, %71, %78 : vector<31x128xf32>
    %80 = math.exp %71 : vector<31x128xf32>
    %cst_51 = arith.constant 1.000000e+00 : f32
    %81 = vector.broadcast %cst_51 : f32 to vector<31x128xf32>
    %82 = arith.subf %80, %81 : vector<31x128xf32>
    %83 = arith.select %79, %71, %82 : vector<31x128xi1>, vector<31x128xf32>
    %84 = arith.maximumf %77, %83 : vector<31x128xf32>
    %85 = vector.extract_strided_slice %84 {offsets = [0, 0], sizes = [29, 128], strides = [1, 1]} : vector<31x128xf32> to vector<29x128xf32>
    %86 = vector.extract_strided_slice %84 {offsets = [1, 0], sizes = [29, 128], strides = [1, 1]} : vector<31x128xf32> to vector<29x128xf32>
    %87 = vector.extract_strided_slice %84 {offsets = [2, 0], sizes = [29, 128], strides = [1, 1]} : vector<31x128xf32> to vector<29x128xf32>
    %88 = tpu.concatenate %85, %86, %87 in 1 : vector<29x128xf32>, vector<29x128xf32>, vector<29x128xf32> -> vector<29x384xf32>
    %cst_52 = arith.constant dense<0.000000e+00> : vector<29x128xf32>
    %89 = tpu.matmul %88, %2, %cst_52 {dimension_numbers = #tpu.dot_dimension_numbers<[1], [0], [0], [1], [0, 0, 1, 1], [], []>} : vector<29x384xf32>, vector<384x128xf32>, vector<29x128xf32> -> vector<29x128xf32>
    %90 = vector.broadcast %3 : vector<1x128xf32> to vector<29x128xf32>
    %91 = arith.addf %89, %90 : vector<29x128xf32>
    %cst_53 = arith.constant 0.000000e+00 : f32
    %92 = vector.broadcast %cst_53 : f32 to vector<29x128xf32>
    %93 = arith.cmpf ogt, %91, %92 : vector<29x128xf32>
    %94 = math.exp %91 : vector<29x128xf32>
    %cst_54 = arith.constant 1.000000e+00 : f32
    %95 = vector.broadcast %cst_54 : f32 to vector<29x128xf32>
    %96 = arith.subf %94, %95 : vector<29x128xf32>
    %97 = arith.select %93, %91, %96 : vector<29x128xi1>, vector<29x128xf32>
    %c32 = arith.constant 32 : index
    %c0_55 = arith.constant 0 : index
    %98 = vector.load %arg9[%c32, %c0_55] : memref<128x128xf32, #tpu.memory_space<vmem>>, vector<29x128xf32>
    tpu.vector_store %arg9[%c32, %c0_55], %97 {strides = array<i32>} : memref<128x128xf32, #tpu.memory_space<vmem>>, vector<29x128xf32>,
    %c32_56 = arith.constant 32 : index
    %c0_57 = arith.constant 0 : index
    %99 = tpu.strided_load %arg9[%c32_56, %c0_57] {strides = array<i32: 2, 1>} : memref<128x128xf32, #tpu.memory_space<vmem>>, vector<14x128xf32>
    %c33 = arith.constant 33 : index
    %c0_58 = arith.constant 0 : index
    %100 = tpu.strided_load %arg9[%c33, %c0_58] {strides = array<i32: 2, 1>} : memref<128x128xf32, #tpu.memory_space<vmem>>, vector<14x128xf32>
    %101 = arith.maximumf %99, %100 : vector<14x128xf32>
    %102 = vector.extract_strided_slice %101 {offsets = [0, 0], sizes = [12, 128], strides = [1, 1]} : vector<14x128xf32> to vector<12x128xf32>
    %103 = vector.extract_strided_slice %101 {offsets = [1, 0], sizes = [12, 128], strides = [1, 1]} : vector<14x128xf32> to vector<12x128xf32>
    %104 = vector.extract_strided_slice %101 {offsets = [2, 0], sizes = [12, 128], strides = [1, 1]} : vector<14x128xf32> to vector<12x128xf32>
    %105 = tpu.concatenate %102, %103, %104 in 1 : vector<12x128xf32>, vector<12x128xf32>, vector<12x128xf32> -> vector<12x384xf32>
    %cst_59 = arith.constant dense<0.000000e+00> : vector<12x128xf32>
    %106 = tpu.matmul %105, %4, %cst_59 {dimension_numbers = #tpu.dot_dimension_numbers<[1], [0], [0], [1], [0, 0, 1, 1], [], []>} : vector<12x384xf32>, vector<384x128xf32>, vector<12x128xf32> -> vector<12x128xf32>
    %107 = vector.broadcast %5 : vector<1x128xf32> to vector<12x128xf32>
    %108 = arith.addf %106, %107 : vector<12x128xf32>
    %cst_60 = arith.constant 0.000000e+00 : f32
    %109 = vector.broadcast %cst_60 : f32 to vector<12x128xf32>
    %110 = arith.cmpf ogt, %108, %109 : vector<12x128xf32>
    %111 = math.exp %108 : vector<12x128xf32>
    %cst_61 = arith.constant 1.000000e+00 : f32
    %112 = vector.broadcast %cst_61 : f32 to vector<12x128xf32>
    %113 = arith.subf %111, %112 : vector<12x128xf32>
    %114 = arith.select %110, %108, %113 : vector<12x128xi1>, vector<12x128xf32>
    %c1_62 = arith.constant 1 : index
    %c0_63 = arith.constant 0 : index
    %c0_64 = arith.constant 0 : index
    %115 = vector.load %arg8[%c1_62, %c0_63, %c0_64] : memref<4x12x128xf32, #tpu.memory_space<vmem>>, vector<1x12x128xf32>
    %116 = vector.shape_cast %115 : vector<1x12x128xf32> to vector<12x128xf32>
    %117 = vector.shape_cast %114 : vector<12x128xf32> to vector<1x12x128xf32>
    tpu.vector_store %arg8[%c1_62, %c0_63, %c0_64], %117 {strides = array<i32>} : memref<4x12x128xf32, #tpu.memory_space<vmem>>, vector<1x12x128xf32>,
    %c2 = arith.constant 2 : index
    %c0_65 = arith.constant 0 : index
    %c0_66 = arith.constant 0 : index
    %c0_67 = arith.constant 0 : index
    %118 = vector.load %arg1[%c2, %c0_65, %c0_66, %c0_67] : memref<4x2x31x12xf32, #tpu.memory_space<vmem>>, vector<1x1x31x12xf32>
    %119 = vector.shape_cast %118 : vector<1x1x31x12xf32> to vector<31x12xf32>
    %cst_68 = arith.constant dense<0.000000e+00> : vector<31x128xf32>
    %120 = tpu.matmul %119, %0, %cst_68 {dimension_numbers = #tpu.dot_dimension_numbers<[1], [0], [0], [1], [0, 0, 1, 1], [], []>} : vector<31x12xf32>, vector<12x128xf32>, vector<31x128xf32> -> vector<31x128xf32>
    %121 = vector.broadcast %1 : vector<1x128xf32> to vector<31x128xf32>
    %122 = arith.addf %120, %121 : vector<31x128xf32>
    %c2_69 = arith.constant 2 : index
    %c1_70 = arith.constant 1 : index
    %c0_71 = arith.constant 0 : index
    %c0_72 = arith.constant 0 : index
    %123 = vector.load %arg1[%c2_69, %c1_70, %c0_71, %c0_72] : memref<4x2x31x12xf32, #tpu.memory_space<vmem>>, vector<1x1x31x12xf32>
    %124 = vector.shape_cast %123 : vector<1x1x31x12xf32> to vector<31x12xf32>
    %cst_73 = arith.constant dense<0.000000e+00> : vector<31x128xf32>
    %125 = tpu.matmul %124, %0, %cst_73 {dimension_numbers = #tpu.dot_dimension_numbers<[1], [0], [0], [1], [0, 0, 1, 1], [], []>} : vector<31x12xf32>, vector<12x128xf32>, vector<31x128xf32> -> vector<31x128xf32>
    %126 = vector.broadcast %1 : vector<1x128xf32> to vector<31x128xf32>
    %127 = arith.addf %125, %126 : vector<31x128xf32>
    %cst_74 = arith.constant 0.000000e+00 : f32
    %128 = vector.broadcast %cst_74 : f32 to vector<31x128xf32>
    %129 = arith.cmpf ogt, %122, %128 : vector<31x128xf32>
    %130 = math.exp %122 : vector<31x128xf32>
    %cst_75 = arith.constant 1.000000e+00 : f32
    %131 = vector.broadcast %cst_75 : f32 to vector<31x128xf32>
    %132 = arith.subf %130, %131 : vector<31x128xf32>
    %133 = arith.select %129, %122, %132 : vector<31x128xi1>, vector<31x128xf32>
    %cst_76 = arith.constant 0.000000e+00 : f32
    %134 = vector.broadcast %cst_76 : f32 to vector<31x128xf32>
    %135 = arith.cmpf ogt, %127, %134 : vector<31x128xf32>
    %136 = math.exp %127 : vector<31x128xf32>
    %cst_77 = arith.constant 1.000000e+00 : f32
    %137 = vector.broadcast %cst_77 : f32 to vector<31x128xf32>
    %138 = arith.subf %136, %137 : vector<31x128xf32>
    %139 = arith.select %135, %127, %138 : vector<31x128xi1>, vector<31x128xf32>
    %140 = arith.maximumf %133, %139 : vector<31x128xf32>
    %141 = vector.extract_strided_slice %140 {offsets = [0, 0], sizes = [29, 128], strides = [1, 1]} : vector<31x128xf32> to vector<29x128xf32>
    %142 = vector.extract_strided_slice %140 {offsets = [1, 0], sizes = [29, 128], strides = [1, 1]} : vector<31x128xf32> to vector<29x128xf32>
    %143 = vector.extract_strided_slice %140 {offsets = [2, 0], sizes = [29, 128], strides = [1, 1]} : vector<31x128xf32> to vector<29x128xf32>
    %144 = tpu.concatenate %141, %142, %143 in 1 : vector<29x128xf32>, vector<29x128xf32>, vector<29x128xf32> -> vector<29x384xf32>
    %cst_78 = arith.constant dense<0.000000e+00> : vector<29x128xf32>
    %145 = tpu.matmul %144, %2, %cst_78 {dimension_numbers = #tpu.dot_dimension_numbers<[1], [0], [0], [1], [0, 0, 1, 1], [], []>} : vector<29x384xf32>, vector<384x128xf32>, vector<29x128xf32> -> vector<29x128xf32>
    %146 = vector.broadcast %3 : vector<1x128xf32> to vector<29x128xf32>
    %147 = arith.addf %145, %146 : vector<29x128xf32>
    %cst_79 = arith.constant 0.000000e+00 : f32
    %148 = vector.broadcast %cst_79 : f32 to vector<29x128xf32>
    %149 = arith.cmpf ogt, %147, %148 : vector<29x128xf32>
    %150 = math.exp %147 : vector<29x128xf32>
    %cst_80 = arith.constant 1.000000e+00 : f32
    %151 = vector.broadcast %cst_80 : f32 to vector<29x128xf32>
    %152 = arith.subf %150, %151 : vector<29x128xf32>
    %153 = arith.select %149, %147, %152 : vector<29x128xi1>, vector<29x128xf32>
    %c64 = arith.constant 64 : index
    %c0_81 = arith.constant 0 : index
    %154 = vector.load %arg9[%c64, %c0_81] : memref<128x128xf32, #tpu.memory_space<vmem>>, vector<29x128xf32>
    tpu.vector_store %arg9[%c64, %c0_81], %153 {strides = array<i32>} : memref<128x128xf32, #tpu.memory_space<vmem>>, vector<29x128xf32>,
    %c64_82 = arith.constant 64 : index
    %c0_83 = arith.constant 0 : index
    %155 = tpu.strided_load %arg9[%c64_82, %c0_83] {strides = array<i32: 2, 1>} : memref<128x128xf32, #tpu.memory_space<vmem>>, vector<14x128xf32>
    %c65 = arith.constant 65 : index
    %c0_84 = arith.constant 0 : index
    %156 = tpu.strided_load %arg9[%c65, %c0_84] {strides = array<i32: 2, 1>} : memref<128x128xf32, #tpu.memory_space<vmem>>, vector<14x128xf32>
    %157 = arith.maximumf %155, %156 : vector<14x128xf32>
    %158 = vector.extract_strided_slice %157 {offsets = [0, 0], sizes = [12, 128], strides = [1, 1]} : vector<14x128xf32> to vector<12x128xf32>
    %159 = vector.extract_strided_slice %157 {offsets = [1, 0], sizes = [12, 128], strides = [1, 1]} : vector<14x128xf32> to vector<12x128xf32>
    %160 = vector.extract_strided_slice %157 {offsets = [2, 0], sizes = [12, 128], strides = [1, 1]} : vector<14x128xf32> to vector<12x128xf32>
    %161 = tpu.concatenate %158, %159, %160 in 1 : vector<12x128xf32>, vector<12x128xf32>, vector<12x128xf32> -> vector<12x384xf32>
    %cst_85 = arith.constant dense<0.000000e+00> : vector<12x128xf32>
    %162 = tpu.matmul %161, %4, %cst_85 {dimension_numbers = #tpu.dot_dimension_numbers<[1], [0], [0], [1], [0, 0, 1, 1], [], []>} : vector<12x384xf32>, vector<384x128xf32>, vector<12x128xf32> -> vector<12x128xf32>
    %163 = vector.broadcast %5 : vector<1x128xf32> to vector<12x128xf32>
    %164 = arith.addf %162, %163 : vector<12x128xf32>
    %cst_86 = arith.constant 0.000000e+00 : f32
    %165 = vector.broadcast %cst_86 : f32 to vector<12x128xf32>
    %166 = arith.cmpf ogt, %164, %165 : vector<12x128xf32>
    %167 = math.exp %164 : vector<12x128xf32>
    %cst_87 = arith.constant 1.000000e+00 : f32
    %168 = vector.broadcast %cst_87 : f32 to vector<12x128xf32>
    %169 = arith.subf %167, %168 : vector<12x128xf32>
    %170 = arith.select %166, %164, %169 : vector<12x128xi1>, vector<12x128xf32>
    %c2_88 = arith.constant 2 : index
    %c0_89 = arith.constant 0 : index
    %c0_90 = arith.constant 0 : index
    %171 = vector.load %arg8[%c2_88, %c0_89, %c0_90] : memref<4x12x128xf32, #tpu.memory_space<vmem>>, vector<1x12x128xf32>
    %172 = vector.shape_cast %171 : vector<1x12x128xf32> to vector<12x128xf32>
    %173 = vector.shape_cast %170 : vector<12x128xf32> to vector<1x12x128xf32>
    tpu.vector_store %arg8[%c2_88, %c0_89, %c0_90], %173 {strides = array<i32>} : memref<4x12x128xf32, #tpu.memory_space<vmem>>, vector<1x12x128xf32>,
    %c3 = arith.constant 3 : index
    %c0_91 = arith.constant 0 : index
    %c0_92 = arith.constant 0 : index
    %c0_93 = arith.constant 0 : index
    %174 = vector.load %arg1[%c3, %c0_91, %c0_92, %c0_93] : memref<4x2x31x12xf32, #tpu.memory_space<vmem>>, vector<1x1x31x12xf32>
    %175 = vector.shape_cast %174 : vector<1x1x31x12xf32> to vector<31x12xf32>
    %cst_94 = arith.constant dense<0.000000e+00> : vector<31x128xf32>
    %176 = tpu.matmul %175, %0, %cst_94 {dimension_numbers = #tpu.dot_dimension_numbers<[1], [0], [0], [1], [0, 0, 1, 1], [], []>} : vector<31x12xf32>, vector<12x128xf32>, vector<31x128xf32> -> vector<31x128xf32>
    %177 = vector.broadcast %1 : vector<1x128xf32> to vector<31x128xf32>
    %178 = arith.addf %176, %177 : vector<31x128xf32>
    %c3_95 = arith.constant 3 : index
    %c1_96 = arith.constant 1 : index
    %c0_97 = arith.constant 0 : index
    %c0_98 = arith.constant 0 : index
    %179 = vector.load %arg1[%c3_95, %c1_96, %c0_97, %c0_98] : memref<4x2x31x12xf32, #tpu.memory_space<vmem>>, vector<1x1x31x12xf32>
    %180 = vector.shape_cast %179 : vector<1x1x31x12xf32> to vector<31x12xf32>
    %cst_99 = arith.constant dense<0.000000e+00> : vector<31x128xf32>
    %181 = tpu.matmul %180, %0, %cst_99 {dimension_numbers = #tpu.dot_dimension_numbers<[1], [0], [0], [1], [0, 0, 1, 1], [], []>} : vector<31x12xf32>, vector<12x128xf32>, vector<31x128xf32> -> vector<31x128xf32>
    %182 = vector.broadcast %1 : vector<1x128xf32> to vector<31x128xf32>
    %183 = arith.addf %181, %182 : vector<31x128xf32>
    %cst_100 = arith.constant 0.000000e+00 : f32
    %184 = vector.broadcast %cst_100 : f32 to vector<31x128xf32>
    %185 = arith.cmpf ogt, %178, %184 : vector<31x128xf32>
    %186 = math.exp %178 : vector<31x128xf32>
    %cst_101 = arith.constant 1.000000e+00 : f32
    %187 = vector.broadcast %cst_101 : f32 to vector<31x128xf32>
    %188 = arith.subf %186, %187 : vector<31x128xf32>
    %189 = arith.select %185, %178, %188 : vector<31x128xi1>, vector<31x128xf32>
    %cst_102 = arith.constant 0.000000e+00 : f32
    %190 = vector.broadcast %cst_102 : f32 to vector<31x128xf32>
    %191 = arith.cmpf ogt, %183, %190 : vector<31x128xf32>
    %192 = math.exp %183 : vector<31x128xf32>
    %cst_103 = arith.constant 1.000000e+00 : f32
    %193 = vector.broadcast %cst_103 : f32 to vector<31x128xf32>
    %194 = arith.subf %192, %193 : vector<31x128xf32>
    %195 = arith.select %191, %183, %194 : vector<31x128xi1>, vector<31x128xf32>
    %196 = arith.maximumf %189, %195 : vector<31x128xf32>
    %197 = vector.extract_strided_slice %196 {offsets = [0, 0], sizes = [29, 128], strides = [1, 1]} : vector<31x128xf32> to vector<29x128xf32>
    %198 = vector.extract_strided_slice %196 {offsets = [1, 0], sizes = [29, 128], strides = [1, 1]} : vector<31x128xf32> to vector<29x128xf32>
    %199 = vector.extract_strided_slice %196 {offsets = [2, 0], sizes = [29, 128], strides = [1, 1]} : vector<31x128xf32> to vector<29x128xf32>
    %200 = tpu.concatenate %197, %198, %199 in 1 : vector<29x128xf32>, vector<29x128xf32>, vector<29x128xf32> -> vector<29x384xf32>
    %cst_104 = arith.constant dense<0.000000e+00> : vector<29x128xf32>
    %201 = tpu.matmul %200, %2, %cst_104 {dimension_numbers = #tpu.dot_dimension_numbers<[1], [0], [0], [1], [0, 0, 1, 1], [], []>} : vector<29x384xf32>, vector<384x128xf32>, vector<29x128xf32> -> vector<29x128xf32>
    %202 = vector.broadcast %3 : vector<1x128xf32> to vector<29x128xf32>
    %203 = arith.addf %201, %202 : vector<29x128xf32>
    %cst_105 = arith.constant 0.000000e+00 : f32
    %204 = vector.broadcast %cst_105 : f32 to vector<29x128xf32>
    %205 = arith.cmpf ogt, %203, %204 : vector<29x128xf32>
    %206 = math.exp %203 : vector<29x128xf32>
    %cst_106 = arith.constant 1.000000e+00 : f32
    %207 = vector.broadcast %cst_106 : f32 to vector<29x128xf32>
    %208 = arith.subf %206, %207 : vector<29x128xf32>
    %209 = arith.select %205, %203, %208 : vector<29x128xi1>, vector<29x128xf32>
    %c96 = arith.constant 96 : index
    %c0_107 = arith.constant 0 : index
    %210 = vector.load %arg9[%c96, %c0_107] : memref<128x128xf32, #tpu.memory_space<vmem>>, vector<29x128xf32>
    tpu.vector_store %arg9[%c96, %c0_107], %209 {strides = array<i32>} : memref<128x128xf32, #tpu.memory_space<vmem>>, vector<29x128xf32>,
    %c96_108 = arith.constant 96 : index
    %c0_109 = arith.constant 0 : index
    %211 = tpu.strided_load %arg9[%c96_108, %c0_109] {strides = array<i32: 2, 1>} : memref<128x128xf32, #tpu.memory_space<vmem>>, vector<14x128xf32>
    %c97 = arith.constant 97 : index
    %c0_110 = arith.constant 0 : index
    %212 = tpu.strided_load %arg9[%c97, %c0_110] {strides = array<i32: 2, 1>} : memref<128x128xf32, #tpu.memory_space<vmem>>, vector<14x128xf32>
    %213 = arith.maximumf %211, %212 : vector<14x128xf32>
    %214 = vector.extract_strided_slice %213 {offsets = [0, 0], sizes = [12, 128], strides = [1, 1]} : vector<14x128xf32> to vector<12x128xf32>
    %215 = vector.extract_strided_slice %213 {offsets = [1, 0], sizes = [12, 128], strides = [1, 1]} : vector<14x128xf32> to vector<12x128xf32>
    %216 = vector.extract_strided_slice %213 {offsets = [2, 0], sizes = [12, 128], strides = [1, 1]} : vector<14x128xf32> to vector<12x128xf32>
    %217 = tpu.concatenate %214, %215, %216 in 1 : vector<12x128xf32>, vector<12x128xf32>, vector<12x128xf32> -> vector<12x384xf32>
    %cst_111 = arith.constant dense<0.000000e+00> : vector<12x128xf32>
    %218 = tpu.matmul %217, %4, %cst_111 {dimension_numbers = #tpu.dot_dimension_numbers<[1], [0], [0], [1], [0, 0, 1, 1], [], []>} : vector<12x384xf32>, vector<384x128xf32>, vector<12x128xf32> -> vector<12x128xf32>
    %219 = vector.broadcast %5 : vector<1x128xf32> to vector<12x128xf32>
    %220 = arith.addf %218, %219 : vector<12x128xf32>
    %cst_112 = arith.constant 0.000000e+00 : f32
    %221 = vector.broadcast %cst_112 : f32 to vector<12x128xf32>
    %222 = arith.cmpf ogt, %220, %221 : vector<12x128xf32>
    %223 = math.exp %220 : vector<12x128xf32>
    %cst_113 = arith.constant 1.000000e+00 : f32
    %224 = vector.broadcast %cst_113 : f32 to vector<12x128xf32>
    %225 = arith.subf %223, %224 : vector<12x128xf32>
    %226 = arith.select %222, %220, %225 : vector<12x128xi1>, vector<12x128xf32>
    %c3_114 = arith.constant 3 : index
    %c0_115 = arith.constant 0 : index
    %c0_116 = arith.constant 0 : index
    %227 = vector.load %arg8[%c3_114, %c0_115, %c0_116] : memref<4x12x128xf32, #tpu.memory_space<vmem>>, vector<1x12x128xf32>
    %228 = vector.shape_cast %227 : vector<1x12x128xf32> to vector<12x128xf32>
    %229 = vector.shape_cast %226 : vector<12x128xf32> to vector<1x12x128xf32>
    tpu.vector_store %arg8[%c3_114, %c0_115, %c0_116], %229 {strides = array<i32>} : memref<4x12x128xf32, #tpu.memory_space<vmem>>, vector<1x12x128xf32>,
    return
  }
  func.func @transform_0(%arg0: i32) -> (i32, i32, i32, i32) {
    %c0_i32 = arith.constant 0 : i32
    %c0_i32_0 = arith.constant 0 : i32
    %c0_i32_1 = arith.constant 0 : i32
    %c0_i32_2 = arith.constant 0 : i32
    return %arg0, %c0_i32, %c0_i32_0, %c0_i32_1 : i32, i32, i32, i32
  }
  func.func @transform_1(%arg0: i32) -> (i32, i32) {
    %c0_i32 = arith.constant 0 : i32
    %c0_i32_0 = arith.constant 0 : i32
    %c0_i32_1 = arith.constant 0 : i32
    return %c0_i32, %c0_i32_0 : i32, i32
  }
  func.func @transform_2(%arg0: i32) -> (i32, i32) {
    %c0_i32 = arith.constant 0 : i32
    %c0_i32_0 = arith.constant 0 : i32
    %c0_i32_1 = arith.constant 0 : i32
    return %c0_i32, %c0_i32_0 : i32, i32
  }
  func.func @transform_3(%arg0: i32) -> (i32, i32) {
    %c0_i32 = arith.constant 0 : i32
    %c0_i32_0 = arith.constant 0 : i32
    %c0_i32_1 = arith.constant 0 : i32
    return %c0_i32, %c0_i32_0 : i32, i32
  }
  func.func @transform_4(%arg0: i32) -> (i32, i32) {
    %c0_i32 = arith.constant 0 : i32
    %c0_i32_0 = arith.constant 0 : i32
    %c0_i32_1 = arith.constant 0 : i32
    return %c0_i32, %c0_i32_0 : i32, i32
  }
  func.func @transform_5(%arg0: i32) -> (i32, i32) {
    %c0_i32 = arith.constant 0 : i32
    %c0_i32_0 = arith.constant 0 : i32
    %c0_i32_1 = arith.constant 0 : i32
    return %c0_i32, %c0_i32_0 : i32, i32
  }
  func.func @transform_6(%arg0: i32) -> (i32, i32) {
    %c0_i32 = arith.constant 0 : i32
    %c0_i32_0 = arith.constant 0 : i32
    %c0_i32_1 = arith.constant 0 : i32
    return %c0_i32, %c0_i32_0 : i32, i32
  }
  func.func @transform_7(%arg0: i32) -> (i32, i32, i32) {
    %c0_i32 = arith.constant 0 : i32
    %c0_i32_0 = arith.constant 0 : i32
    %c0_i32_1 = arith.constant 0 : i32
    return %arg0, %c0_i32, %c0_i32_0 : i32, i32, i32
  }
}

</mosaic_0001>

<llo_original>
// kernel: tile.19
$region0: #{tile.19}
  %s0 = inlined_call_operand.vmem [shape: f32[4,32], index: 0, kind: input, shape index: {}]
  %s1 = inlined_call_operand.vmem [shape: f32[1,128], index: 1, kind: output, shape index: {}]
  $region1: #{tile.19} parent=0
    #allocation0 [shape = 'u8[4096]{0}', space=vmem, size = 0x1000, scoped, tag = 'scoped mem for output reshape']
    #allocation1 [shape = 'u8[4096]{0}', space=vmem, size = 0x1000, scoped, tag = 'scoped mem for input reshape']
    %s3 = sshllo.u32 0, 4
    %v4 = vld [vmem:[%s0] sm:%s3]
    %5 = vst [vmem:[#allocation1] sm:%s3] %v4
    %v6 = vld [vmem:[#allocation1] sm:$0x1]
    %vm7 = vcmask 261120
    %8 = vst.msk [vmem:[#allocation0] sm:$0x1] %vm7, %v6
    %s9 = scalar_lea.vmem [#allocation1], 3
    %v10 = vld [vmem:[%s9] sm:$0x1]
    %11 = vrot.lane.b32.xlu0 %v10, 96
    %v12 = vpop.permute.xlu0 %11
    %vm13 = vcmask 1048320
    %14 = vst.msk [vmem:[#allocation0] sm:$0x1] %vm13, %v12
    %s15 = scalar_lea.vmem [#allocation1], 2
    %v16 = vld [vmem:[%s15] sm:$0x1]
    %17 = vrot.lane.b32.xlu0 %v16, 64
    %v18 = vpop.permute.xlu0 %17
    %vm19 = vcmask 785920
    %20 = vst.msk [vmem:[#allocation0] sm:$0x1] %vm19, %v18
    %s21 = scalar_lea.vmem [#allocation1], 1
    %v22 = vld [vmem:[%s21] sm:$0x1]
    %23 = vrot.lane.b32.xlu0 %v22, 32
    %v24 = vpop.permute.xlu0 %23
    %vm25 = vcmask 523520
    %26 = vst.msk [vmem:[#allocation0] sm:$0x1] %vm25, %v24
    %s28 = sshllo.u32 0, 1
    %v30 = vld [vmem:[#allocation0] sm:%s28]
    %s31 = sshllo.u32 0, 1
    %32 = vst [vmem:[%s1] sm:%s31] %v30

// kernel: encode_pallas.1
$region0: #{encode_pallas.1}
  #allocation0 [shape = 'u32[]', space=smem, size = 0x4, offset = 0x4, fixed_abs, tag = 'smem constant byte address 0x4 - core index']
  #allocation1 [shape = 'u32[144,128]{1,0:T(1,128)}', space=vmem, size = 0x12000, scoped, tag = 'internal scratch']
  #allocation2 [shape = 'f32[128,128]{1,0:T(8,128)}', space=vmem, size = 0x10000, scoped, tag = 'scratch operand']
  %s0 = inlined_call_operand.vmem [shape: f32[8,2,31,12], index: 0, kind: input, shape index: {}]
  %s1 = inlined_call_operand.vmem [shape: f32[12,128], index: 1, kind: input, shape index: {}]
  %s2 = inlined_call_operand.vmem [shape: f32[1,128], index: 2, kind: input, shape index: {}]
  %s3 = inlined_call_operand.vmem [shape: f32[384,128], index: 3, kind: input, shape index: {}]
  %s4 = inlined_call_operand.vmem [shape: f32[1,128], index: 4, kind: input, shape index: {}]
  %s5 = inlined_call_operand.vmem [shape: f32[384,128], index: 5, kind: input, shape index: {}]
  %s6 = inlined_call_operand.vmem [shape: f32[1,128], index: 6, kind: input, shape index: {}]
  %s7 = inlined_call_operand.vmem [shape: f32[8,12,128], index: 7, kind: output, shape index: {}]
  %s8 = sld [smem:[#allocation0]]
  $region61: #{encode_pallas.1} parent=0
    _
  %s10 = ssub.s32 1, %s8
  %s11 = scalar_select 0, %s10, %s8
  loop: start=0, step=1, limit=4
  $region2: #{encode_pallas.1} parent=0 // loop_pre_header
    _
  $region3: #{encode_pallas.1} parent=0 // loop_header
    %s13 = sphi 0, %s17
    %p14 = scmp.ge.s32.totalorder %s13, 4
    %s23 = sphi 0, %s25
    %s26 = sphi 0, %s23
    %s27 = sphi 0, %s26
    %s43 = sphi 0, %s27
    %s47 = sphi 0, %s47
    %s49 = sphi 0, %s47
    %s50 = sphi 0, %s49
    %s64 = sphi 0, %s50
    %s68 = sphi 0, %s68
    %s70 = sphi 0, %s68
    %s71 = sphi 0, %s70
    %s85 = sphi 0, %s71
    %s89 = sphi 0, %s89
    %s91 = sphi 0, %s89
    %s92 = sphi 0, %s91
    %s106 = sphi 0, %s92
    %s110 = sphi 0, %s110
    %s112 = sphi 0, %s110
    %s113 = sphi 0, %s112
    %s127 = sphi 0, %s113
    %s131 = sphi 0, %s131
    %s133 = sphi 0, %s131
    %s134 = sphi 0, %s133
    %s148 = sphi 0, %s134
    %s152 = sphi 0, %s152
    %s154 = sphi 0, %s152
    %s155 = sphi 0, %s154
    %s169 = sphi 0, %s155
    %s175 = sphi 0, %s177
    %s178 = sphi 0, %s175
    %s179 = sphi 0, %s178
    %s195 = sphi 0, %s179
  $region4: #{encode_pallas.1} parent=0 // loop_header_branch
    %16 = sbr.rel (%p14) target = $region8
  $region5: #{encode_pallas.1} parent=0 // loop_body
    %s18 = ssub.s32 %s13, 1
    %s19 = ssub.s32 %s13, 2
    %s20 = sadd.s32 %s13, 1
    %s21 = ssub.s32 %s13, %s20
    %p22 = scmp.eq.s32.totalorder %s21, 0
    %s24 = sadd.s32 %s23, 1
    %s25 = scalar_select %p22, %s23, %s24
    %p28 = pneg %p22
    %p29 = scmp.eq.s32.totalorder %s13, 1
    %p30 = por %p28, %p29
    %p31 = scmp.ne.s32.totalorder %s23, %s26
    %p32 = scmp.eq.s32.totalorder %s13, 0
    %p33 = por %p31, %p32
    %p34 = scmp.ne.s32.totalorder %s23, %s26
    %p35 = scmp.eq.s32.totalorder %s18, 1
    %p36 = por %p34, %p35
    %p37 = scmp.ne.s32.totalorder %s26, %s27
    %p38 = scmp.eq.s32.totalorder %s18, 0
    %p39 = por %p37, %p38
    %p40 = scmp.ne.s32.totalorder %s26, %s27
    %p41 = scmp.eq.s32.totalorder %s19, 1
    %p42 = por %p40, %p41
    %p44 = scmp.ne.s32.totalorder %s27, %s43
    %p45 = scmp.eq.s32.totalorder %s19, 0
    %p46 = por %p44, %p45
    %s48 = sadd.s32 %s47, 1
    %p51 = scmp.eq.s32.totalorder %s13, 1
    %p52 = scmp.ne.s32.totalorder %s47, %s49
    %p53 = scmp.eq.s32.totalorder %s13, 0
    %p54 = por %p52, %p53
    %p55 = scmp.ne.s32.totalorder %s47, %s49
    %p56 = scmp.eq.s32.totalorder %s18, 1
    %p57 = por %p55, %p56
    %p58 = scmp.ne.s32.totalorder %s49, %s50
    %p59 = scmp.eq.s32.totalorder %s18, 0
    %p60 = por %p58, %p59
    %p61 = scmp.ne.s32.totalorder %s49, %s50
    %p62 = scmp.eq.s32.totalorder %s19, 1
    %p63 = por %p61, %p62
    %p65 = scmp.ne.s32.totalorder %s50, %s64
    %p66 = scmp.eq.s32.totalorder %s19, 0
    %p67 = por %p65, %p66
    %s69 = sadd.s32 %s68, 1
    %p72 = scmp.eq.s32.totalorder %s13, 1
    %p73 = scmp.ne.s32.totalorder %s68, %s70
    %p74 = scmp.eq.s32.totalorder %s13, 0
    %p75 = por %p73, %p74
    %p76 = scmp.ne.s32.totalorder %s68, %s70
    %p77 = scmp.eq.s32.totalorder %s18, 1
    %p78 = por %p76, %p77
    %p79 = scmp.ne.s32.totalorder %s70, %s71
    %p80 = scmp.eq.s32.totalorder %s18, 0
    %p81 = por %p79, %p80
    %p82 = scmp.ne.s32.totalorder %s70, %s71
    %p83 = scmp.eq.s32.totalorder %s19, 1
    %p84 = por %p82, %p83
    %p86 = scmp.ne.s32.totalorder %s71, %s85
    %p87 = scmp.eq.s32.totalorder %s19, 0
    %p88 = por %p86, %p87
    %s90 = sadd.s32 %s89, 1
    %p93 = scmp.eq.s32.totalorder %s13, 1
    %p94 = scmp.ne.s32.totalorder %s89, %s91
    %p95 = scmp.eq.s32.totalorder %s13, 0
    %p96 = por %p94, %p95
    %p97 = scmp.ne.s32.totalorder %s89, %s91
    %p98 = scmp.eq.s32.totalorder %s18, 1
    %p99 = por %p97, %p98
    %p100 = scmp.ne.s32.totalorder %s91, %s92
    %p101 = scmp.eq.s32.totalorder %s18, 0
    %p102 = por %p100, %p101
    %p103 = scmp.ne.s32.totalorder %s91, %s92
    %p104 = scmp.eq.s32.totalorder %s19, 1
    %p105 = por %p103, %p104
    %p107 = scmp.ne.s32.totalorder %s92, %s106
    %p108 = scmp.eq.s32.totalorder %s19, 0
    %p109 = por %p107, %p108
    %s111 = sadd.s32 %s110, 1
    %p114 = scmp.eq.s32.totalorder %s13, 1
    %p115 = scmp.ne.s32.totalorder %s110, %s112
    %p116 = scmp.eq.s32.totalorder %s13, 0
    %p117 = por %p115, %p116
    %p118 = scmp.ne.s32.totalorder %s110, %s112
    %p119 = scmp.eq.s32.totalorder %s18, 1
    %p120 = por %p118, %p119
    %p121 = scmp.ne.s32.totalorder %s112, %s113
    %p122 = scmp.eq.s32.totalorder %s18, 0
    %p123 = por %p121, %p122
    %p124 = scmp.ne.s32.totalorder %s112, %s113
    %p125 = scmp.eq.s32.totalorder %s19, 1
    %p126 = por %p124, %p125
    %p128 = scmp.ne.s32.totalorder %s113, %s127
    %p129 = scmp.eq.s32.totalorder %s19, 0
    %p130 = por %p128, %p129
    %s132 = sadd.s32 %s131, 1
    %p135 = scmp.eq.s32.totalorder %s13, 1
    %p136 = scmp.ne.s32.totalorder %s131, %s133
    %p137 = scmp.eq.s32.totalorder %s13, 0
    %p138 = por %p136, %p137
    %p139 = scmp.ne.s32.totalorder %s131, %s133
    %p140 = scmp.eq.s32.totalorder %s18, 1
    %p141 = por %p139, %p140
    %p142 = scmp.ne.s32.totalorder %s133, %s134
    %p143 = scmp.eq.s32.totalorder %s18, 0
    %p144 = por %p142, %p143
    %p145 = scmp.ne.s32.totalorder %s133, %s134
    %p146 = scmp.eq.s32.totalorder %s19, 1
    %p147 = por %p145, %p146
    %p149 = scmp.ne.s32.totalorder %s134, %s148
    %p150 = scmp.eq.s32.totalorder %s19, 0
    %p151 = por %p149, %p150
    %s153 = sadd.s32 %s152, 1
    %p156 = scmp.eq.s32.totalorder %s13, 1
    %p157 = scmp.ne.s32.totalorder %s152, %s154
    %p158 = scmp.eq.s32.totalorder %s13, 0
    %p159 = por %p157, %p158
    %p160 = scmp.ne.s32.totalorder %s152, %s154
    %p161 = scmp.eq.s32.totalorder %s18, 1
    %p162 = por %p160, %p161
    %p163 = scmp.ne.s32.totalorder %s154, %s155
    %p164 = scmp.eq.s32.totalorder %s18, 0
    %p165 = por %p163, %p164
    %p166 = scmp.ne.s32.totalorder %s154, %s155
    %p167 = scmp.eq.s32.totalorder %s19, 1
    %p168 = por %p166, %p167
    %p170 = scmp.ne.s32.totalorder %s155, %s169
    %p171 = scmp.eq.s32.totalorder %s19, 0
    %p172 = por %p170, %p171
    %s173 = ssub.s32 %s13, %s20
    %p174 = scmp.eq.s32.totalorder %s173, 0
    %s176 = sadd.s32 %s175, 1
    %s177 = scalar_select %p174, %s175, %s176
    %p180 = pneg %p174
    %p181 = scmp.eq.s32.totalorder %s13, 1
    %p182 = por %p180, %p181
    %p183 = scmp.ne.s32.totalorder %s175, %s178
    %p184 = scmp.eq.s32.totalorder %s13, 0
    %p185 = por %p183, %p184
    %p186 = scmp.ne.s32.totalorder %s175, %s178
    %p187 = scmp.eq.s32.totalorder %s18, 1
    %p188 = por %p186, %p187
    %p189 = scmp.ne.s32.totalorder %s178, %s179
    %p190 = scmp.eq.s32.totalorder %s18, 0
    %p191 = por %p189, %p190
    %p192 = scmp.ne.s32.totalorder %s178, %s179
    %p193 = scmp.eq.s32.totalorder %s19, 1
    %p194 = por %p192, %p193
    %p196 = scmp.ne.s32.totalorder %s179, %s195
    %p197 = scmp.eq.s32.totalorder %s19, 0
    %p198 = por %p196, %p197
    %p199 = scmp.le.s32.totalorder 1, %s13
    %p200 = scmp.lt.s32.totalorder %s13, 3
    %p201 = pnand %p199, %p200
    %p202 = pneg %p201
    // Predicated region
    $region9: #{encode_pallas.1} parent=5 // pred_check
      _
    $region10: #{encode_pallas.1} parent=5 // pred_check_branch
      %204 = sbr.rel (%p201) target = $region12
    $region11: #{encode_pallas.1} parent=5 // pred_region
      %s205 = ssub.s32 %s13, 1
      // Predicated region
      $region13: #{encode_pallas.1} parent=11 // pred_check
        %p206 = pneg %p60
      $region14: #{encode_pallas.1} parent=11 // pred_check_branch
        %208 = sbr.rel (%p206) target = $region16
      $region15: #{encode_pallas.1} parent=11 // pred_region
        _
      $region16: #{encode_pallas.1} parent=11 // pred_fallthru
        _
      // Predicated region
      $region17: #{encode_pallas.1} parent=11 // pred_check
        %p209 = pneg %p81
      $region18: #{encode_pallas.1} parent=11 // pred_check_branch
        %211 = sbr.rel (%p209) target = $region20
      $region19: #{encode_pallas.1} parent=11 // pred_region
        _
      $region20: #{encode_pallas.1} parent=11 // pred_fallthru
        _
      // Predicated region
      $region21: #{encode_pallas.1} parent=11 // pred_check
        %p212 = pneg %p102
      $region22: #{encode_pallas.1} parent=11 // pred_check_branch
        %214 = sbr.rel (%p212) target = $region24
      $region23: #{encode_pallas.1} parent=11 // pred_region
        _
      $region24: #{encode_pallas.1} parent=11 // pred_fallthru
        _
      // Predicated region
      $region25: #{encode_pallas.1} parent=11 // pred_check
        %p215 = pneg %p123
      $region26: #{encode_pallas.1} parent=11 // pred_check_branch
        %217 = sbr.rel (%p215) target = $region28
      $region27: #{encode_pallas.1} parent=11 // pred_region
        _
      $region28: #{encode_pallas.1} parent=11 // pred_fallthru
        _
      // Predicated region
      $region29: #{encode_pallas.1} parent=11 // pred_check
        %p218 = pneg %p144
      $region30: #{encode_pallas.1} parent=11 // pred_check_branch
        %220 = sbr.rel (%p218) target = $region32
      $region31: #{encode_pallas.1} parent=11 // pred_region
        _
      $region32: #{encode_pallas.1} parent=11 // pred_fallthru
        _
      // Predicated region
      $region33: #{encode_pallas.1} parent=11 // pred_check
        %p221 = pneg %p165
      $region34: #{encode_pallas.1} parent=11 // pred_check_branch
        %223 = sbr.rel (%p221) target = $region36
      $region35: #{encode_pallas.1} parent=11 // pred_region
        _
      $region36: #{encode_pallas.1} parent=11 // pred_fallthru
        _
    $region12: #{encode_pallas.1} parent=5 // pred_fallthru
      _
    %p224 = scmp.lt.s32.totalorder %s13, 2
    // Predicated region
    $region37: #{encode_pallas.1} parent=5 // pred_check
      %p225 = pneg %p224
    $region38: #{encode_pallas.1} parent=5 // pred_check_branch
      %227 = sbr.rel (%p225) target = $region40
    $region39: #{encode_pallas.1} parent=5 // pred_region
      // Predicated region
      $region41: #{encode_pallas.1} parent=39 // pred_check
        %p228 = pneg %p33
      $region42: #{encode_pallas.1} parent=39 // pred_check_branch
        %230 = sbr.rel (%p228) target = $region44
      $region43: #{encode_pallas.1} parent=39 // pred_region
        %s231 = smul.u32 4, %s13
        %p232 = scmp.lt.s32.totalorder %s231, 7
        %s233 = scalar_select %p232, %s231, 7
        %s234 = smul.addr %s233, 8
        %s235 = smul.addr %s234, 8
        %s236 = scalar_lea.vmem %s0, %s235
        %s237 = smul.u32 4, %s13
      $region44: #{encode_pallas.1} parent=39 // pred_fallthru
        _
    $region40: #{encode_pallas.1} parent=5 // pred_fallthru
      _
    %p238 = scmp.le.s32.totalorder 1, %s13
    %p239 = scmp.lt.s32.totalorder %s13, 3
    %p240 = pnand %p238, %p239
    %p241 = pneg %p240
    // Predicated region
    $region45: #{encode_pallas.1} parent=5 // pred_check
      _
    $region46: #{encode_pallas.1} parent=5 // pred_check_branch
      %243 = sbr.rel (%p240) target = $region48
    $region47: #{encode_pallas.1} parent=5 // pred_region
      %s244 = ssub.s32 %s13, 1
      %s245 = smul.u32 4, %s18
      %p246 = scmp.lt.s32.totalorder %s245, 7
      %s247 = scalar_select %p246, %s245, 7
      %s248 = smul.addr %s247, 8
      %s249 = smul.addr %s248, 8
      %s250 = scalar_lea.vmem %s0, %s249
      %p251 = pneg %p39
      %p252 = pneg %p36
      %p253 = pneg %p60
      %p254 = pneg %p57
      %p255 = pneg %p81
      %p256 = pneg %p78
      %p257 = pneg %p102
      %p258 = pneg %p99
      %p259 = pneg %p123
      %p260 = pneg %p120
      %p261 = pneg %p144
      %p262 = pneg %p141
      %p263 = pneg %p165
      %p264 = pneg %p162
      %p265 = pneg %p191
      %p266 = pneg %p188
      %s267 = smul.u32 4, %s18
      %p268 = scmp.lt.s32.totalorder %s267, 7
      %s269 = scalar_select %p268, %s267, 7
      %s270 = smul.addr %s269, 2
      %s271 = smul.addr %s270, 8
      %s272 = scalar_lea.vmem %s7, %s271
      %s273 = smul.u32 4, %s18
      %p274 = scmp.lt.s32.totalorder %s273, 7
      %s275 = scalar_select %p274, %s273, 7
      %s276 = smul.addr %s275, 8
      %s277 = smul.addr %s276, 8
      %s278 = scalar_lea.vmem %s0, %s277
      %s279 = smul.u32 4, %s18
      %s280 = smul.u32 4, %s18
      %p281 = scmp.lt.s32.totalorder %s280, 7
      %s282 = scalar_select %p281, %s280, 7
      %s283 = smul.addr %s282, 2
      %s284 = smul.addr %s283, 8
      %s285 = scalar_lea.vmem %s7, %s284
      %s286 = smul.u32 4, %s18
      %v287 = vld [vmem:[%s1] sm:$0xff]
      %v288 = vld [vmem:[%s1 + $0x8] sm:$0xf]
      %v289 = vld [vmem:[%s2] sm:$0x1]
      %v290 = vld [vmem:[%s3] sm:$0xff]
      %v291 = vld [vmem:[%s3 + $0x8] sm:$0xff]
      %v292 = vld [vmem:[%s3 + $0x10] sm:$0xff]
      %v293 = vld [vmem:[%s3 + $0x18] sm:$0xff]
      %v294 = vld [vmem:[%s3 + $0x20] sm:$0xff]
      %v295 = vld [vmem:[%s3 + $0x28] sm:$0xff]
      %v296 = vld [vmem:[%s3 + $0x30] sm:$0xff]
      %v297 = vld [vmem:[%s3 + $0x38] sm:$0xff]
      %v298 = vld [vmem:[%s3 + $0x40] sm:$0xff]
      %v299 = vld [vmem:[%s3 + $0x48] sm:$0xff]
      %v300 = vld [vmem:[%s3 + $0x50] sm:$0xff]
      %v301 = vld [vmem:[%s3 + $0x58] sm:$0xff]
      %v302 = vld [vmem:[%s3 + $0x60] sm:$0xff]
      %v303 = vld [vmem:[%s3 + $0x68] sm:$0xff]
      %v304 = vld [vmem:[%s3 + $0x70] sm:$0xff]
      %v305 = vld [vmem:[%s3 + $0x78] sm:$0xff]
      %v306 = vld [vmem:[%s3 + $0x80] sm:$0xff]
      %v307 = vld [vmem:[%s3 + $0x88] sm:$0xff]
      %v308 = vld [vmem:[%s3 + $0x90] sm:$0xff]
      %v309 = vld [vmem:[%s3 + $0x98] sm:$0xff]
      %v310 = vld [vmem:[%s3 + $0xa0] sm:$0xff]
      %v311 = vld [vmem:[%s3 + $0xa8] sm:$0xff]
      %v312 = vld [vmem:[%s3 + $0xb0] sm:$0xff]
      %v313 = vld [vmem:[%s3 + $0xb8] sm:$0xff]
      %v314 = vld [vmem:[%s3 + $0xc0] sm:$0xff]
      %v315 = vld [vmem:[%s3 + $0xc8] sm:$0xff]
      %v316 = vld [vmem:[%s3 + $0xd0] sm:$0xff]
      %v317 = vld [vmem:[%s3 + $0xd8] sm:$0xff]
      %v318 = vld [vmem:[%s3 + $0xe0] sm:$0xff]
      %v319 = vld [vmem:[%s3 + $0xe8] sm:$0xff]
      %v320 = vld [vmem:[%s3 + $0xf0] sm:$0xff]
      %v321 = vld [vmem:[%s3 + $0xf8] sm:$0xff]
      %v322 = vld [vmem:[%s3 + $0x100] sm:$0xff]
      %v323 = vld [vmem:[%s3 + $0x108] sm:$0xff]
      %v324 = vld [vmem:[%s3 + $0x110] sm:$0xff]
      %v325 = vld [vmem:[%s3 + $0x118] sm:$0xff]
      %v326 = vld [vmem:[%s3 + $0x120] sm:$0xff]
      %v327 = vld [vmem:[%s3 + $0x128] sm:$0xff]
      %v328 = vld [vmem:[%s3 + $0x130] sm:$0xff]
      %v329 = vld [vmem:[%s3 + $0x138] sm:$0xff]
      %v330 = vld [vmem:[%s3 + $0x140] sm:$0xff]
      %v331 = vld [vmem:[%s3 + $0x148] sm:$0xff]
      %v332 = vld [vmem:[%s3 + $0x150] sm:$0xff]
      %v333 = vld [vmem:[%s3 + $0x158] sm:$0xff]
      %v334 = vld [vmem:[%s3 + $0x160] sm:$0xff]
      %v335 = vld [vmem:[%s3 + $0x168] sm:$0xff]
      %v336 = vld [vmem:[%s3 + $0x170] sm:$0xff]
      %v337 = vld [vmem:[%s3 + $0x178] sm:$0xff]
      %v338 = vld [vmem:[%s4] sm:$0x1]
      %v339 = vld [vmem:[%s5] sm:$0xff]
      %v340 = vld [vmem:[%s5 + $0x8] sm:$0xff]
      %v341 = vld [vmem:[%s5 + $0x10] sm:$0xff]
      %v342 = vld [vmem:[%s5 + $0x18] sm:$0xff]
      %v343 = vld [vmem:[%s5 + $0x20] sm:$0xff]
      %v344 = vld [vmem:[%s5 + $0x28] sm:$0xff]
      %v345 = vld [vmem:[%s5 + $0x30] sm:$0xff]
      %v346 = vld [vmem:[%s5 + $0x38] sm:$0xff]
      %v347 = vld [vmem:[%s5 + $0x40] sm:$0xff]
      %v348 = vld [vmem:[%s5 + $0x48] sm:$0xff]
      %v349 = vld [vmem:[%s5 + $0x50] sm:$0xff]
      %v350 = vld [vmem:[%s5 + $0x58] sm:$0xff]
      %v351 = vld [vmem:[%s5 + $0x60] sm:$0xff]
      %v352 = vld [vmem:[%s5 + $0x68] sm:$0xff]
      %v353 = vld [vmem:[%s5 + $0x70] sm:$0xff]
      %v354 = vld [vmem:[%s5 + $0x78] sm:$0xff]
      %v355 = vld [vmem:[%s5 + $0x80] sm:$0xff]
      %v356 = vld [vmem:[%s5 + $0x88] sm:$0xff]
      %v357 = vld [vmem:[%s5 + $0x90] sm:$0xff]
      %v358 = vld [vmem:[%s5 + $0x98] sm:$0xff]
      %v359 = vld [vmem:[%s5 + $0xa0] sm:$0xff]
      %v360 = vld [vmem:[%s5 + $0xa8] sm:$0xff]
      %v361 = vld [vmem:[%s5 + $0xb0] sm:$0xff]
      %v362 = vld [vmem:[%s5 + $0xb8] sm:$0xff]
      %v363 = vld [vmem:[%s5 + $0xc0] sm:$0xff]
      %v364 = vld [vmem:[%s5 + $0xc8] sm:$0xff]
      %v365 = vld [vmem:[%s5 + $0xd0] sm:$0xff]
      %v366 = vld [vmem:[%s5 + $0xd8] sm:$0xff]
      %v367 = vld [vmem:[%s5 + $0xe0] sm:$0xff]
      %v368 = vld [vmem:[%s5 + $0xe8] sm:$0xff]
      %v369 = vld [vmem:[%s5 + $0xf0] sm:$0xff]
      %v370 = vld [vmem:[%s5 + $0xf8] sm:$0xff]
      %v371 = vld [vmem:[%s5 + $0x100] sm:$0xff]
      %v372 = vld [vmem:[%s5 + $0x108] sm:$0xff]
      %v373 = vld [vmem:[%s5 + $0x110] sm:$0xff]
      %v374 = vld [vmem:[%s5 + $0x118] sm:$0xff]
      %v375 = vld [vmem:[%s5 + $0x120] sm:$0xff]
      %v376 = vld [vmem:[%s5 + $0x128] sm:$0xff]
      %v377 = vld [vmem:[%s5 + $0x130] sm:$0xff]
      %v378 = vld [vmem:[%s5 + $0x138] sm:$0xff]
      %v379 = vld [vmem:[%s5 + $0x140] sm:$0xff]
      %v380 = vld [vmem:[%s5 + $0x148] sm:$0xff]
      %v381 = vld [vmem:[%s5 + $0x150] sm:$0xff]
      %v382 = vld [vmem:[%s5 + $0x158] sm:$0xff]
      %v383 = vld [vmem:[%s5 + $0x160] sm:$0xff]
      %v384 = vld [vmem:[%s5 + $0x168] sm:$0xff]
      %v385 = vld [vmem:[%s5 + $0x170] sm:$0xff]
      %v386 = vld [vmem:[%s5 + $0x178] sm:$0xff]
      %v387 = vld [vmem:[%s6] sm:$0x1]
      %v388 = vld [vmem:[%s278] sm:$0xff]
      %v389 = vld [vmem:[%s278 + $0x8] sm:$0xff]
      %v390 = vld [vmem:[%s278 + $0x10] sm:$0xff]
      %v391 = vld [vmem:[%s278 + $0x18] sm:$0x7f]
      %v393 = vlaneseq
      %v394 = vshrl.u32 %v393, 7
      %v395 = vsub.s32 0, %v394
      %v396 = vrot.slane %v289, %v395
      %vm398 = vcmask 97280
      %v400 = vsel %vm398, %v388, 0
      %v403 = vsel %vm398, %v389, 0
      %v406 = vsel %vm398, %v390, 0
      %v409 = vsel %vm398, %v391, 0
      %vm411 = vcmask 1043456
      %v413 = vsel %vm411, %v288, 0
      %415 = vmatprep.subr.mxu0 0.0
      %416 = vmatpush1.msra.mxu0 %v287
      %417 = vmatprep.subr.mxu0 0.0
      %418 = vmatpush1.msra.mxu0 %v413
      %419 = vmatprep.subr.mxu0 0.0
      %420 = vmatpush1.msra.mxu0 0.0
      %421 = vmatprep.subr.mxu0 0.0
      %422 = vmatpush1.msra.mxu0 0.0
      %423 = vmatprep.subr.mxu0 0.0
      %424 = vmatpush1.msra.mxu0 0.0
      %425 = vmatprep.subr.mxu0 0.0
      %426 = vmatpush1.msra.mxu0 0.0
      %427 = vmatprep.subr.mxu0 0.0
      %428 = vmatpush1.msra.mxu0 0.0
      %429 = vmatprep.subr.mxu0 0.0
      %430 = vmatpush1.msra.mxu0 0.0
      %431 = vmatprep.subr.mxu0 0.0
      %432 = vmatpush1.msra.mxu0 0.0
      %433 = vmatprep.subr.mxu0 0.0
      %434 = vmatpush1.msra.mxu0 0.0
      %435 = vmatprep.subr.mxu0 0.0
      %436 = vmatpush1.msra.mxu0 0.0
      %437 = vmatprep.subr.mxu0 0.0
      %438 = vmatpush1.msra.mxu0 0.0
      %439 = vmatprep.subr.mxu0 0.0
      %440 = vmatpush1.msra.mxu0 0.0
      %441 = vmatprep.subr.mxu0 0.0
      %442 = vmatpush1.msra.mxu0 0.0
      %443 = vmatprep.subr.mxu0 0.0
      %444 = vmatpush1.msra.mxu0 0.0
      %445 = vmatprep.subr.mxu0 0.0
      %446 = vmatpush1.msra.mxu0 0.0
      %447 = vmatprep.subr.mxu0 0.0
      %448 = vmatpush1.msra.mxu0 0.0
      %449 = vmatprep.subr.mxu0 0.0
      %450 = vmatpush1.msra.mxu0 0.0
      %451 = vmatprep.subr.mxu0 0.0
      %452 = vmatpush1.msra.mxu0 0.0
      %453 = vmatprep.subr.mxu0 0.0
      %454 = vmatpush1.msra.mxu0 0.0
      %455 = vmatprep.subr.mxu0 0.0
      %456 = vmatpush1.msra.mxu0 0.0
      %457 = vmatprep.subr.mxu0 0.0
      %458 = vmatpush1.msra.mxu0 0.0
      %459 = vmatprep.subr.mxu0 0.0
      %460 = vmatpush1.msra.mxu0 0.0
      %461 = vmatprep.subr.mxu0 0.0
      %462 = vmatpush1.msra.mxu0 0.0
      %463 = vmatprep.subr.mxu0 0.0
      %464 = vmatpush1.msra.mxu0 0.0
      %465 = vmatprep.subr.mxu0 0.0
      %466 = vmatpush1.msra.mxu0 0.0
      %467 = vmatprep.subr.mxu0 0.0
      %468 = vmatpush1.msra.mxu0 0.0
      %469 = vmatprep.subr.mxu0 0.0
      %470 = vmatpush1.msra.mxu0 0.0
      %471 = vmatprep.subr.mxu0 0.0
      %472 = vmatpush1.msra.mxu0 0.0
      %473 = vmatprep.subr.mxu0 0.0
      %474 = vmatpush1.msra.mxu0 0.0
      %475 = vmatprep.subr.mxu0 0.0
      %476 = vmatpush1.msra.mxu0 0.0
      %477 = vmatprep.subr.mxu0 0.0
      %478 = vmatpush1.msra.mxu0 0.0
      %479 = vmatprep.mubr.f32.mxu0 0.0
      %480 = vmatmul.mubr.f32.gmra.mrb[0].mxu0 %v400
      %v481 = vpop.f32.mrb[0].mxu0
      %v482 = vadd.f32 %v396, %v481
      %v483 = vpop.f32.mrb[0].mxu0
      %484 = vmatprep.mubr.f32.mxu0 0.0
      %485 = vmatmul.mubr.f32.gmra.mrb[0].mxu0 %v403
      %v486 = vpop.f32.mrb[0].mxu0
      %v487 = vadd.f32 %v396, %v486
      %v488 = vpop.f32.mrb[0].mxu0
      %489 = vmatprep.mubr.f32.mxu0 0.0
      %490 = vmatmul.mubr.f32.gmra.mrb[0].mxu0 %v406
      %v491 = vpop.f32.mrb[0].mxu0
      %v492 = vadd.f32 %v396, %v491
      %v493 = vpop.f32.mrb[0].mxu0
      %494 = vmatprep.mubr.f32.mxu0 0.0
      %495 = vmatmul.mubr.f32.gmra.mrb[0].mxu0 %v409
      %v496 = vpop.f32.mrb[0].mxu0
      %v497 = vadd.f32 %v396, %v496
      %v498 = vpop.f32.mrb[0].mxu0
      %499 = vdwg.mxu0
      %s500 = scalar_lea.vmem %s278, 32
      %v501 = vld [vmem:[%s500] sm:$0xff]
      %v502 = vld [vmem:[%s500 + $0x8] sm:$0xff]
      %v503 = vld [vmem:[%s500 + $0x10] sm:$0xff]
      %v504 = vld [vmem:[%s500 + $0x18] sm:$0x7f]
      %v506 = vsel %vm398, %v501, 0
      %v509 = vsel %vm398, %v502, 0
      %v512 = vsel %vm398, %v503, 0
      %v515 = vsel %vm398, %v504, 0
      %517 = vmatprep.subr.mxu0 0.0
      %518 = vmatpush1.msra.mxu0 %v287
      %519 = vmatprep.subr.mxu0 0.0
      %520 = vmatpush1.msra.mxu0 %v413
      %521 = vmatprep.subr.mxu0 0.0
      %522 = vmatpush1.msra.mxu0 0.0
      %523 = vmatprep.subr.mxu0 0.0
      %524 = vmatpush1.msra.mxu0 0.0
      %525 = vmatprep.subr.mxu0 0.0
      %526 = vmatpush1.msra.mxu0 0.0
      %527 = vmatprep.subr.mxu0 0.0
      %528 = vmatpush1.msra.mxu0 0.0
      %529 = vmatprep.subr.mxu0 0.0
      %530 = vmatpush1.msra.mxu0 0.0
      %531 = vmatprep.subr.mxu0 0.0
      %532 = vmatpush1.msra.mxu0 0.0
      %533 = vmatprep.subr.mxu0 0.0
      %534 = vmatpush1.msra.mxu0 0.0
      %535 = vmatprep.subr.mxu0 0.0
      %536 = vmatpush1.msra.mxu0 0.0
      %537 = vmatprep.subr.mxu0 0.0
      %538 = vmatpush1.msra.mxu0 0.0
      %539 = vmatprep.subr.mxu0 0.0
      %540 = vmatpush1.msra.mxu0 0.0
      %541 = vmatprep.subr.mxu0 0.0
      %542 = vmatpush1.msra.mxu0 0.0
      %543 = vmatprep.subr.mxu0 0.0
      %544 = vmatpush1.msra.mxu0 0.0
      %545 = vmatprep.subr.mxu0 0.0
      %546 = vmatpush1.msra.mxu0 0.0
      %547 = vmatprep.subr.mxu0 0.0
      %548 = vmatpush1.msra.mxu0 0.0
      %549 = vmatprep.subr.mxu0 0.0
      %550 = vmatpush1.msra.mxu0 0.0
      %551 = vmatprep.subr.mxu0 0.0
      %552 = vmatpush1.msra.mxu0 0.0
      %553 = vmatprep.subr.mxu0 0.0
      %554 = vmatpush1.msra.mxu0 0.0
      %555 = vmatprep.subr.mxu0 0.0
      %556 = vmatpush1.msra.mxu0 0.0
      %557 = vmatprep.subr.mxu0 0.0
      %558 = vmatpush1.msra.mxu0 0.0
      %559 = vmatprep.subr.mxu0 0.0
      %560 = vmatpush1.msra.mxu0 0.0
      %561 = vmatprep.subr.mxu0 0.0
      %562 = vmatpush1.msra.mxu0 0.0
      %563 = vmatprep.subr.mxu0 0.0
      %564 = vmatpush1.msra.mxu0 0.0
      %565 = vmatprep.subr.mxu0 0.0
      %566 = vmatpush1.msra.mxu0 0.0
      %567 = vmatprep.subr.mxu0 0.0
      %568 = vmatpush1.msra.mxu0 0.0
      %569 = vmatprep.subr.mxu0 0.0
      %570 = vmatpush1.msra.mxu0 0.0
      %571 = vmatprep.subr.mxu0 0.0
      %572 = vmatpush1.msra.mxu0 0.0
      %573 = vmatprep.subr.mxu0 0.0
      %574 = vmatpush1.msra.mxu0 0.0
      %575 = vmatprep.subr.mxu0 0.0
      %576 = vmatpush1.msra.mxu0 0.0
      %577 = vmatprep.subr.mxu0 0.0
      %578 = vmatpush1.msra.mxu0 0.0
      %579 = vmatprep.subr.mxu0 0.0
      %580 = vmatpush1.msra.mxu0 0.0
      %581 = vmatprep.mubr.f32.mxu0 0.0
      %582 = vmatmul.mubr.f32.gmra.mrb[0].mxu0 %v506
      %v583 = vpop.f32.mrb[0].mxu0
      %v584 = vadd.f32 %v396, %v583
      %v585 = vpop.f32.mrb[0].mxu0
      %586 = vmatprep.mubr.f32.mxu0 0.0
      %587 = vmatmul.mubr.f32.gmra.mrb[0].mxu0 %v509
      %v588 = vpop.f32.mrb[0].mxu0
      %v589 = vadd.f32 %v396, %v588
      %v590 = vpop.f32.mrb[0].mxu0
      %591 = vmatprep.mubr.f32.mxu0 0.0
      %592 = vmatmul.mubr.f32.gmra.mrb[0].mxu0 %v512
      %v593 = vpop.f32.mrb[0].mxu0
      %v594 = vadd.f32 %v396, %v593
      %v595 = vpop.f32.mrb[0].mxu0
      %596 = vmatprep.mubr.f32.mxu0 0.0
      %597 = vmatmul.mubr.f32.gmra.mrb[0].mxu0 %v515
      %v598 = vpop.f32.mrb[0].mxu0
      %v599 = vadd.f32 %v396, %v598
      %v600 = vpop.f32.mrb[0].mxu0
      %601 = vdwg.mxu0
      %vm602 = vcmp.gt.f32.partialorder %v482, 0.0
      %vm603 = vcmp.gt.f32.partialorder %v487, 0.0
      %vm604 = vcmp.gt.f32.partialorder %v492, 0.0
      %vm605 = vcmp.gt.f32.partialorder %v497, 0.0
      %v606 = vmul.f32 %v482, 1.442695
      %v607 = vpow.pop %v606
      %v608 = vmul.f32 %v487, 1.442695
      %v609 = vpow.pop %v608
      %v610 = vmul.f32 %v492, 1.442695
      %v611 = vpow.pop %v610
      %v612 = vmul.f32 %v497, 1.442695
      %v613 = vpow.pop %v612
      %v614 = vsub.f32 %v607, 1.0
      %v615 = vsub.f32 %v609, 1.0
      %v616 = vsub.f32 %v611, 1.0
      %v617 = vsub.f32 %v613, 1.0
      %v618 = vsel %vm602, %v482, %v614
      %v619 = vsel %vm603, %v487, %v615
      %v620 = vsel %vm604, %v492, %v616
      %v621 = vsel %vm605, %v497, %v617
      %vm622 = vcmp.gt.f32.partialorder %v584, 0.0
      %vm623 = vcmp.gt.f32.partialorder %v589, 0.0
      %vm624 = vcmp.gt.f32.partialorder %v594, 0.0
      %vm625 = vcmp.gt.f32.partialorder %v599, 0.0
      %v626 = vmul.f32 %v584, 1.442695
      %v627 = vpow.pop %v626
      %v628 = vmul.f32 %v589, 1.442695
      %v629 = vpow.pop %v628
      %v630 = vmul.f32 %v594, 1.442695
      %v631 = vpow.pop %v630
      %v632 = vmul.f32 %v599, 1.442695
      %v633 = vpow.pop %v632
      %v634 = vsub.f32 %v627, 1.0
      %v635 = vsub.f32 %v629, 1.0
      %v636 = vsub.f32 %v631, 1.0
      %v637 = vsub.f32 %v633, 1.0
      %v638 = vsel %vm622, %v584, %v634
      %v639 = vsel %vm623, %v589, %v635
      %v640 = vsel %vm624, %v594, %v636
      %v641 = vsel %vm625, %v599, %v637
      %v642 = vmax.f32 %v618, %v638
      %v643 = vmax.f32 %v619, %v639
      %v644 = vmax.f32 %v620, %v640
      %v645 = vmax.f32 %v621, %v641
      %vm650 = vcmask 1046528
      %v651 = vrot.slane %v642, 1
      %v652 = vrot.slane %v643, 1
      %v653 = vsel %vm650, %v651, %v652
      %v654 = vrot.slane %v644, 1
      %v655 = vsel %vm650, %v652, %v654
      %v656 = vrot.slane %v645, 1
      %v657 = vsel %vm650, %v654, %v656
      %vm662 = vcmask 1045504
      %v663 = vrot.slane %v642, 2
      %v664 = vrot.slane %v643, 2
      %v665 = vsel %vm662, %v663, %v664
      %v666 = vrot.slane %v644, 2
      %v667 = vsel %vm662, %v664, %v666
      %v668 = vrot.slane %v645, 2
      %v669 = vsel %vm662, %v666, %v668
      %v675 = vlaneseq
      %v676 = vshrl.u32 %v675, 7
      %v677 = vsub.s32 0, %v676
      %v678 = vrot.slane %v338, %v677
      %680 = vmatprep.subr.mxu0 0.0
      %681 = vmatpush1.msra.mxu0 %v290
      %682 = vmatprep.subr.mxu0 0.0
      %683 = vmatpush1.msra.mxu0 %v291
      %684 = vmatprep.subr.mxu0 0.0
      %685 = vmatpush1.msra.mxu0 %v292
      %686 = vmatprep.subr.mxu0 0.0
      %687 = vmatpush1.msra.mxu0 %v293
      %688 = vmatprep.subr.mxu0 0.0
      %689 = vmatpush1.msra.mxu0 %v294
      %690 = vmatprep.subr.mxu0 0.0
      %691 = vmatpush1.msra.mxu0 %v295
      %692 = vmatprep.subr.mxu0 0.0
      %693 = vmatpush1.msra.mxu0 %v296
      %694 = vmatprep.subr.mxu0 0.0
      %695 = vmatpush1.msra.mxu0 %v297
      %696 = vmatprep.subr.mxu0 0.0
      %697 = vmatpush1.msra.mxu0 %v298
      %698 = vmatprep.subr.mxu0 0.0
      %699 = vmatpush1.msra.mxu0 %v299
      %700 = vmatprep.subr.mxu0 0.0
      %701 = vmatpush1.msra.mxu0 %v300
      %702 = vmatprep.subr.mxu0 0.0
      %703 = vmatpush1.msra.mxu0 %v301
      %704 = vmatprep.subr.mxu0 0.0
      %705 = vmatpush1.msra.mxu0 %v302
      %706 = vmatprep.subr.mxu0 0.0
      %707 = vmatpush1.msra.mxu0 %v303
      %708 = vmatprep.subr.mxu0 0.0
      %709 = vmatpush1.msra.mxu0 %v304
      %710 = vmatprep.subr.mxu0 0.0
      %711 = vmatpush1.msra.mxu0 %v305
      %712 = vmatprep.subr.mxu0 0.0
      %713 = vmatpush1.msra.mxu0 %v306
      %714 = vmatprep.subr.mxu0 0.0
      %715 = vmatpush1.msra.mxu0 %v307
      %716 = vmatprep.subr.mxu0 0.0
      %717 = vmatpush1.msra.mxu0 %v308
      %718 = vmatprep.subr.mxu0 0.0
      %719 = vmatpush1.msra.mxu0 %v309
      %720 = vmatprep.subr.mxu0 0.0
      %721 = vmatpush1.msra.mxu0 %v310
      %722 = vmatprep.subr.mxu0 0.0
      %723 = vmatpush1.msra.mxu0 %v311
      %724 = vmatprep.subr.mxu0 0.0
      %725 = vmatpush1.msra.mxu0 %v312
      %726 = vmatprep.subr.mxu0 0.0
      %727 = vmatpush1.msra.mxu0 %v313
      %728 = vmatprep.subr.mxu0 0.0
      %729 = vmatpush1.msra.mxu0 %v314
      %730 = vmatprep.subr.mxu0 0.0
      %731 = vmatpush1.msra.mxu0 %v315
      %732 = vmatprep.subr.mxu0 0.0
      %733 = vmatpush1.msra.mxu0 %v316
      %734 = vmatprep.subr.mxu0 0.0
      %735 = vmatpush1.msra.mxu0 %v317
      %736 = vmatprep.subr.mxu0 0.0
      %737 = vmatpush1.msra.mxu0 %v318
      %738 = vmatprep.subr.mxu0 0.0
      %739 = vmatpush1.msra.mxu0 %v319
      %740 = vmatprep.subr.mxu0 0.0
      %741 = vmatpush1.msra.mxu0 %v320
      %742 = vmatprep.subr.mxu0 0.0
      %743 = vmatpush1.msra.mxu0 %v321
      %744 = vmatprep.mubr.f32.mxu0 %v653
      %745 = vmatmul.mubr.f32.gmra.mrb[0].mxu0 %v642
      %v746 = vpop.f32.mrb[0].mxu0
      %v747 = vadd.f32 %v678, %v746
      %v748 = vpop.f32.mrb[0].mxu0
      %749 = vmatprep.mubr.f32.mxu0 %v655
      %750 = vmatmul.mubr.f32.gmra.mrb[0].mxu0 %v643
      %v751 = vpop.f32.mrb[0].mxu0
      %v752 = vadd.f32 %v678, %v751
      %v753 = vpop.f32.mrb[0].mxu0
      %754 = vmatprep.mubr.f32.mxu0 %v657
      %755 = vmatmul.mubr.f32.gmra.mrb[0].mxu0 %v644
      %v756 = vpop.f32.mrb[0].mxu0
      %v757 = vadd.f32 %v678, %v756
      %v758 = vpop.f32.mrb[0].mxu0
      %759 = vmatprep.mubr.f32.mxu0 %v656
      %760 = vmatmul.mubr.f32.gmra.mrb[0].mxu0 %v645
      %v761 = vpop.f32.mrb[0].mxu0
      %v762 = vadd.f32 %v678, %v761
      %v763 = vpop.f32.mrb[0].mxu0
      %764 = vdwg.mxu0
      %765 = vmatprep.subr.mxu0 0.0
      %766 = vmatpush1.msra.mxu0 %v322
      %767 = vmatprep.subr.mxu0 0.0
      %768 = vmatpush1.msra.mxu0 %v323
      %769 = vmatprep.subr.mxu0 0.0
      %770 = vmatpush1.msra.mxu0 %v324
      %771 = vmatprep.subr.mxu0 0.0
      %772 = vmatpush1.msra.mxu0 %v325
      %773 = vmatprep.subr.mxu0 0.0
      %774 = vmatpush1.msra.mxu0 %v326
      %775 = vmatprep.subr.mxu0 0.0
      %776 = vmatpush1.msra.mxu0 %v327
      %777 = vmatprep.subr.mxu0 0.0
      %778 = vmatpush1.msra.mxu0 %v328
      %779 = vmatprep.subr.mxu0 0.0
      %780 = vmatpush1.msra.mxu0 %v329
      %781 = vmatprep.subr.mxu0 0.0
      %782 = vmatpush1.msra.mxu0 %v330
      %783 = vmatprep.subr.mxu0 0.0
      %784 = vmatpush1.msra.mxu0 %v331
      %785 = vmatprep.subr.mxu0 0.0
      %786 = vmatpush1.msra.mxu0 %v332
      %787 = vmatprep.subr.mxu0 0.0
      %788 = vmatpush1.msra.mxu0 %v333
      %789 = vmatprep.subr.mxu0 0.0
      %790 = vmatpush1.msra.mxu0 %v334
      %791 = vmatprep.subr.mxu0 0.0
      %792 = vmatpush1.msra.mxu0 %v335
      %793 = vmatprep.subr.mxu0 0.0
      %794 = vmatpush1.msra.mxu0 %v336
      %795 = vmatprep.subr.mxu0 0.0
      %796 = vmatpush1.msra.mxu0 %v337
      %797 = vmatprep.subr.mxu0 0.0
      %798 = vmatpush1.msra.mxu0 0.0
      %799 = vmatprep.subr.mxu0 0.0
      %800 = vmatpush1.msra.mxu0 0.0
      %801 = vmatprep.subr.mxu0 0.0
      %802 = vmatpush1.msra.mxu0 0.0
      %803 = vmatprep.subr.mxu0 0.0
      %804 = vmatpush1.msra.mxu0 0.0
      %805 = vmatprep.subr.mxu0 0.0
      %806 = vmatpush1.msra.mxu0 0.0
      %807 = vmatprep.subr.mxu0 0.0
      %808 = vmatpush1.msra.mxu0 0.0
      %809 = vmatprep.subr.mxu0 0.0
      %810 = vmatpush1.msra.mxu0 0.0
      %811 = vmatprep.subr.mxu0 0.0
      %812 = vmatpush1.msra.mxu0 0.0
      %813 = vmatprep.subr.mxu0 0.0
      %814 = vmatpush1.msra.mxu0 0.0
      %815 = vmatprep.subr.mxu0 0.0
      %816 = vmatpush1.msra.mxu0 0.0
      %817 = vmatprep.subr.mxu0 0.0
      %818 = vmatpush1.msra.mxu0 0.0
      %819 = vmatprep.subr.mxu0 0.0
      %820 = vmatpush1.msra.mxu0 0.0
      %821 = vmatprep.subr.mxu0 0.0
      %822 = vmatpush1.msra.mxu0 0.0
      %823 = vmatprep.subr.mxu0 0.0
      %824 = vmatpush1.msra.mxu0 0.0
      %825 = vmatprep.subr.mxu0 0.0
      %826 = vmatpush1.msra.mxu0 0.0
      %827 = vmatprep.subr.mxu0 0.0
      %828 = vmatpush1.msra.mxu0 0.0
      %829 = vmatprep.mubr.f32.mxu0 0.0
      %830 = vmatmul.mubr.f32.gmra.mrb[0].mxu0 %v665
      %v831 = vpop.f32.mrb[0].mxu0
      %v832 = vadd.f32 %v747, %v831
      %v833 = vpop.f32.mrb[0].mxu0
      %834 = vmatprep.mubr.f32.mxu0 0.0
      %835 = vmatmul.mubr.f32.gmra.mrb[0].mxu0 %v667
      %v836 = vpop.f32.mrb[0].mxu0
      %v837 = vadd.f32 %v752, %v836
      %v838 = vpop.f32.mrb[0].mxu0
      %839 = vmatprep.mubr.f32.mxu0 0.0
      %840 = vmatmul.mubr.f32.gmra.mrb[0].mxu0 %v669
      %v841 = vpop.f32.mrb[0].mxu0
      %v842 = vadd.f32 %v757, %v841
      %v843 = vpop.f32.mrb[0].mxu0
      %844 = vmatprep.mubr.f32.mxu0 0.0
      %845 = vmatmul.mubr.f32.gmra.mrb[0].mxu0 %v668
      %v846 = vpop.f32.mrb[0].mxu0
      %v847 = vadd.f32 %v762, %v846
      %v848 = vpop.f32.mrb[0].mxu0
      %849 = vdwg.mxu0
      %vm850 = vcmp.gt.f32.partialorder %v832, 0.0
      %vm851 = vcmp.gt.f32.partialorder %v837, 0.0
      %vm852 = vcmp.gt.f32.partialorder %v842, 0.0
      %vm853 = vcmp.gt.f32.partialorder %v847, 0.0
      %v854 = vmul.f32 %v832, 1.442695
      %v855 = vpow.pop %v854
      %v856 = vmul.f32 %v837, 1.442695
      %v857 = vpow.pop %v856
      %v858 = vmul.f32 %v842, 1.442695
      %v859 = vpow.pop %v858
      %v860 = vmul.f32 %v847, 1.442695
      %v861 = vpow.pop %v860
      %v862 = vsub.f32 %v855, 1.0
      %v863 = vsub.f32 %v857, 1.0
      %v864 = vsub.f32 %v859, 1.0
      %v865 = vsub.f32 %v861, 1.0
      %v866 = vsel %vm850, %v832, %v862
      %v867 = vsel %vm851, %v837, %v863
      %v868 = vsel %vm852, %v842, %v864
      %v869 = vsel %vm853, %v847, %v865
      %870 = vst [vmem:[#allocation2] sm:$0xff] %v866
      %871 = vst [vmem:[#allocation2 + $0x8] sm:$0xff] %v867
      %872 = vst [vmem:[#allocation2 + $0x10] sm:$0xff] %v868
      %873 = vst [vmem:[#allocation2 + $0x18] sm:$0x1f] %v869
      %v874 = vld [vmem:[#allocation2] ss:$2 sm:$0xff]
      %s875 = scalar_lea.vmem [#allocation2], 16
      %v876 = vld [vmem:[%s875] ss:$2 sm:$0x3f]
      %s877 = scalar_lea.vmem [#allocation2], 1
      %v878 = vld [vmem:[%s877] ss:$2 sm:$0xff]
      %s879 = scalar_lea.vmem [#allocation2], 17
      %v880 = vld [vmem:[%s879] ss:$2 sm:$0x3f]
      %v881 = vmax.f32 %v874, %v878
      %v882 = vmax.f32 %v876, %v880
      %v885 = vrot.slane %v881, 1
      %v886 = vrot.slane %v882, 1
      %v887 = vsel %vm650, %v885, %v886
      %v890 = vrot.slane %v881, 2
      %v891 = vrot.slane %v882, 2
      %v892 = vsel %vm662, %v890, %v891
      %v896 = vlaneseq
      %v897 = vshrl.u32 %v896, 7
      %v898 = vsub.s32 0, %v897
      %v899 = vrot.slane %v387, %v898
      %901 = vmatprep.subr.mxu0 0.0
      %902 = vmatpush1.msra.mxu0 %v339
      %903 = vmatprep.subr.mxu0 0.0
      %904 = vmatpush1.msra.mxu0 %v340
      %905 = vmatprep.subr.mxu0 0.0
      %906 = vmatpush1.msra.mxu0 %v341
      %907 = vmatprep.subr.mxu0 0.0
      %908 = vmatpush1.msra.mxu0 %v342
      %909 = vmatprep.subr.mxu0 0.0
      %910 = vmatpush1.msra.mxu0 %v343
      %911 = vmatprep.subr.mxu0 0.0
      %912 = vmatpush1.msra.mxu0 %v344
      %913 = vmatprep.subr.mxu0 0.0
      %914 = vmatpush1.msra.mxu0 %v345
      %915 = vmatprep.subr.mxu0 0.0
      %916 = vmatpush1.msra.mxu0 %v346
      %917 = vmatprep.subr.mxu0 0.0
      %918 = vmatpush1.msra.mxu0 %v347
      %919 = vmatprep.subr.mxu0 0.0
      %920 = vmatpush1.msra.mxu0 %v348
      %921 = vmatprep.subr.mxu0 0.0
      %922 = vmatpush1.msra.mxu0 %v349
      %923 = vmatprep.subr.mxu0 0.0
      %924 = vmatpush1.msra.mxu0 %v350
      %925 = vmatprep.subr.mxu0 0.0
      %926 = vmatpush1.msra.mxu0 %v351
      %927 = vmatprep.subr.mxu0 0.0
      %928 = vmatpush1.msra.mxu0 %v352
      %929 = vmatprep.subr.mxu0 0.0
      %930 = vmatpush1.msra.mxu0 %v353
      %931 = vmatprep.subr.mxu0 0.0
      %932 = vmatpush1.msra.mxu0 %v354
      %933 = vmatprep.subr.mxu0 0.0
      %934 = vmatpush1.msra.mxu0 %v355
      %935 = vmatprep.subr.mxu0 0.0
      %936 = vmatpush1.msra.mxu0 %v356
      %937 = vmatprep.subr.mxu0 0.0
      %938 = vmatpush1.msra.mxu0 %v357
      %939 = vmatprep.subr.mxu0 0.0
      %940 = vmatpush1.msra.mxu0 %v358
      %941 = vmatprep.subr.mxu0 0.0
      %942 = vmatpush1.msra.mxu0 %v359
      %943 = vmatprep.subr.mxu0 0.0
      %944 = vmatpush1.msra.mxu0 %v360
      %945 = vmatprep.subr.mxu0 0.0
      %946 = vmatpush1.msra.mxu0 %v361
      %947 = vmatprep.subr.mxu0 0.0
      %948 = vmatpush1.msra.mxu0 %v362
      %949 = vmatprep.subr.mxu0 0.0
      %950 = vmatpush1.msra.mxu0 %v363
      %951 = vmatprep.subr.mxu0 0.0
      %952 = vmatpush1.msra.mxu0 %v364
      %953 = vmatprep.subr.mxu0 0.0
      %954 = vmatpush1.msra.mxu0 %v365
      %955 = vmatprep.subr.mxu0 0.0
      %956 = vmatpush1.msra.mxu0 %v366
      %957 = vmatprep.subr.mxu0 0.0
      %958 = vmatpush1.msra.mxu0 %v367
      %959 = vmatprep.subr.mxu0 0.0
      %960 = vmatpush1.msra.mxu0 %v368
      %961 = vmatprep.subr.mxu0 0.0
      %962 = vmatpush1.msra.mxu0 %v369
      %963 = vmatprep.subr.mxu0 0.0
      %964 = vmatpush1.msra.mxu0 %v370
      %965 = vmatprep.mubr.f32.mxu0 %v887
      %966 = vmatmul.mubr.f32.gmra.mrb[0].mxu0 %v881
      %v967 = vpop.f32.mrb[0].mxu0
      %v968 = vadd.f32 %v899, %v967
      %v969 = vpop.f32.mrb[0].mxu0
      %970 = vmatprep.mubr.f32.mxu0 %v886
      %971 = vmatmul.mubr.f32.gmra.mrb[0].mxu0 %v882
      %v972 = vpop.f32.mrb[0].mxu0
      %v973 = vadd.f32 %v899, %v972
      %v974 = vpop.f32.mrb[0].mxu0
      %975 = vdwg.mxu0
      %976 = vmatprep.subr.mxu0 0.0
      %977 = vmatpush1.msra.mxu0 %v371
      %978 = vmatprep.subr.mxu0 0.0
      %979 = vmatpush1.msra.mxu0 %v372
      %980 = vmatprep.subr.mxu0 0.0
      %981 = vmatpush1.msra.mxu0 %v373
      %982 = vmatprep.subr.mxu0 0.0
      %983 = vmatpush1.msra.mxu0 %v374
      %984 = vmatprep.subr.mxu0 0.0
      %985 = vmatpush1.msra.mxu0 %v375
      %986 = vmatprep.subr.mxu0 0.0
      %987 = vmatpush1.msra.mxu0 %v376
      %988 = vmatprep.subr.mxu0 0.0
      %989 = vmatpush1.msra.mxu0 %v377
      %990 = vmatprep.subr.mxu0 0.0
      %991 = vmatpush1.msra.mxu0 %v378
      %992 = vmatprep.subr.mxu0 0.0
      %993 = vmatpush1.msra.mxu0 %v379
      %994 = vmatprep.subr.mxu0 0.0
      %995 = vmatpush1.msra.mxu0 %v380
      %996 = vmatprep.subr.mxu0 0.0
      %997 = vmatpush1.msra.mxu0 %v381
      %998 = vmatprep.subr.mxu0 0.0
      %999 = vmatpush1.msra.mxu0 %v382
      %1000 = vmatprep.subr.mxu0 0.0
      %1001 = vmatpush1.msra.mxu0 %v383
      %1002 = vmatprep.subr.mxu0 0.0
      %1003 = vmatpush1.msra.mxu0 %v384
      %1004 = vmatprep.subr.mxu0 0.0
      %1005 = vmatpush1.msra.mxu0 %v385
      %1006 = vmatprep.subr.mxu0 0.0
      %1007 = vmatpush1.msra.mxu0 %v386
      %1008 = vmatprep.subr.mxu0 0.0
      %1009 = vmatpush1.msra.mxu0 0.0
      %1010 = vmatprep.subr.mxu0 0.0
      %1011 = vmatpush1.msra.mxu0 0.0
      %1012 = vmatprep.subr.mxu0 0.0
      %1013 = vmatpush1.msra.mxu0 0.0
      %1014 = vmatprep.subr.mxu0 0.0
      %1015 = vmatpush1.msra.mxu0 0.0
      %1016 = vmatprep.subr.mxu0 0.0
      %1017 = vmatpush1.msra.mxu0 0.0
      %1018 = vmatprep.subr.mxu0 0.0
      %1019 = vmatpush1.msra.mxu0 0.0
      %1020 = vmatprep.subr.mxu0 0.0
      %1021 = vmatpush1.msra.mxu0 0.0
      %1022 = vmatprep.subr.mxu0 0.0
      %1023 = vmatpush1.msra.mxu0 0.0
      %1024 = vmatprep.subr.mxu0 0.0
      %1025 = vmatpush1.msra.mxu0 0.0
      %1026 = vmatprep.subr.mxu0 0.0
      %1027 = vmatpush1.msra.mxu0 0.0
      %1028 = vmatprep.subr.mxu0 0.0
      %1029 = vmatpush1.msra.mxu0 0.0
      %1030 = vmatprep.subr.mxu0 0.0
      %1031 = vmatpush1.msra.mxu0 0.0
      %1032 = vmatprep.subr.mxu0 0.0
      %1033 = vmatpush1.msra.mxu0 0.0
      %1034 = vmatprep.subr.mxu0 0.0
      %1035 = vmatpush1.msra.mxu0 0.0
      %1036 = vmatprep.subr.mxu0 0.0
      %1037 = vmatpush1.msra.mxu0 0.0
      %1038 = vmatprep.subr.mxu0 0.0
      %1039 = vmatpush1.msra.mxu0 0.0
      %1040 = vmatprep.mubr.f32.mxu0 0.0
      %1041 = vmatmul.mubr.f32.gmra.mrb[0].mxu0 %v892
      %v1042 = vpop.f32.mrb[0].mxu0
      %v1043 = vadd.f32 %v968, %v1042
      %v1044 = vpop.f32.mrb[0].mxu0
      %1045 = vmatprep.mubr.f32.mxu0 0.0
      %1046 = vmatmul.mubr.f32.gmra.mrb[0].mxu0 %v891
      %v1047 = vpop.f32.mrb[0].mxu0
      %v1048 = vadd.f32 %v973, %v1047
      %v1049 = vpop.f32.mrb[0].mxu0
      %1050 = vdwg.mxu0
      %vm1051 = vcmp.gt.f32.partialorder %v1043, 0.0
      %vm1052 = vcmp.gt.f32.partialorder %v1048, 0.0
      %v1053 = vmul.f32 %v1043, 1.442695
      %v1054 = vpow.pop %v1053
      %v1055 = vmul.f32 %v1048, 1.442695
      %v1056 = vpow.pop %v1055
      %v1057 = vsub.f32 %v1054, 1.0
      %v1058 = vsub.f32 %v1056, 1.0
      %v1059 = vsel %vm1051, %v1043, %v1057
      %v1060 = vsel %vm1052, %v1048, %v1058
      %1061 = vst [vmem:[%s285] sm:$0xff] %v1059
      %1062 = vst [vmem:[%s285 + $0x8] sm:$0xf] %v1060
      %s1063 = scalar_lea.vmem %s278, 64
      %v1064 = vld [vmem:[%s1063] sm:$0xff]
      %v1065 = vld [vmem:[%s1063 + $0x8] sm:$0xff]
      %v1066 = vld [vmem:[%s1063 + $0x10] sm:$0xff]
      %v1067 = vld [vmem:[%s1063 + $0x18] sm:$0x7f]
      %v1069 = vsel %vm398, %v1064, 0
      %v1072 = vsel %vm398, %v1065, 0
      %v1075 = vsel %vm398, %v1066, 0
      %v1078 = vsel %vm398, %v1067, 0
      %1080 = vmatprep.subr.mxu0 0.0
      %1081 = vmatpush1.msra.mxu0 %v287
      %1082 = vmatprep.subr.mxu0 0.0
      %1083 = vmatpush1.msra.mxu0 %v413
      %1084 = vmatprep.subr.mxu0 0.0
      %1085 = vmatpush1.msra.mxu0 0.0
      %1086 = vmatprep.subr.mxu0 0.0
      %1087 = vmatpush1.msra.mxu0 0.0
      %1088 = vmatprep.subr.mxu0 0.0
      %1089 = vmatpush1.msra.mxu0 0.0
      %1090 = vmatprep.subr.mxu0 0.0
      %1091 = vmatpush1.msra.mxu0 0.0
      %1092 = vmatprep.subr.mxu0 0.0
      %1093 = vmatpush1.msra.mxu0 0.0
      %1094 = vmatprep.subr.mxu0 0.0
      %1095 = vmatpush1.msra.mxu0 0.0
      %1096 = vmatprep.subr.mxu0 0.0
      %1097 = vmatpush1.msra.mxu0 0.0
      %1098 = vmatprep.subr.mxu0 0.0
      %1099 = vmatpush1.msra.mxu0 0.0
      %1100 = vmatprep.subr.mxu0 0.0
      %1101 = vmatpush1.msra.mxu0 0.0
      %1102 = vmatprep.subr.mxu0 0.0
      %1103 = vmatpush1.msra.mxu0 0.0
      %1104 = vmatprep.subr.mxu0 0.0
      %1105 = vmatpush1.msra.mxu0 0.0
      %1106 = vmatprep.subr.mxu0 0.0
      %1107 = vmatpush1.msra.mxu0 0.0
      %1108 = vmatprep.subr.mxu0 0.0
      %1109 = vmatpush1.msra.mxu0 0.0
      %1110 = vmatprep.subr.mxu0 0.0
      %1111 = vmatpush1.msra.mxu0 0.0
      %1112 = vmatprep.subr.mxu0 0.0
      %1113 = vmatpush1.msra.mxu0 0.0
      %1114 = vmatprep.subr.mxu0 0.0
      %1115 = vmatpush1.msra.mxu0 0.0
      %1116 = vmatprep.subr.mxu0 0.0
      %1117 = vmatpush1.msra.mxu0 0.0
      %1118 = vmatprep.subr.mxu0 0.0
      %1119 = vmatpush1.msra.mxu0 0.0
      %1120 = vmatprep.subr.mxu0 0.0
      %1121 = vmatpush1.msra.mxu0 0.0
      %1122 = vmatprep.subr.mxu0 0.0
      %1123 = vmatpush1.msra.mxu0 0.0
      %1124 = vmatprep.subr.mxu0 0.0
      %1125 = vmatpush1.msra.mxu0 0.0
      %1126 = vmatprep.subr.mxu0 0.0
      %1127 = vmatpush1.msra.mxu0 0.0
      %1128 = vmatprep.subr.mxu0 0.0
      %1129 = vmatpush1.msra.mxu0 0.0
      %1130 = vmatprep.subr.mxu0 0.0
      %1131 = vmatpush1.msra.mxu0 0.0
      %1132 = vmatprep.subr.mxu0 0.0
      %1133 = vmatpush1.msra.mxu0 0.0
      %1134 = vmatprep.subr.mxu0 0.0
      %1135 = vmatpush1.msra.mxu0 0.0
      %1136 = vmatprep.subr.mxu0 0.0
      %1137 = vmatpush1.msra.mxu0 0.0
      %1138 = vmatprep.subr.mxu0 0.0
      %1139 = vmatpush1.msra.mxu0 0.0
      %1140 = vmatprep.subr.mxu0 0.0
      %1141 = vmatpush1.msra.mxu0 0.0
      %1142 = vmatprep.subr.mxu0 0.0
      %1143 = vmatpush1.msra.mxu0 0.0
      %1144 = vmatprep.mubr.f32.mxu0 0.0
      %1145 = vmatmul.mubr.f32.gmra.mrb[0].mxu0 %v1069
      %v1146 = vpop.f32.mrb[0].mxu0
      %v1147 = vadd.f32 %v396, %v1146
      %v1148 = vpop.f32.mrb[0].mxu0
      %1149 = vmatprep.mubr.f32.mxu0 0.0
      %1150 = vmatmul.mubr.f32.gmra.mrb[0].mxu0 %v1072
      %v1151 = vpop.f32.mrb[0].mxu0
      %v1152 = vadd.f32 %v396, %v1151
      %v1153 = vpop.f32.mrb[0].mxu0
      %1154 = vmatprep.mubr.f32.mxu0 0.0
      %1155 = vmatmul.mubr.f32.gmra.mrb[0].mxu0 %v1075
      %v1156 = vpop.f32.mrb[0].mxu0
      %v1157 = vadd.f32 %v396, %v1156
      %v1158 = vpop.f32.mrb[0].mxu0
      %1159 = vmatprep.mubr.f32.mxu0 0.0
      %1160 = vmatmul.mubr.f32.gmra.mrb[0].mxu0 %v1078
      %v1161 = vpop.f32.mrb[0].mxu0
      %v1162 = vadd.f32 %v396, %v1161
      %v1163 = vpop.f32.mrb[0].mxu0
      %1164 = vdwg.mxu0
      %s1165 = scalar_lea.vmem %s278, 96
      %v1166 = vld [vmem:[%s1165] sm:$0xff]
      %v1167 = vld [vmem:[%s1165 + $0x8] sm:$0xff]
      %v1168 = vld [vmem:[%s1165 + $0x10] sm:$0xff]
      %v1169 = vld [vmem:[%s1165 + $0x18] sm:$0x7f]
      %v1171 = vsel %vm398, %v1166, 0
      %v1174 = vsel %vm398, %v1167, 0
      %v1177 = vsel %vm398, %v1168, 0
      %v1180 = vsel %vm398, %v1169, 0
      %1182 = vmatprep.subr.mxu0 0.0
      %1183 = vmatpush1.msra.mxu0 %v287
      %1184 = vmatprep.subr.mxu0 0.0
      %1185 = vmatpush1.msra.mxu0 %v413
      %1186 = vmatprep.subr.mxu0 0.0
      %1187 = vmatpush1.msra.mxu0 0.0
      %1188 = vmatprep.subr.mxu0 0.0
      %1189 = vmatpush1.msra.mxu0 0.0
      %1190 = vmatprep.subr.mxu0 0.0
      %1191 = vmatpush1.msra.mxu0 0.0
      %1192 = vmatprep.subr.mxu0 0.0
      %1193 = vmatpush1.msra.mxu0 0.0
      %1194 = vmatprep.subr.mxu0 0.0
      %1195 = vmatpush1.msra.mxu0 0.0
      %1196 = vmatprep.subr.mxu0 0.0
      %1197 = vmatpush1.msra.mxu0 0.0
      %1198 = vmatprep.subr.mxu0 0.0
      %1199 = vmatpush1.msra.mxu0 0.0
      %1200 = vmatprep.subr.mxu0 0.0
      %1201 = vmatpush1.msra.mxu0 0.0
      %1202 = vmatprep.subr.mxu0 0.0
      %1203 = vmatpush1.msra.mxu0 0.0
      %1204 = vmatprep.subr.mxu0 0.0
      %1205 = vmatpush1.msra.mxu0 0.0
      %1206 = vmatprep.subr.mxu0 0.0
      %1207 = vmatpush1.msra.mxu0 0.0
      %1208 = vmatprep.subr.mxu0 0.0
      %1209 = vmatpush1.msra.mxu0 0.0
      %1210 = vmatprep.subr.mxu0 0.0
      %1211 = vmatpush1.msra.mxu0 0.0
      %1212 = vmatprep.subr.mxu0 0.0
      %1213 = vmatpush1.msra.mxu0 0.0
      %1214 = vmatprep.subr.mxu0 0.0
      %1215 = vmatpush1.msra.mxu0 0.0
      %1216 = vmatprep.subr.mxu0 0.0
      %1217 = vmatpush1.msra.mxu0 0.0
      %1218 = vmatprep.subr.mxu0 0.0
      %1219 = vmatpush1.msra.mxu0 0.0
      %1220 = vmatprep.subr.mxu0 0.0
      %1221 = vmatpush1.msra.mxu0 0.0
      %1222 = vmatprep.subr.mxu0 0.0
      %1223 = vmatpush1.msra.mxu0 0.0
      %1224 = vmatprep.subr.mxu0 0.0
      %1225 = vmatpush1.msra.mxu0 0.0
      %1226 = vmatprep.subr.mxu0 0.0
      %1227 = vmatpush1.msra.mxu0 0.0
      %1228 = vmatprep.subr.mxu0 0.0
      %1229 = vmatpush1.msra.mxu0 0.0
      %1230 = vmatprep.subr.mxu0 0.0
      %1231 = vmatpush1.msra.mxu0 0.0
      %1232 = vmatprep.subr.mxu0 0.0
      %1233 = vmatpush1.msra.mxu0 0.0
      %1234 = vmatprep.subr.mxu0 0.0
      %1235 = vmatpush1.msra.mxu0 0.0
      %1236 = vmatprep.subr.mxu0 0.0
      %1237 = vmatpush1.msra.mxu0 0.0
      %1238 = vmatprep.subr.mxu0 0.0
      %1239 = vmatpush1.msra.mxu0 0.0
      %1240 = vmatprep.subr.mxu0 0.0
      %1241 = vmatpush1.msra.mxu0 0.0
      %1242 = vmatprep.subr.mxu0 0.0
      %1243 = vmatpush1.msra.mxu0 0.0
      %1244 = vmatprep.subr.mxu0 0.0
      %1245 = vmatpush1.msra.mxu0 0.0
      %1246 = vmatprep.mubr.f32.mxu0 0.0
      %1247 = vmatmul.mubr.f32.gmra.mrb[0].mxu0 %v1171
      %v1248 = vpop.f32.mrb[0].mxu0
      %v1249 = vadd.f32 %v396, %v1248
      %v1250 = vpop.f32.mrb[0].mxu0
      %1251 = vmatprep.mubr.f32.mxu0 0.0
      %1252 = vmatmul.mubr.f32.gmra.mrb[0].mxu0 %v1174
      %v1253 = vpop.f32.mrb[0].mxu0
      %v1254 = vadd.f32 %v396, %v1253
      %v1255 = vpop.f32.mrb[0].mxu0
      %1256 = vmatprep.mubr.f32.mxu0 0.0
      %1257 = vmatmul.mubr.f32.gmra.mrb[0].mxu0 %v1177
      %v1258 = vpop.f32.mrb[0].mxu0
      %v1259 = vadd.f32 %v396, %v1258
      %v1260 = vpop.f32.mrb[0].mxu0
      %1261 = vmatprep.mubr.f32.mxu0 0.0
      %1262 = vmatmul.mubr.f32.gmra.mrb[0].mxu0 %v1180
      %v1263 = vpop.f32.mrb[0].mxu0
      %v1264 = vadd.f32 %v396, %v1263
      %v1265 = vpop.f32.mrb[0].mxu0
      %1266 = vdwg.mxu0
      %vm1267 = vcmp.gt.f32.partialorder %v1147, 0.0
      %vm1268 = vcmp.gt.f32.partialorder %v1152, 0.0
      %vm1269 = vcmp.gt.f32.partialorder %v1157, 0.0
      %vm1270 = vcmp.gt.f32.partialorder %v1162, 0.0
      %v1271 = vmul.f32 %v1147, 1.442695
      %v1272 = vpow.pop %v1271
      %v1273 = vmul.f32 %v1152, 1.442695
      %v1274 = vpow.pop %v1273
      %v1275 = vmul.f32 %v1157, 1.442695
      %v1276 = vpow.pop %v1275
      %v1277 = vmul.f32 %v1162, 1.442695
      %v1278 = vpow.pop %v1277
      %v1279 = vsub.f32 %v1272, 1.0
      %v1280 = vsub.f32 %v1274, 1.0
      %v1281 = vsub.f32 %v1276, 1.0
      %v1282 = vsub.f32 %v1278, 1.0
      %v1283 = vsel %vm1267, %v1147, %v1279
      %v1284 = vsel %vm1268, %v1152, %v1280
      %v1285 = vsel %vm1269, %v1157, %v1281
      %v1286 = vsel %vm1270, %v1162, %v1282
      %vm1287 = vcmp.gt.f32.partialorder %v1249, 0.0
      %vm1288 = vcmp.gt.f32.partialorder %v1254, 0.0
      %vm1289 = vcmp.gt.f32.partialorder %v1259, 0.0
      %vm1290 = vcmp.gt.f32.partialorder %v1264, 0.0
      %v1291 = vmul.f32 %v1249, 1.442695
      %v1292 = vpow.pop %v1291
      %v1293 = vmul.f32 %v1254, 1.442695
      %v1294 = vpow.pop %v1293
      %v1295 = vmul.f32 %v1259, 1.442695
      %v1296 = vpow.pop %v1295
      %v1297 = vmul.f32 %v1264, 1.442695
      %v1298 = vpow.pop %v1297
      %v1299 = vsub.f32 %v1292, 1.0
      %v1300 = vsub.f32 %v1294, 1.0
      %v1301 = vsub.f32 %v1296, 1.0
      %v1302 = vsub.f32 %v1298, 1.0
      %v1303 = vsel %vm1287, %v1249, %v1299
      %v1304 = vsel %vm1288, %v1254, %v1300
      %v1305 = vsel %vm1289, %v1259, %v1301
      %v1306 = vsel %vm1290, %v1264, %v1302
      %v1307 = vmax.f32 %v1283, %v1303
      %v1308 = vmax.f32 %v1284, %v1304
      %v1309 = vmax.f32 %v1285, %v1305
      %v1310 = vmax.f32 %v1286, %v1306
      %v1315 = vrot.slane %v1307, 1
      %v1316 = vrot.slane %v1308, 1
      %v1317 = vsel %vm650, %v1315, %v1316
      %v1318 = vrot.slane %v1309, 1
      %v1319 = vsel %vm650, %v1316, %v1318
      %v1320 = vrot.slane %v1310, 1
      %v1321 = vsel %vm650, %v1318, %v1320
      %v1326 = vrot.slane %v1307, 2
      %v1327 = vrot.slane %v1308, 2
      %v1328 = vsel %vm662, %v1326, %v1327
      %v1329 = vrot.slane %v1309, 2
      %v1330 = vsel %vm662, %v1327, %v1329
      %v1331 = vrot.slane %v1310, 2
      %v1332 = vsel %vm662, %v1329, %v1331
      %1337 = vmatprep.subr.mxu0 0.0
      %1338 = vmatpush1.msra.mxu0 %v290
      %1339 = vmatprep.subr.mxu0 0.0
      %1340 = vmatpush1.msra.mxu0 %v291
      %1341 = vmatprep.subr.mxu0 0.0
      %1342 = vmatpush1.msra.mxu0 %v292
      %1343 = vmatprep.subr.mxu0 0.0
      %1344 = vmatpush1.msra.mxu0 %v293
      %1345 = vmatprep.subr.mxu0 0.0
      %1346 = vmatpush1.msra.mxu0 %v294
      %1347 = vmatprep.subr.mxu0 0.0
      %1348 = vmatpush1.msra.mxu0 %v295
      %1349 = vmatprep.subr.mxu0 0.0
      %1350 = vmatpush1.msra.mxu0 %v296
      %1351 = vmatprep.subr.mxu0 0.0
      %1352 = vmatpush1.msra.mxu0 %v297
      %1353 = vmatprep.subr.mxu0 0.0
      %1354 = vmatpush1.msra.mxu0 %v298
      %1355 = vmatprep.subr.mxu0 0.0
      %1356 = vmatpush1.msra.mxu0 %v299
      %1357 = vmatprep.subr.mxu0 0.0
      %1358 = vmatpush1.msra.mxu0 %v300
      %1359 = vmatprep.subr.mxu0 0.0
      %1360 = vmatpush1.msra.mxu0 %v301
      %1361 = vmatprep.subr.mxu0 0.0
      %1362 = vmatpush1.msra.mxu0 %v302
      %1363 = vmatprep.subr.mxu0 0.0
      %1364 = vmatpush1.msra.mxu0 %v303
      %1365 = vmatprep.subr.mxu0 0.0
      %1366 = vmatpush1.msra.mxu0 %v304
      %1367 = vmatprep.subr.mxu0 0.0
      %1368 = vmatpush1.msra.mxu0 %v305
      %1369 = vmatprep.subr.mxu0 0.0
      %1370 = vmatpush1.msra.mxu0 %v306
      %1371 = vmatprep.subr.mxu0 0.0
      %1372 = vmatpush1.msra.mxu0 %v307
      %1373 = vmatprep.subr.mxu0 0.0
      %1374 = vmatpush1.msra.mxu0 %v308
      %1375 = vmatprep.subr.mxu0 0.0
      %1376 = vmatpush1.msra.mxu0 %v309
      %1377 = vmatprep.subr.mxu0 0.0
      %1378 = vmatpush1.msra.mxu0 %v310
      %1379 = vmatprep.subr.mxu0 0.0
      %1380 = vmatpush1.msra.mxu0 %v311
      %1381 = vmatprep.subr.mxu0 0.0
      %1382 = vmatpush1.msra.mxu0 %v312
      %1383 = vmatprep.subr.mxu0 0.0
      %1384 = vmatpush1.msra.mxu0 %v313
      %1385 = vmatprep.subr.mxu0 0.0
      %1386 = vmatpush1.msra.mxu0 %v314
      %1387 = vmatprep.subr.mxu0 0.0
      %1388 = vmatpush1.msra.mxu0 %v315
      %1389 = vmatprep.subr.mxu0 0.0
      %1390 = vmatpush1.msra.mxu0 %v316
      %1391 = vmatprep.subr.mxu0 0.0
      %1392 = vmatpush1.msra.mxu0 %v317
      %1393 = vmatprep.subr.mxu0 0.0
      %1394 = vmatpush1.msra.mxu0 %v318
      %1395 = vmatprep.subr.mxu0 0.0
      %1396 = vmatpush1.msra.mxu0 %v319
      %1397 = vmatprep.subr.mxu0 0.0
      %1398 = vmatpush1.msra.mxu0 %v320
      %1399 = vmatprep.subr.mxu0 0.0
      %1400 = vmatpush1.msra.mxu0 %v321
      %1401 = vmatprep.mubr.f32.mxu0 %v1317
      %1402 = vmatmul.mubr.f32.gmra.mrb[0].mxu0 %v1307
      %v1403 = vpop.f32.mrb[0].mxu0
      %v1404 = vadd.f32 %v678, %v1403
      %v1405 = vpop.f32.mrb[0].mxu0
      %1406 = vmatprep.mubr.f32.mxu0 %v1319
      %1407 = vmatmul.mubr.f32.gmra.mrb[0].mxu0 %v1308
      %v1408 = vpop.f32.mrb[0].mxu0
      %v1409 = vadd.f32 %v678, %v1408
      %v1410 = vpop.f32.mrb[0].mxu0
      %1411 = vmatprep.mubr.f32.mxu0 %v1321
      %1412 = vmatmul.mubr.f32.gmra.mrb[0].mxu0 %v1309
      %v1413 = vpop.f32.mrb[0].mxu0
      %v1414 = vadd.f32 %v678, %v1413
      %v1415 = vpop.f32.mrb[0].mxu0
      %1416 = vmatprep.mubr.f32.mxu0 %v1320
      %1417 = vmatmul.mubr.f32.gmra.mrb[0].mxu0 %v1310
      %v1418 = vpop.f32.mrb[0].mxu0
      %v1419 = vadd.f32 %v678, %v1418
      %v1420 = vpop.f32.mrb[0].mxu0
      %1421 = vdwg.mxu0
      %1422 = vmatprep.subr.mxu0 0.0
      %1423 = vmatpush1.msra.mxu0 %v322
      %1424 = vmatprep.subr.mxu0 0.0
      %1425 = vmatpush1.msra.mxu0 %v323
      %1426 = vmatprep.subr.mxu0 0.0
      %1427 = vmatpush1.msra.mxu0 %v324
      %1428 = vmatprep.subr.mxu0 0.0
      %1429 = vmatpush1.msra.mxu0 %v325
      %1430 = vmatprep.subr.mxu0 0.0
      %1431 = vmatpush1.msra.mxu0 %v326
      %1432 = vmatprep.subr.mxu0 0.0
      %1433 = vmatpush1.msra.mxu0 %v327
      %1434 = vmatprep.subr.mxu0 0.0
      %1435 = vmatpush1.msra.mxu0 %v328
      %1436 = vmatprep.subr.mxu0 0.0
      %1437 = vmatpush1.msra.mxu0 %v329
      %1438 = vmatprep.subr.mxu0 0.0
      %1439 = vmatpush1.msra.mxu0 %v330
      %1440 = vmatprep.subr.mxu0 0.0
      %1441 = vmatpush1.msra.mxu0 %v331
      %1442 = vmatprep.subr.mxu0 0.0
      %1443 = vmatpush1.msra.mxu0 %v332
      %1444 = vmatprep.subr.mxu0 0.0
      %1445 = vmatpush1.msra.mxu0 %v333
      %1446 = vmatprep.subr.mxu0 0.0
      %1447 = vmatpush1.msra.mxu0 %v334
      %1448 = vmatprep.subr.mxu0 0.0
      %1449 = vmatpush1.msra.mxu0 %v335
      %1450 = vmatprep.subr.mxu0 0.0
      %1451 = vmatpush1.msra.mxu0 %v336
      %1452 = vmatprep.subr.mxu0 0.0
      %1453 = vmatpush1.msra.mxu0 %v337
      %1454 = vmatprep.subr.mxu0 0.0
      %1455 = vmatpush1.msra.mxu0 0.0
      %1456 = vmatprep.subr.mxu0 0.0
      %1457 = vmatpush1.msra.mxu0 0.0
      %1458 = vmatprep.subr.mxu0 0.0
      %1459 = vmatpush1.msra.mxu0 0.0
      %1460 = vmatprep.subr.mxu0 0.0
      %1461 = vmatpush1.msra.mxu0 0.0
      %1462 = vmatprep.subr.mxu0 0.0
      %1463 = vmatpush1.msra.mxu0 0.0
      %1464 = vmatprep.subr.mxu0 0.0
      %1465 = vmatpush1.msra.mxu0 0.0
      %1466 = vmatprep.subr.mxu0 0.0
      %1467 = vmatpush1.msra.mxu0 0.0
      %1468 = vmatprep.subr.mxu0 0.0
      %1469 = vmatpush1.msra.mxu0 0.0
      %1470 = vmatprep.subr.mxu0 0.0
      %1471 = vmatpush1.msra.mxu0 0.0
      %1472 = vmatprep.subr.mxu0 0.0
      %1473 = vmatpush1.msra.mxu0 0.0
      %1474 = vmatprep.subr.mxu0 0.0
      %1475 = vmatpush1.msra.mxu0 0.0
      %1476 = vmatprep.subr.mxu0 0.0
      %1477 = vmatpush1.msra.mxu0 0.0
      %1478 = vmatprep.subr.mxu0 0.0
      %1479 = vmatpush1.msra.mxu0 0.0
      %1480 = vmatprep.subr.mxu0 0.0
      %1481 = vmatpush1.msra.mxu0 0.0
      %1482 = vmatprep.subr.mxu0 0.0
      %1483 = vmatpush1.msra.mxu0 0.0
      %1484 = vmatprep.subr.mxu0 0.0
      %1485 = vmatpush1.msra.mxu0 0.0
      %1486 = vmatprep.mubr.f32.mxu0 0.0
      %1487 = vmatmul.mubr.f32.gmra.mrb[0].mxu0 %v1328
      %v1488 = vpop.f32.mrb[0].mxu0
      %v1489 = vadd.f32 %v1404, %v1488
      %v1490 = vpop.f32.mrb[0].mxu0
      %1491 = vmatprep.mubr.f32.mxu0 0.0
      %1492 = vmatmul.mubr.f32.gmra.mrb[0].mxu0 %v1330
      %v1493 = vpop.f32.mrb[0].mxu0
      %v1494 = vadd.f32 %v1409, %v1493
      %v1495 = vpop.f32.mrb[0].mxu0
      %1496 = vmatprep.mubr.f32.mxu0 0.0
      %1497 = vmatmul.mubr.f32.gmra.mrb[0].mxu0 %v1332
      %v1498 = vpop.f32.mrb[0].mxu0
      %v1499 = vadd.f32 %v1414, %v1498
      %v1500 = vpop.f32.mrb[0].mxu0
      %1501 = vmatprep.mubr.f32.mxu0 0.0
      %1502 = vmatmul.mubr.f32.gmra.mrb[0].mxu0 %v1331
      %v1503 = vpop.f32.mrb[0].mxu0
      %v1504 = vadd.f32 %v1419, %v1503
      %v1505 = vpop.f32.mrb[0].mxu0
      %1506 = vdwg.mxu0
      %vm1507 = vcmp.gt.f32.partialorder %v1489, 0.0
      %vm1508 = vcmp.gt.f32.partialorder %v1494, 0.0
      %vm1509 = vcmp.gt.f32.partialorder %v1499, 0.0
      %vm1510 = vcmp.gt.f32.partialorder %v1504, 0.0
      %v1511 = vmul.f32 %v1489, 1.442695
      %v1512 = vpow.pop %v1511
      %v1513 = vmul.f32 %v1494, 1.442695
      %v1514 = vpow.pop %v1513
      %v1515 = vmul.f32 %v1499, 1.442695
      %v1516 = vpow.pop %v1515
      %v1517 = vmul.f32 %v1504, 1.442695
      %v1518 = vpow.pop %v1517
      %v1519 = vsub.f32 %v1512, 1.0
      %v1520 = vsub.f32 %v1514, 1.0
      %v1521 = vsub.f32 %v1516, 1.0
      %v1522 = vsub.f32 %v1518, 1.0
      %v1523 = vsel %vm1507, %v1489, %v1519
      %v1524 = vsel %vm1508, %v1494, %v1520
      %v1525 = vsel %vm1509, %v1499, %v1521
      %v1526 = vsel %vm1510, %v1504, %v1522
      %1527 = vst [vmem:[#allocation2 + $0x20] sm:$0xff] %v1523
      %1528 = vst [vmem:[#allocation2 + $0x28] sm:$0xff] %v1524
      %1529 = vst [vmem:[#allocation2 + $0x30] sm:$0xff] %v1525
      %1530 = vst [vmem:[#allocation2 + $0x38] sm:$0x1f] %v1526
      %s1531 = scalar_lea.vmem [#allocation2], 32
      %v1532 = vld [vmem:[%s1531] ss:$2 sm:$0xff]
      %s1533 = scalar_lea.vmem [#allocation2], 48
      %v1534 = vld [vmem:[%s1533] ss:$2 sm:$0x3f]
      %s1535 = scalar_lea.vmem [#allocation2], 33
      %v1536 = vld [vmem:[%s1535] ss:$2 sm:$0xff]
      %s1537 = scalar_lea.vmem [#allocation2], 49
      %v1538 = vld [vmem:[%s1537] ss:$2 sm:$0x3f]
      %v1539 = vmax.f32 %v1532, %v1536
      %v1540 = vmax.f32 %v1534, %v1538
      %v1543 = vrot.slane %v1539, 1
      %v1544 = vrot.slane %v1540, 1
      %v1545 = vsel %vm650, %v1543, %v1544
      %v1548 = vrot.slane %v1539, 2
      %v1549 = vrot.slane %v1540, 2
      %v1550 = vsel %vm662, %v1548, %v1549
      %1553 = vmatprep.subr.mxu0 0.0
      %1554 = vmatpush1.msra.mxu0 %v339
      %1555 = vmatprep.subr.mxu0 0.0
      %1556 = vmatpush1.msra.mxu0 %v340
      %1557 = vmatprep.subr.mxu0 0.0
      %1558 = vmatpush1.msra.mxu0 %v341
      %1559 = vmatprep.subr.mxu0 0.0
      %1560 = vmatpush1.msra.mxu0 %v342
      %1561 = vmatprep.subr.mxu0 0.0
      %1562 = vmatpush1.msra.mxu0 %v343
      %1563 = vmatprep.subr.mxu0 0.0
      %1564 = vmatpush1.msra.mxu0 %v344
      %1565 = vmatprep.subr.mxu0 0.0
      %1566 = vmatpush1.msra.mxu0 %v345
      %1567 = vmatprep.subr.mxu0 0.0
      %1568 = vmatpush1.msra.mxu0 %v346
      %1569 = vmatprep.subr.mxu0 0.0
      %1570 = vmatpush1.msra.mxu0 %v347
      %1571 = vmatprep.subr.mxu0 0.0
      %1572 = vmatpush1.msra.mxu0 %v348
      %1573 = vmatprep.subr.mxu0 0.0
      %1574 = vmatpush1.msra.mxu0 %v349
      %1575 = vmatprep.subr.mxu0 0.0
      %1576 = vmatpush1.msra.mxu0 %v350
      %1577 = vmatprep.subr.mxu0 0.0
      %1578 = vmatpush1.msra.mxu0 %v351
      %1579 = vmatprep.subr.mxu0 0.0
      %1580 = vmatpush1.msra.mxu0 %v352
      %1581 = vmatprep.subr.mxu0 0.0
      %1582 = vmatpush1.msra.mxu0 %v353
      %1583 = vmatprep.subr.mxu0 0.0
      %1584 = vmatpush1.msra.mxu0 %v354
      %1585 = vmatprep.subr.mxu0 0.0
      %1586 = vmatpush1.msra.mxu0 %v355
      %1587 = vmatprep.subr.mxu0 0.0
      %1588 = vmatpush1.msra.mxu0 %v356
      %1589 = vmatprep.subr.mxu0 0.0
      %1590 = vmatpush1.msra.mxu0 %v357
      %1591 = vmatprep.subr.mxu0 0.0
      %1592 = vmatpush1.msra.mxu0 %v358
      %1593 = vmatprep.subr.mxu0 0.0
      %1594 = vmatpush1.msra.mxu0 %v359
      %1595 = vmatprep.subr.mxu0 0.0
      %1596 = vmatpush1.msra.mxu0 %v360
      %1597 = vmatprep.subr.mxu0 0.0
      %1598 = vmatpush1.msra.mxu0 %v361
      %1599 = vmatprep.subr.mxu0 0.0
      %1600 = vmatpush1.msra.mxu0 %v362
      %1601 = vmatprep.subr.mxu0 0.0
      %1602 = vmatpush1.msra.mxu0 %v363
      %1603 = vmatprep.subr.mxu0 0.0
      %1604 = vmatpush1.msra.mxu0 %v364
      %1605 = vmatprep.subr.mxu0 0.0
      %1606 = vmatpush1.msra.mxu0 %v365
      %1607 = vmatprep.subr.mxu0 0.0
      %1608 = vmatpush1.msra.mxu0 %v366
      %1609 = vmatprep.subr.mxu0 0.0
      %1610 = vmatpush1.msra.mxu0 %v367
      %1611 = vmatprep.subr.mxu0 0.0
      %1612 = vmatpush1.msra.mxu0 %v368
      %1613 = vmatprep.subr.mxu0 0.0
      %1614 = vmatpush1.msra.mxu0 %v369
      %1615 = vmatprep.subr.mxu0 0.0
      %1616 = vmatpush1.msra.mxu0 %v370
      %1617 = vmatprep.mubr.f32.mxu0 %v1545
      %1618 = vmatmul.mubr.f32.gmra.mrb[0].mxu0 %v1539
      %v1619 = vpop.f32.mrb[0].mxu0
      %v1620 = vadd.f32 %v899, %v1619
      %v1621 = vpop.f32.mrb[0].mxu0
      %1622 = vmatprep.mubr.f32.mxu0 %v1544
      %1623 = vmatmul.mubr.f32.gmra.mrb[0].mxu0 %v1540
      %v1624 = vpop.f32.mrb[0].mxu0
      %v1625 = vadd.f32 %v899, %v1624
      %v1626 = vpop.f32.mrb[0].mxu0
      %1627 = vdwg.mxu0
      %1628 = vmatprep.subr.mxu0 0.0
      %1629 = vmatpush1.msra.mxu0 %v371
      %1630 = vmatprep.subr.mxu0 0.0
      %1631 = vmatpush1.msra.mxu0 %v372
      %1632 = vmatprep.subr.mxu0 0.0
      %1633 = vmatpush1.msra.mxu0 %v373
      %1634 = vmatprep.subr.mxu0 0.0
      %1635 = vmatpush1.msra.mxu0 %v374
      %1636 = vmatprep.subr.mxu0 0.0
      %1637 = vmatpush1.msra.mxu0 %v375
      %1638 = vmatprep.subr.mxu0 0.0
      %1639 = vmatpush1.msra.mxu0 %v376
      %1640 = vmatprep.subr.mxu0 0.0
      %1641 = vmatpush1.msra.mxu0 %v377
      %1642 = vmatprep.subr.mxu0 0.0
      %1643 = vmatpush1.msra.mxu0 %v378
      %1644 = vmatprep.subr.mxu0 0.0
      %1645 = vmatpush1.msra.mxu0 %v379
      %1646 = vmatprep.subr.mxu0 0.0
      %1647 = vmatpush1.msra.mxu0 %v380
      %1648 = vmatprep.subr.mxu0 0.0
      %1649 = vmatpush1.msra.mxu0 %v381
      %1650 = vmatprep.subr.mxu0 0.0
      %1651 = vmatpush1.msra.mxu0 %v382
      %1652 = vmatprep.subr.mxu0 0.0
      %1653 = vmatpush1.msra.mxu0 %v383
      %1654 = vmatprep.subr.mxu0 0.0
      %1655 = vmatpush1.msra.mxu0 %v384
      %1656 = vmatprep.subr.mxu0 0.0
      %1657 = vmatpush1.msra.mxu0 %v385
      %1658 = vmatprep.subr.mxu0 0.0
      %1659 = vmatpush1.msra.mxu0 %v386
      %1660 = vmatprep.subr.mxu0 0.0
      %1661 = vmatpush1.msra.mxu0 0.0
      %1662 = vmatprep.subr.mxu0 0.0
      %1663 = vmatpush1.msra.mxu0 0.0
      %1664 = vmatprep.subr.mxu0 0.0
      %1665 = vmatpush1.msra.mxu0 0.0
      %1666 = vmatprep.subr.mxu0 0.0
      %1667 = vmatpush1.msra.mxu0 0.0
      %1668 = vmatprep.subr.mxu0 0.0
      %1669 = vmatpush1.msra.mxu0 0.0
      %1670 = vmatprep.subr.mxu0 0.0
      %1671 = vmatpush1.msra.mxu0 0.0
      %1672 = vmatprep.subr.mxu0 0.0
      %1673 = vmatpush1.msra.mxu0 0.0
      %1674 = vmatprep.subr.mxu0 0.0
      %1675 = vmatpush1.msra.mxu0 0.0
      %1676 = vmatprep.subr.mxu0 0.0
      %1677 = vmatpush1.msra.mxu0 0.0
      %1678 = vmatprep.subr.mxu0 0.0
      %1679 = vmatpush1.msra.mxu0 0.0
      %1680 = vmatprep.subr.mxu0 0.0
      %1681 = vmatpush1.msra.mxu0 0.0
      %1682 = vmatprep.subr.mxu0 0.0
      %1683 = vmatpush1.msra.mxu0 0.0
      %1684 = vmatprep.subr.mxu0 0.0
      %1685 = vmatpush1.msra.mxu0 0.0
      %1686 = vmatprep.subr.mxu0 0.0
      %1687 = vmatpush1.msra.mxu0 0.0
      %1688 = vmatprep.subr.mxu0 0.0
      %1689 = vmatpush1.msra.mxu0 0.0
      %1690 = vmatprep.subr.mxu0 0.0
      %1691 = vmatpush1.msra.mxu0 0.0
      %1692 = vmatprep.mubr.f32.mxu0 0.0
      %1693 = vmatmul.mubr.f32.gmra.mrb[0].mxu0 %v1550
      %v1694 = vpop.f32.mrb[0].mxu0
      %v1695 = vadd.f32 %v1620, %v1694
      %v1696 = vpop.f32.mrb[0].mxu0
      %1697 = vmatprep.mubr.f32.mxu0 0.0
      %1698 = vmatmul.mubr.f32.gmra.mrb[0].mxu0 %v1549
      %v1699 = vpop.f32.mrb[0].mxu0
      %v1700 = vadd.f32 %v1625, %v1699
      %v1701 = vpop.f32.mrb[0].mxu0
      %1702 = vdwg.mxu0
      %vm1703 = vcmp.gt.f32.partialorder %v1695, 0.0
      %vm1704 = vcmp.gt.f32.partialorder %v1700, 0.0
      %v1705 = vmul.f32 %v1695, 1.442695
      %v1706 = vpow.pop %v1705
      %v1707 = vmul.f32 %v1700, 1.442695
      %v1708 = vpow.pop %v1707
      %v1709 = vsub.f32 %v1706, 1.0
      %v1710 = vsub.f32 %v1708, 1.0
      %v1711 = vsel %vm1703, %v1695, %v1709
      %v1712 = vsel %vm1704, %v1700, %v1710
      %s1713 = scalar_lea.vmem %s285, 16
      %1714 = vst [vmem:[%s1713] sm:$0xff] %v1711
      %1715 = vst [vmem:[%s1713 + $0x8] sm:$0xf] %v1712
      %s1716 = scalar_lea.vmem %s278, 128
      %v1717 = vld [vmem:[%s1716] sm:$0xff]
      %v1718 = vld [vmem:[%s1716 + $0x8] sm:$0xff]
      %v1719 = vld [vmem:[%s1716 + $0x10] sm:$0xff]
      %v1720 = vld [vmem:[%s1716 + $0x18] sm:$0x7f]
      %v1722 = vsel %vm398, %v1717, 0
      %v1725 = vsel %vm398, %v1718, 0
      %v1728 = vsel %vm398, %v1719, 0
      %v1731 = vsel %vm398, %v1720, 0
      %1733 = vmatprep.subr.mxu0 0.0
      %1734 = vmatpush1.msra.mxu0 %v287
      %1735 = vmatprep.subr.mxu0 0.0
      %1736 = vmatpush1.msra.mxu0 %v413
      %1737 = vmatprep.subr.mxu0 0.0
      %1738 = vmatpush1.msra.mxu0 0.0
      %1739 = vmatprep.subr.mxu0 0.0
      %1740 = vmatpush1.msra.mxu0 0.0
      %1741 = vmatprep.subr.mxu0 0.0
      %1742 = vmatpush1.msra.mxu0 0.0
      %1743 = vmatprep.subr.mxu0 0.0
      %1744 = vmatpush1.msra.mxu0 0.0
      %1745 = vmatprep.subr.mxu0 0.0
      %1746 = vmatpush1.msra.mxu0 0.0
      %1747 = vmatprep.subr.mxu0 0.0
      %1748 = vmatpush1.msra.mxu0 0.0
      %1749 = vmatprep.subr.mxu0 0.0
      %1750 = vmatpush1.msra.mxu0 0.0
      %1751 = vmatprep.subr.mxu0 0.0
      %1752 = vmatpush1.msra.mxu0 0.0
      %1753 = vmatprep.subr.mxu0 0.0
      %1754 = vmatpush1.msra.mxu0 0.0
      %1755 = vmatprep.subr.mxu0 0.0
      %1756 = vmatpush1.msra.mxu0 0.0
      %1757 = vmatprep.subr.mxu0 0.0
      %1758 = vmatpush1.msra.mxu0 0.0
      %1759 = vmatprep.subr.mxu0 0.0
      %1760 = vmatpush1.msra.mxu0 0.0
      %1761 = vmatprep.subr.mxu0 0.0
      %1762 = vmatpush1.msra.mxu0 0.0
      %1763 = vmatprep.subr.mxu0 0.0
      %1764 = vmatpush1.msra.mxu0 0.0
      %1765 = vmatprep.subr.mxu0 0.0
      %1766 = vmatpush1.msra.mxu0 0.0
      %1767 = vmatprep.subr.mxu0 0.0
      %1768 = vmatpush1.msra.mxu0 0.0
      %1769 = vmatprep.subr.mxu0 0.0
      %1770 = vmatpush1.msra.mxu0 0.0
      %1771 = vmatprep.subr.mxu0 0.0
      %1772 = vmatpush1.msra.mxu0 0.0
      %1773 = vmatprep.subr.mxu0 0.0
      %1774 = vmatpush1.msra.mxu0 0.0
      %1775 = vmatprep.subr.mxu0 0.0
      %1776 = vmatpush1.msra.mxu0 0.0
      %1777 = vmatprep.subr.mxu0 0.0
      %1778 = vmatpush1.msra.mxu0 0.0
      %1779 = vmatprep.subr.mxu0 0.0
      %1780 = vmatpush1.msra.mxu0 0.0
      %1781 = vmatprep.subr.mxu0 0.0
      %1782 = vmatpush1.msra.mxu0 0.0
      %1783 = vmatprep.subr.mxu0 0.0
      %1784 = vmatpush1.msra.mxu0 0.0
      %1785 = vmatprep.subr.mxu0 0.0
      %1786 = vmatpush1.msra.mxu0 0.0
      %1787 = vmatprep.subr.mxu0 0.0
      %1788 = vmatpush1.msra.mxu0 0.0
      %1789 = vmatprep.subr.mxu0 0.0
      %1790 = vmatpush1.msra.mxu0 0.0
      %1791 = vmatprep.subr.mxu0 0.0
      %1792 = vmatpush1.msra.mxu0 0.0
      %1793 = vmatprep.subr.mxu0 0.0
      %1794 = vmatpush1.msra.mxu0 0.0
      %1795 = vmatprep.subr.mxu0 0.0
      %1796 = vmatpush1.msra.mxu0 0.0
      %1797 = vmatprep.mubr.f32.mxu0 0.0
      %1798 = vmatmul.mubr.f32.gmra.mrb[0].mxu0 %v1722
      %v1799 = vpop.f32.mrb[0].mxu0
      %v1800 = vadd.f32 %v396, %v1799
      %v1801 = vpop.f32.mrb[0].mxu0
      %1802 = vmatprep.mubr.f32.mxu0 0.0
      %1803 = vmatmul.mubr.f32.gmra.mrb[0].mxu0 %v1725
      %v1804 = vpop.f32.mrb[0].mxu0
      %v1805 = vadd.f32 %v396, %v1804
      %v1806 = vpop.f32.mrb[0].mxu0
      %1807 = vmatprep.mubr.f32.mxu0 0.0
      %1808 = vmatmul.mubr.f32.gmra.mrb[0].mxu0 %v1728
      %v1809 = vpop.f32.mrb[0].mxu0
      %v1810 = vadd.f32 %v396, %v1809
      %v1811 = vpop.f32.mrb[0].mxu0
      %1812 = vmatprep.mubr.f32.mxu0 0.0
      %1813 = vmatmul.mubr.f32.gmra.mrb[0].mxu0 %v1731
      %v1814 = vpop.f32.mrb[0].mxu0
      %v1815 = vadd.f32 %v396, %v1814
      %v1816 = vpop.f32.mrb[0].mxu0
      %1817 = vdwg.mxu0
      %s1818 = scalar_lea.vmem %s278, 160
      %v1819 = vld [vmem:[%s1818] sm:$0xff]
      %v1820 = vld [vmem:[%s1818 + $0x8] sm:$0xff]
      %v1821 = vld [vmem:[%s1818 + $0x10] sm:$0xff]
      %v1822 = vld [vmem:[%s1818 + $0x18] sm:$0x7f]
      %v1824 = vsel %vm398, %v1819, 0
      %v1827 = vsel %vm398, %v1820, 0
      %v1830 = vsel %vm398, %v1821, 0
      %v1833 = vsel %vm398, %v1822, 0
      %1835 = vmatprep.subr.mxu0 0.0
      %1836 = vmatpush1.msra.mxu0 %v287
      %1837 = vmatprep.subr.mxu0 0.0
      %1838 = vmatpush1.msra.mxu0 %v413
      %1839 = vmatprep.subr.mxu0 0.0
      %1840 = vmatpush1.msra.mxu0 0.0
      %1841 = vmatprep.subr.mxu0 0.0
      %1842 = vmatpush1.msra.mxu0 0.0
      %1843 = vmatprep.subr.mxu0 0.0
      %1844 = vmatpush1.msra.mxu0 0.0
      %1845 = vmatprep.subr.mxu0 0.0
      %1846 = vmatpush1.msra.mxu0 0.0
      %1847 = vmatprep.subr.mxu0 0.0
      %1848 = vmatpush1.msra.mxu0 0.0
      %1849 = vmatprep.subr.mxu0 0.0
      %1850 = vmatpush1.msra.mxu0 0.0
      %1851 = vmatprep.subr.mxu0 0.0
      %1852 = vmatpush1.msra.mxu0 0.0
      %1853 = vmatprep.subr.mxu0 0.0
      %1854 = vmatpush1.msra.mxu0 0.0
      %1855 = vmatprep.subr.mxu0 0.0
      %1856 = vmatpush1.msra.mxu0 0.0
      %1857 = vmatprep.subr.mxu0 0.0
      %1858 = vmatpush1.msra.mxu0 0.0
      %1859 = vmatprep.subr.mxu0 0.0
      %1860 = vmatpush1.msra.mxu0 0.0
      %1861 = vmatprep.subr.mxu0 0.0
      %1862 = vmatpush1.msra.mxu0 0.0
      %1863 = vmatprep.subr.mxu0 0.0
      %1864 = vmatpush1.msra.mxu0 0.0
      %1865 = vmatprep.subr.mxu0 0.0
      %1866 = vmatpush1.msra.mxu0 0.0
      %1867 = vmatprep.subr.mxu0 0.0
      %1868 = vmatpush1.msra.mxu0 0.0
      %1869 = vmatprep.subr.mxu0 0.0
      %1870 = vmatpush1.msra.mxu0 0.0
      %1871 = vmatprep.subr.mxu0 0.0
      %1872 = vmatpush1.msra.mxu0 0.0
      %1873 = vmatprep.subr.mxu0 0.0
      %1874 = vmatpush1.msra.mxu0 0.0
      %1875 = vmatprep.subr.mxu0 0.0
      %1876 = vmatpush1.msra.mxu0 0.0
      %1877 = vmatprep.subr.mxu0 0.0
      %1878 = vmatpush1.msra.mxu0 0.0
      %1879 = vmatprep.subr.mxu0 0.0
      %1880 = vmatpush1.msra.mxu0 0.0
      %1881 = vmatprep.subr.mxu0 0.0
      %1882 = vmatpush1.msra.mxu0 0.0
      %1883 = vmatprep.subr.mxu0 0.0
      %1884 = vmatpush1.msra.mxu0 0.0
      %1885 = vmatprep.subr.mxu0 0.0
      %1886 = vmatpush1.msra.mxu0 0.0
      %1887 = vmatprep.subr.mxu0 0.0
      %1888 = vmatpush1.msra.mxu0 0.0
      %1889 = vmatprep.subr.mxu0 0.0
      %1890 = vmatpush1.msra.mxu0 0.0
      %1891 = vmatprep.subr.mxu0 0.0
      %1892 = vmatpush1.msra.mxu0 0.0
      %1893 = vmatprep.subr.mxu0 0.0
      %1894 = vmatpush1.msra.mxu0 0.0
      %1895 = vmatprep.subr.mxu0 0.0
      %1896 = vmatpush1.msra.mxu0 0.0
      %1897 = vmatprep.subr.mxu0 0.0
      %1898 = vmatpush1.msra.mxu0 0.0
      %1899 = vmatprep.mubr.f32.mxu0 0.0
      %1900 = vmatmul.mubr.f32.gmra.mrb[0].mxu0 %v1824
      %v1901 = vpop.f32.mrb[0].mxu0
      %v1902 = vadd.f32 %v396, %v1901
      %v1903 = vpop.f32.mrb[0].mxu0
      %1904 = vmatprep.mubr.f32.mxu0 0.0
      %1905 = vmatmul.mubr.f32.gmra.mrb[0].mxu0 %v1827
      %v1906 = vpop.f32.mrb[0].mxu0
      %v1907 = vadd.f32 %v396, %v1906
      %v1908 = vpop.f32.mrb[0].mxu0
      %1909 = vmatprep.mubr.f32.mxu0 0.0
      %1910 = vmatmul.mubr.f32.gmra.mrb[0].mxu0 %v1830
      %v1911 = vpop.f32.mrb[0].mxu0
      %v1912 = vadd.f32 %v396, %v1911
      %v1913 = vpop.f32.mrb[0].mxu0
      %1914 = vmatprep.mubr.f32.mxu0 0.0
      %1915 = vmatmul.mubr.f32.gmra.mrb[0].mxu0 %v1833
      %v1916 = vpop.f32.mrb[0].mxu0
      %v1917 = vadd.f32 %v396, %v1916
      %v1918 = vpop.f32.mrb[0].mxu0
      %1919 = vdwg.mxu0
      %vm1920 = vcmp.gt.f32.partialorder %v1800, 0.0
      %vm1921 = vcmp.gt.f32.partialorder %v1805, 0.0
      %vm1922 = vcmp.gt.f32.partialorder %v1810, 0.0
      %vm1923 = vcmp.gt.f32.partialorder %v1815, 0.0
      %v1924 = vmul.f32 %v1800, 1.442695
      %v1925 = vpow.pop %v1924
      %v1926 = vmul.f32 %v1805, 1.442695
      %v1927 = vpow.pop %v1926
      %v1928 = vmul.f32 %v1810, 1.442695
      %v1929 = vpow.pop %v1928
      %v1930 = vmul.f32 %v1815, 1.442695
      %v1931 = vpow.pop %v1930
      %v1932 = vsub.f32 %v1925, 1.0
      %v1933 = vsub.f32 %v1927, 1.0
      %v1934 = vsub.f32 %v1929, 1.0
      %v1935 = vsub.f32 %v1931, 1.0
      %v1936 = vsel %vm1920, %v1800, %v1932
      %v1937 = vsel %vm1921, %v1805, %v1933
      %v1938 = vsel %vm1922, %v1810, %v1934
      %v1939 = vsel %vm1923, %v1815, %v1935
      %vm1940 = vcmp.gt.f32.partialorder %v1902, 0.0
      %vm1941 = vcmp.gt.f32.partialorder %v1907, 0.0
      %vm1942 = vcmp.gt.f32.partialorder %v1912, 0.0
      %vm1943 = vcmp.gt.f32.partialorder %v1917, 0.0
      %v1944 = vmul.f32 %v1902, 1.442695
      %v1945 = vpow.pop %v1944
      %v1946 = vmul.f32 %v1907, 1.442695
      %v1947 = vpow.pop %v1946
      %v1948 = vmul.f32 %v1912, 1.442695
      %v1949 = vpow.pop %v1948
      %v1950 = vmul.f32 %v1917, 1.442695
      %v1951 = vpow.pop %v1950
      %v1952 = vsub.f32 %v1945, 1.0
      %v1953 = vsub.f32 %v1947, 1.0
      %v1954 = vsub.f32 %v1949, 1.0
      %v1955 = vsub.f32 %v1951, 1.0
      %v1956 = vsel %vm1940, %v1902, %v1952
      %v1957 = vsel %vm1941, %v1907, %v1953
      %v1958 = vsel %vm1942, %v1912, %v1954
      %v1959 = vsel %vm1943, %v1917, %v1955
      %v1960 = vmax.f32 %v1936, %v1956
      %v1961 = vmax.f32 %v1937, %v1957
      %v1962 = vmax.f32 %v1938, %v1958
      %v1963 = vmax.f32 %v1939, %v1959
      %v1968 = vrot.slane %v1960, 1
      %v1969 = vrot.slane %v1961, 1
      %v1970 = vsel %vm650, %v1968, %v1969
      %v1971 = vrot.slane %v1962, 1
      %v1972 = vsel %vm650, %v1969, %v1971
      %v1973 = vrot.slane %v1963, 1
      %v1974 = vsel %vm650, %v1971, %v1973
      %v1979 = vrot.slane %v1960, 2
      %v1980 = vrot.slane %v1961, 2
      %v1981 = vsel %vm662, %v1979, %v1980
      %v1982 = vrot.slane %v1962, 2
      %v1983 = vsel %vm662, %v1980, %v1982
      %v1984 = vrot.slane %v1963, 2
      %v1985 = vsel %vm662, %v1982, %v1984
      %1990 = vmatprep.subr.mxu0 0.0
      %1991 = vmatpush1.msra.mxu0 %v290
      %1992 = vmatprep.subr.mxu0 0.0
      %1993 = vmatpush1.msra.mxu0 %v291
      %1994 = vmatprep.subr.mxu0 0.0
      %1995 = vmatpush1.msra.mxu0 %v292
      %1996 = vmatprep.subr.mxu0 0.0
      %1997 = vmatpush1.msra.mxu0 %v293
      %1998 = vmatprep.subr.mxu0 0.0
      %1999 = vmatpush1.msra.mxu0 %v294
      %2000 = vmatprep.subr.mxu0 0.0
      %2001 = vmatpush1.msra.mxu0 %v295
      %2002 = vmatprep.subr.mxu0 0.0
      %2003 = vmatpush1.msra.mxu0 %v296
      %2004 = vmatprep.subr.mxu0 0.0
      %2005 = vmatpush1.msra.mxu0 %v297
      %2006 = vmatprep.subr.mxu0 0.0
      %2007 = vmatpush1.msra.mxu0 %v298
      %2008 = vmatprep.subr.mxu0 0.0
      %2009 = vmatpush1.msra.mxu0 %v299
      %2010 = vmatprep.subr.mxu0 0.0
      %2011 = vmatpush1.msra.mxu0 %v300
      %2012 = vmatprep.subr.mxu0 0.0
      %2013 = vmatpush1.msra.mxu0 %v301
      %2014 = vmatprep.subr.mxu0 0.0
      %2015 = vmatpush1.msra.mxu0 %v302
      %2016 = vmatprep.subr.mxu0 0.0
      %2017 = vmatpush1.msra.mxu0 %v303
      %2018 = vmatprep.subr.mxu0 0.0
      %2019 = vmatpush1.msra.mxu0 %v304
      %2020 = vmatprep.subr.mxu0 0.0
      %2021 = vmatpush1.msra.mxu0 %v305
      %2022 = vmatprep.subr.mxu0 0.0
      %2023 = vmatpush1.msra.mxu0 %v306
      %2024 = vmatprep.subr.mxu0 0.0
      %2025 = vmatpush1.msra.mxu0 %v307
      %2026 = vmatprep.subr.mxu0 0.0
      %2027 = vmatpush1.msra.mxu0 %v308
      %2028 = vmatprep.subr.mxu0 0.0
      %2029 = vmatpush1.msra.mxu0 %v309
      %2030 = vmatprep.subr.mxu0 0.0
      %2031 = vmatpush1.msra.mxu0 %v310
      %2032 = vmatprep.subr.mxu0 0.0
      %2033 = vmatpush1.msra.mxu0 %v311
      %2034 = vmatprep.subr.mxu0 0.0
      %2035 = vmatpush1.msra.mxu0 %v312
      %2036 = vmatprep.subr.mxu0 0.0
      %2037 = vmatpush1.msra.mxu0 %v313
      %2038 = vmatprep.subr.mxu0 0.0
      %2039 = vmatpush1.msra.mxu0 %v314
      %2040 = vmatprep.subr.mxu0 0.0
      %2041 = vmatpush1.msra.mxu0 %v315
      %2042 = vmatprep.subr.mxu0 0.0
      %2043 = vmatpush1.msra.mxu0 %v316
      %2044 = vmatprep.subr.mxu0 0.0
      %2045 = vmatpush1.msra.mxu0 %v317
      %2046 = vmatprep.subr.mxu0 0.0
      %2047 = vmatpush1.msra.mxu0 %v318
      %2048 = vmatprep.subr.mxu0 0.0
      %2049 = vmatpush1.msra.mxu0 %v319
      %2050 = vmatprep.subr.mxu0 0.0
      %2051 = vmatpush1.msra.mxu0 %v320
      %2052 = vmatprep.subr.mxu0 0.0
      %2053 = vmatpush1.msra.mxu0 %v321
      %2054 = vmatprep.mubr.f32.mxu0 %v1970
      %2055 = vmatmul.mubr.f32.gmra.mrb[0].mxu0 %v1960
      %v2056 = vpop.f32.mrb[0].mxu0
      %v2057 = vadd.f32 %v678, %v2056
      %v2058 = vpop.f32.mrb[0].mxu0
      %2059 = vmatprep.mubr.f32.mxu0 %v1972
      %2060 = vmatmul.mubr.f32.gmra.mrb[0].mxu0 %v1961
      %v2061 = vpop.f32.mrb[0].mxu0
      %v2062 = vadd.f32 %v678, %v2061
      %v2063 = vpop.f32.mrb[0].mxu0
      %2064 = vmatprep.mubr.f32.mxu0 %v1974
      %2065 = vmatmul.mubr.f32.gmra.mrb[0].mxu0 %v1962
      %v2066 = vpop.f32.mrb[0].mxu0
      %v2067 = vadd.f32 %v678, %v2066
      %v2068 = vpop.f32.mrb[0].mxu0
      %2069 = vmatprep.mubr.f32.mxu0 %v1973
      %2070 = vmatmul.mubr.f32.gmra.mrb[0].mxu0 %v1963
      %v2071 = vpop.f32.mrb[0].mxu0
      %v2072 = vadd.f32 %v678, %v2071
      %v2073 = vpop.f32.mrb[0].mxu0
      %2074 = vdwg.mxu0
      %2075 = vmatprep.subr.mxu0 0.0
      %2076 = vmatpush1.msra.mxu0 %v322
      %2077 = vmatprep.subr.mxu0 0.0
      %2078 = vmatpush1.msra.mxu0 %v323
      %2079 = vmatprep.subr.mxu0 0.0
      %2080 = vmatpush1.msra.mxu0 %v324
      %2081 = vmatprep.subr.mxu0 0.0
      %2082 = vmatpush1.msra.mxu0 %v325
      %2083 = vmatprep.subr.mxu0 0.0
      %2084 = vmatpush1.msra.mxu0 %v326
      %2085 = vmatprep.subr.mxu0 0.0
      %2086 = vmatpush1.msra.mxu0 %v327
      %2087 = vmatprep.subr.mxu0 0.0
      %2088 = vmatpush1.msra.mxu0 %v328
      %2089 = vmatprep.subr.mxu0 0.0
      %2090 = vmatpush1.msra.mxu0 %v329
      %2091 = vmatprep.subr.mxu0 0.0
      %2092 = vmatpush1.msra.mxu0 %v330
      %2093 = vmatprep.subr.mxu0 0.0
      %2094 = vmatpush1.msra.mxu0 %v331
      %2095 = vmatprep.subr.mxu0 0.0
      %2096 = vmatpush1.msra.mxu0 %v332
      %2097 = vmatprep.subr.mxu0 0.0
      %2098 = vmatpush1.msra.mxu0 %v333
      %2099 = vmatprep.subr.mxu0 0.0
      %2100 = vmatpush1.msra.mxu0 %v334
      %2101 = vmatprep.subr.mxu0 0.0
      %2102 = vmatpush1.msra.mxu0 %v335
      %2103 = vmatprep.subr.mxu0 0.0
      %2104 = vmatpush1.msra.mxu0 %v336
      %2105 = vmatprep.subr.mxu0 0.0
      %2106 = vmatpush1.msra.mxu0 %v337
      %2107 = vmatprep.subr.mxu0 0.0
      %2108 = vmatpush1.msra.mxu0 0.0
      %2109 = vmatprep.subr.mxu0 0.0
      %2110 = vmatpush1.msra.mxu0 0.0
      %2111 = vmatprep.subr.mxu0 0.0
      %2112 = vmatpush1.msra.mxu0 0.0
      %2113 = vmatprep.subr.mxu0 0.0
      %2114 = vmatpush1.msra.mxu0 0.0
      %2115 = vmatprep.subr.mxu0 0.0
      %2116 = vmatpush1.msra.mxu0 0.0
      %2117 = vmatprep.subr.mxu0 0.0
      %2118 = vmatpush1.msra.mxu0 0.0
      %2119 = vmatprep.subr.mxu0 0.0
      %2120 = vmatpush1.msra.mxu0 0.0
      %2121 = vmatprep.subr.mxu0 0.0
      %2122 = vmatpush1.msra.mxu0 0.0
      %2123 = vmatprep.subr.mxu0 0.0
      %2124 = vmatpush1.msra.mxu0 0.0
      %2125 = vmatprep.subr.mxu0 0.0
      %2126 = vmatpush1.msra.mxu0 0.0
      %2127 = vmatprep.subr.mxu0 0.0
      %2128 = vmatpush1.msra.mxu0 0.0
      %2129 = vmatprep.subr.mxu0 0.0
      %2130 = vmatpush1.msra.mxu0 0.0
      %2131 = vmatprep.subr.mxu0 0.0
      %2132 = vmatpush1.msra.mxu0 0.0
      %2133 = vmatprep.subr.mxu0 0.0
      %2134 = vmatpush1.msra.mxu0 0.0
      %2135 = vmatprep.subr.mxu0 0.0
      %2136 = vmatpush1.msra.mxu0 0.0
      %2137 = vmatprep.subr.mxu0 0.0
      %2138 = vmatpush1.msra.mxu0 0.0
      %2139 = vmatprep.mubr.f32.mxu0 0.0
      %2140 = vmatmul.mubr.f32.gmra.mrb[0].mxu0 %v1981
      %v2141 = vpop.f32.mrb[0].mxu0
      %v2142 = vadd.f32 %v2057, %v2141
      %v2143 = vpop.f32.mrb[0].mxu0
      %2144 = vmatprep.mubr.f32.mxu0 0.0
      %2145 = vmatmul.mubr.f32.gmra.mrb[0].mxu0 %v1983
      %v2146 = vpop.f32.mrb[0].mxu0
      %v2147 = vadd.f32 %v2062, %v2146
      %v2148 = vpop.f32.mrb[0].mxu0
      %2149 = vmatprep.mubr.f32.mxu0 0.0
      %2150 = vmatmul.mubr.f32.gmra.mrb[0].mxu0 %v1985
      %v2151 = vpop.f32.mrb[0].mxu0
      %v2152 = vadd.f32 %v2067, %v2151
      %v2153 = vpop.f32.mrb[0].mxu0
      %2154 = vmatprep.mubr.f32.mxu0 0.0
      %2155 = vmatmul.mubr.f32.gmra.mrb[0].mxu0 %v1984
      %v2156 = vpop.f32.mrb[0].mxu0
      %v2157 = vadd.f32 %v2072, %v2156
      %v2158 = vpop.f32.mrb[0].mxu0
      %2159 = vdwg.mxu0
      %vm2160 = vcmp.gt.f32.partialorder %v2142, 0.0
      %vm2161 = vcmp.gt.f32.partialorder %v2147, 0.0
      %vm2162 = vcmp.gt.f32.partialorder %v2152, 0.0
      %vm2163 = vcmp.gt.f32.partialorder %v2157, 0.0
      %v2164 = vmul.f32 %v2142, 1.442695
      %v2165 = vpow.pop %v2164
      %v2166 = vmul.f32 %v2147, 1.442695
      %v2167 = vpow.pop %v2166
      %v2168 = vmul.f32 %v2152, 1.442695
      %v2169 = vpow.pop %v2168
      %v2170 = vmul.f32 %v2157, 1.442695
      %v2171 = vpow.pop %v2170
      %v2172 = vsub.f32 %v2165, 1.0
      %v2173 = vsub.f32 %v2167, 1.0
      %v2174 = vsub.f32 %v2169, 1.0
      %v2175 = vsub.f32 %v2171, 1.0
      %v2176 = vsel %vm2160, %v2142, %v2172
      %v2177 = vsel %vm2161, %v2147, %v2173
      %v2178 = vsel %vm2162, %v2152, %v2174
      %v2179 = vsel %vm2163, %v2157, %v2175
      %2180 = vst [vmem:[#allocation2 + $0x40] sm:$0xff] %v2176
      %2181 = vst [vmem:[#allocation2 + $0x48] sm:$0xff] %v2177
      %2182 = vst [vmem:[#allocation2 + $0x50] sm:$0xff] %v2178
      %2183 = vst [vmem:[#allocation2 + $0x58] sm:$0x1f] %v2179
      %s2184 = scalar_lea.vmem [#allocation2], 64
      %v2185 = vld [vmem:[%s2184] ss:$2 sm:$0xff]
      %s2186 = scalar_lea.vmem [#allocation2], 80
      %v2187 = vld [vmem:[%s2186] ss:$2 sm:$0x3f]
      %s2188 = scalar_lea.vmem [#allocation2], 65
      %v2189 = vld [vmem:[%s2188] ss:$2 sm:$0xff]
      %s2190 = scalar_lea.vmem [#allocation2], 81
      %v2191 = vld [vmem:[%s2190] ss:$2 sm:$0x3f]
      %v2192 = vmax.f32 %v2185, %v2189
      %v2193 = vmax.f32 %v2187, %v2191
      %v2196 = vrot.slane %v2192, 1
      %v2197 = vrot.slane %v2193, 1
      %v2198 = vsel %vm650, %v2196, %v2197
      %v2201 = vrot.slane %v2192, 2
      %v2202 = vrot.slane %v2193, 2
      %v2203 = vsel %vm662, %v2201, %v2202
      %2206 = vmatprep.subr.mxu0 0.0
      %2207 = vmatpush1.msra.mxu0 %v339
      %2208 = vmatprep.subr.mxu0 0.0
      %2209 = vmatpush1.msra.mxu0 %v340
      %2210 = vmatprep.subr.mxu0 0.0
      %2211 = vmatpush1.msra.mxu0 %v341
      %2212 = vmatprep.subr.mxu0 0.0
      %2213 = vmatpush1.msra.mxu0 %v342
      %2214 = vmatprep.subr.mxu0 0.0
      %2215 = vmatpush1.msra.mxu0 %v343
      %2216 = vmatprep.subr.mxu0 0.0
      %2217 = vmatpush1.msra.mxu0 %v344
      %2218 = vmatprep.subr.mxu0 0.0
      %2219 = vmatpush1.msra.mxu0 %v345
      %2220 = vmatprep.subr.mxu0 0.0
      %2221 = vmatpush1.msra.mxu0 %v346
      %2222 = vmatprep.subr.mxu0 0.0
      %2223 = vmatpush1.msra.mxu0 %v347
      %2224 = vmatprep.subr.mxu0 0.0
      %2225 = vmatpush1.msra.mxu0 %v348
      %2226 = vmatprep.subr.mxu0 0.0
      %2227 = vmatpush1.msra.mxu0 %v349
      %2228 = vmatprep.subr.mxu0 0.0
      %2229 = vmatpush1.msra.mxu0 %v350
      %2230 = vmatprep.subr.mxu0 0.0
      %2231 = vmatpush1.msra.mxu0 %v351
      %2232 = vmatprep.subr.mxu0 0.0
      %2233 = vmatpush1.msra.mxu0 %v352
      %2234 = vmatprep.subr.mxu0 0.0
      %2235 = vmatpush1.msra.mxu0 %v353
      %2236 = vmatprep.subr.mxu0 0.0
      %2237 = vmatpush1.msra.mxu0 %v354
      %2238 = vmatprep.subr.mxu0 0.0
      %2239 = vmatpush1.msra.mxu0 %v355
      %2240 = vmatprep.subr.mxu0 0.0
      %2241 = vmatpush1.msra.mxu0 %v356
      %2242 = vmatprep.subr.mxu0 0.0
      %2243 = vmatpush1.msra.mxu0 %v357
      %2244 = vmatprep.subr.mxu0 0.0
      %2245 = vmatpush1.msra.mxu0 %v358
      %2246 = vmatprep.subr.mxu0 0.0
      %2247 = vmatpush1.msra.mxu0 %v359
      %2248 = vmatprep.subr.mxu0 0.0
      %2249 = vmatpush1.msra.mxu0 %v360
      %2250 = vmatprep.subr.mxu0 0.0
      %2251 = vmatpush1.msra.mxu0 %v361
      %2252 = vmatprep.subr.mxu0 0.0
      %2253 = vmatpush1.msra.mxu0 %v362
      %2254 = vmatprep.subr.mxu0 0.0
      %2255 = vmatpush1.msra.mxu0 %v363
      %2256 = vmatprep.subr.mxu0 0.0
      %2257 = vmatpush1.msra.mxu0 %v364
      %2258 = vmatprep.subr.mxu0 0.0
      %2259 = vmatpush1.msra.mxu0 %v365
      %2260 = vmatprep.subr.mxu0 0.0
      %2261 = vmatpush1.msra.mxu0 %v366
      %2262 = vmatprep.subr.mxu0 0.0
      %2263 = vmatpush1.msra.mxu0 %v367
      %2264 = vmatprep.subr.mxu0 0.0
      %2265 = vmatpush1.msra.mxu0 %v368
      %2266 = vmatprep.subr.mxu0 0.0
      %2267 = vmatpush1.msra.mxu0 %v369
      %2268 = vmatprep.subr.mxu0 0.0
      %2269 = vmatpush1.msra.mxu0 %v370
      %2270 = vmatprep.mubr.f32.mxu0 %v2198
      %2271 = vmatmul.mubr.f32.gmra.mrb[0].mxu0 %v2192
      %v2272 = vpop.f32.mrb[0].mxu0
      %v2273 = vadd.f32 %v899, %v2272
      %v2274 = vpop.f32.mrb[0].mxu0
      %2275 = vmatprep.mubr.f32.mxu0 %v2197
      %2276 = vmatmul.mubr.f32.gmra.mrb[0].mxu0 %v2193
      %v2277 = vpop.f32.mrb[0].mxu0
      %v2278 = vadd.f32 %v899, %v2277
      %v2279 = vpop.f32.mrb[0].mxu0
      %2280 = vdwg.mxu0
      %2281 = vmatprep.subr.mxu0 0.0
      %2282 = vmatpush1.msra.mxu0 %v371
      %2283 = vmatprep.subr.mxu0 0.0
      %2284 = vmatpush1.msra.mxu0 %v372
      %2285 = vmatprep.subr.mxu0 0.0
      %2286 = vmatpush1.msra.mxu0 %v373
      %2287 = vmatprep.subr.mxu0 0.0
      %2288 = vmatpush1.msra.mxu0 %v374
      %2289 = vmatprep.subr.mxu0 0.0
      %2290 = vmatpush1.msra.mxu0 %v375
      %2291 = vmatprep.subr.mxu0 0.0
      %2292 = vmatpush1.msra.mxu0 %v376
      %2293 = vmatprep.subr.mxu0 0.0
      %2294 = vmatpush1.msra.mxu0 %v377
      %2295 = vmatprep.subr.mxu0 0.0
      %2296 = vmatpush1.msra.mxu0 %v378
      %2297 = vmatprep.subr.mxu0 0.0
      %2298 = vmatpush1.msra.mxu0 %v379
      %2299 = vmatprep.subr.mxu0 0.0
      %2300 = vmatpush1.msra.mxu0 %v380
      %2301 = vmatprep.subr.mxu0 0.0
      %2302 = vmatpush1.msra.mxu0 %v381
      %2303 = vmatprep.subr.mxu0 0.0
      %2304 = vmatpush1.msra.mxu0 %v382
      %2305 = vmatprep.subr.mxu0 0.0
      %2306 = vmatpush1.msra.mxu0 %v383
      %2307 = vmatprep.subr.mxu0 0.0
      %2308 = vmatpush1.msra.mxu0 %v384
      %2309 = vmatprep.subr.mxu0 0.0
      %2310 = vmatpush1.msra.mxu0 %v385
      %2311 = vmatprep.subr.mxu0 0.0
      %2312 = vmatpush1.msra.mxu0 %v386
      %2313 = vmatprep.subr.mxu0 0.0
      %2314 = vmatpush1.msra.mxu0 0.0
      %2315 = vmatprep.subr.mxu0 0.0
      %2316 = vmatpush1.msra.mxu0 0.0
      %2317 = vmatprep.subr.mxu0 0.0
      %2318 = vmatpush1.msra.mxu0 0.0
      %2319 = vmatprep.subr.mxu0 0.0
      %2320 = vmatpush1.msra.mxu0 0.0
      %2321 = vmatprep.subr.mxu0 0.0
      %2322 = vmatpush1.msra.mxu0 0.0
      %2323 = vmatprep.subr.mxu0 0.0
      %2324 = vmatpush1.msra.mxu0 0.0
      %2325 = vmatprep.subr.mxu0 0.0
      %2326 = vmatpush1.msra.mxu0 0.0
      %2327 = vmatprep.subr.mxu0 0.0
      %2328 = vmatpush1.msra.mxu0 0.0
      %2329 = vmatprep.subr.mxu0 0.0
      %2330 = vmatpush1.msra.mxu0 0.0
      %2331 = vmatprep.subr.mxu0 0.0
      %2332 = vmatpush1.msra.mxu0 0.0
      %2333 = vmatprep.subr.mxu0 0.0
      %2334 = vmatpush1.msra.mxu0 0.0
      %2335 = vmatprep.subr.mxu0 0.0
      %2336 = vmatpush1.msra.mxu0 0.0
      %2337 = vmatprep.subr.mxu0 0.0
      %2338 = vmatpush1.msra.mxu0 0.0
      %2339 = vmatprep.subr.mxu0 0.0
      %2340 = vmatpush1.msra.mxu0 0.0
      %2341 = vmatprep.subr.mxu0 0.0
      %2342 = vmatpush1.msra.mxu0 0.0
      %2343 = vmatprep.subr.mxu0 0.0
      %2344 = vmatpush1.msra.mxu0 0.0
      %2345 = vmatprep.mubr.f32.mxu0 0.0
      %2346 = vmatmul.mubr.f32.gmra.mrb[0].mxu0 %v2203
      %v2347 = vpop.f32.mrb[0].mxu0
      %v2348 = vadd.f32 %v2273, %v2347
      %v2349 = vpop.f32.mrb[0].mxu0
      %2350 = vmatprep.mubr.f32.mxu0 0.0
      %2351 = vmatmul.mubr.f32.gmra.mrb[0].mxu0 %v2202
      %v2352 = vpop.f32.mrb[0].mxu0
      %v2353 = vadd.f32 %v2278, %v2352
      %v2354 = vpop.f32.mrb[0].mxu0
      %2355 = vdwg.mxu0
      %vm2356 = vcmp.gt.f32.partialorder %v2348, 0.0
      %vm2357 = vcmp.gt.f32.partialorder %v2353, 0.0
      %v2358 = vmul.f32 %v2348, 1.442695
      %v2359 = vpow.pop %v2358
      %v2360 = vmul.f32 %v2353, 1.442695
      %v2361 = vpow.pop %v2360
      %v2362 = vsub.f32 %v2359, 1.0
      %v2363 = vsub.f32 %v2361, 1.0
      %v2364 = vsel %vm2356, %v2348, %v2362
      %v2365 = vsel %vm2357, %v2353, %v2363
      %s2366 = scalar_lea.vmem %s285, 32
      %2367 = vst [vmem:[%s2366] sm:$0xff] %v2364
      %2368 = vst [vmem:[%s2366 + $0x8] sm:$0xf] %v2365
      %s2369 = scalar_lea.vmem %s278, 192
      %v2370 = vld [vmem:[%s2369] sm:$0xff]
      %v2371 = vld [vmem:[%s2369 + $0x8] sm:$0xff]
      %v2372 = vld [vmem:[%s2369 + $0x10] sm:$0xff]
      %v2373 = vld [vmem:[%s2369 + $0x18] sm:$0x7f]
      %v2375 = vsel %vm398, %v2370, 0
      %v2378 = vsel %vm398, %v2371, 0
      %v2381 = vsel %vm398, %v2372, 0
      %v2384 = vsel %vm398, %v2373, 0
      %2386 = vmatprep.subr.mxu0 0.0
      %2387 = vmatpush1.msra.mxu0 %v287
      %2388 = vmatprep.subr.mxu0 0.0
      %2389 = vmatpush1.msra.mxu0 %v413
      %2390 = vmatprep.subr.mxu0 0.0
      %2391 = vmatpush1.msra.mxu0 0.0
      %2392 = vmatprep.subr.mxu0 0.0
      %2393 = vmatpush1.msra.mxu0 0.0
      %2394 = vmatprep.subr.mxu0 0.0
      %2395 = vmatpush1.msra.mxu0 0.0
      %2396 = vmatprep.subr.mxu0 0.0
      %2397 = vmatpush1.msra.mxu0 0.0
      %2398 = vmatprep.subr.mxu0 0.0
      %2399 = vmatpush1.msra.mxu0 0.0
      %2400 = vmatprep.subr.mxu0 0.0
      %2401 = vmatpush1.msra.mxu0 0.0
      %2402 = vmatprep.subr.mxu0 0.0
      %2403 = vmatpush1.msra.mxu0 0.0
      %2404 = vmatprep.subr.mxu0 0.0
      %2405 = vmatpush1.msra.mxu0 0.0
      %2406 = vmatprep.subr.mxu0 0.0
      %2407 = vmatpush1.msra.mxu0 0.0
      %2408 = vmatprep.subr.mxu0 0.0
      %2409 = vmatpush1.msra.mxu0 0.0
      %2410 = vmatprep.subr.mxu0 0.0
      %2411 = vmatpush1.msra.mxu0 0.0
      %2412 = vmatprep.subr.mxu0 0.0
      %2413 = vmatpush1.msra.mxu0 0.0
      %2414 = vmatprep.subr.mxu0 0.0
      %2415 = vmatpush1.msra.mxu0 0.0
      %2416 = vmatprep.subr.mxu0 0.0
      %2417 = vmatpush1.msra.mxu0 0.0
      %2418 = vmatprep.subr.mxu0 0.0
      %2419 = vmatpush1.msra.mxu0 0.0
      %2420 = vmatprep.subr.mxu0 0.0
      %2421 = vmatpush1.msra.mxu0 0.0
      %2422 = vmatprep.subr.mxu0 0.0
      %2423 = vmatpush1.msra.mxu0 0.0
      %2424 = vmatprep.subr.mxu0 0.0
      %2425 = vmatpush1.msra.mxu0 0.0
      %2426 = vmatprep.subr.mxu0 0.0
      %2427 = vmatpush1.msra.mxu0 0.0
      %2428 = vmatprep.subr.mxu0 0.0
      %2429 = vmatpush1.msra.mxu0 0.0
      %2430 = vmatprep.subr.mxu0 0.0
      %2431 = vmatpush1.msra.mxu0 0.0
      %2432 = vmatprep.subr.mxu0 0.0
      %2433 = vmatpush1.msra.mxu0 0.0
      %2434 = vmatprep.subr.mxu0 0.0
      %2435 = vmatpush1.msra.mxu0 0.0
      %2436 = vmatprep.subr.mxu0 0.0
      %2437 = vmatpush1.msra.mxu0 0.0
      %2438 = vmatprep.subr.mxu0 0.0
      %2439 = vmatpush1.msra.mxu0 0.0
      %2440 = vmatprep.subr.mxu0 0.0
      %2441 = vmatpush1.msra.mxu0 0.0
      %2442 = vmatprep.subr.mxu0 0.0
      %2443 = vmatpush1.msra.mxu0 0.0
      %2444 = vmatprep.subr.mxu0 0.0
      %2445 = vmatpush1.msra.mxu0 0.0
      %2446 = vmatprep.subr.mxu0 0.0
      %2447 = vmatpush1.msra.mxu0 0.0
      %2448 = vmatprep.subr.mxu0 0.0
      %2449 = vmatpush1.msra.mxu0 0.0
      %2450 = vmatprep.mubr.f32.mxu0 0.0
      %2451 = vmatmul.mubr.f32.gmra.mrb[0].mxu0 %v2375
      %v2452 = vpop.f32.mrb[0].mxu0
      %v2453 = vadd.f32 %v396, %v2452
      %v2454 = vpop.f32.mrb[0].mxu0
      %2455 = vmatprep.mubr.f32.mxu0 0.0
      %2456 = vmatmul.mubr.f32.gmra.mrb[0].mxu0 %v2378
      %v2457 = vpop.f32.mrb[0].mxu0
      %v2458 = vadd.f32 %v396, %v2457
      %v2459 = vpop.f32.mrb[0].mxu0
      %2460 = vmatprep.mubr.f32.mxu0 0.0
      %2461 = vmatmul.mubr.f32.gmra.mrb[0].mxu0 %v2381
      %v2462 = vpop.f32.mrb[0].mxu0
      %v2463 = vadd.f32 %v396, %v2462
      %v2464 = vpop.f32.mrb[0].mxu0
      %2465 = vmatprep.mubr.f32.mxu0 0.0
      %2466 = vmatmul.mubr.f32.gmra.mrb[0].mxu0 %v2384
      %v2467 = vpop.f32.mrb[0].mxu0
      %v2468 = vadd.f32 %v396, %v2467
      %v2469 = vpop.f32.mrb[0].mxu0
      %2470 = vdwg.mxu0
      %s2471 = scalar_lea.vmem %s278, 224
      %v2472 = vld [vmem:[%s2471] sm:$0xff]
      %v2473 = vld [vmem:[%s2471 + $0x8] sm:$0xff]
      %v2474 = vld [vmem:[%s2471 + $0x10] sm:$0xff]
      %v2475 = vld [vmem:[%s2471 + $0x18] sm:$0x7f]
      %v2477 = vsel %vm398, %v2472, 0
      %v2480 = vsel %vm398, %v2473, 0
      %v2483 = vsel %vm398, %v2474, 0
      %v2486 = vsel %vm398, %v2475, 0
      %2488 = vmatprep.subr.mxu0 0.0
      %2489 = vmatpush1.msra.mxu0 %v287
      %2490 = vmatprep.subr.mxu0 0.0
      %2491 = vmatpush1.msra.mxu0 %v413
      %2492 = vmatprep.subr.mxu0 0.0
      %2493 = vmatpush1.msra.mxu0 0.0
      %2494 = vmatprep.subr.mxu0 0.0
      %2495 = vmatpush1.msra.mxu0 0.0
      %2496 = vmatprep.subr.mxu0 0.0
      %2497 = vmatpush1.msra.mxu0 0.0
      %2498 = vmatprep.subr.mxu0 0.0
      %2499 = vmatpush1.msra.mxu0 0.0
      %2500 = vmatprep.subr.mxu0 0.0
      %2501 = vmatpush1.msra.mxu0 0.0
      %2502 = vmatprep.subr.mxu0 0.0
      %2503 = vmatpush1.msra.mxu0 0.0
      %2504 = vmatprep.subr.mxu0 0.0
      %2505 = vmatpush1.msra.mxu0 0.0
      %2506 = vmatprep.subr.mxu0 0.0
      %2507 = vmatpush1.msra.mxu0 0.0
      %2508 = vmatprep.subr.mxu0 0.0
      %2509 = vmatpush1.msra.mxu0 0.0
      %2510 = vmatprep.subr.mxu0 0.0
      %2511 = vmatpush1.msra.mxu0 0.0
      %2512 = vmatprep.subr.mxu0 0.0
      %2513 = vmatpush1.msra.mxu0 0.0
      %2514 = vmatprep.subr.mxu0 0.0
      %2515 = vmatpush1.msra.mxu0 0.0
      %2516 = vmatprep.subr.mxu0 0.0
      %2517 = vmatpush1.msra.mxu0 0.0
      %2518 = vmatprep.subr.mxu0 0.0
      %2519 = vmatpush1.msra.mxu0 0.0
      %2520 = vmatprep.subr.mxu0 0.0
      %2521 = vmatpush1.msra.mxu0 0.0
      %2522 = vmatprep.subr.mxu0 0.0
      %2523 = vmatpush1.msra.mxu0 0.0
      %2524 = vmatprep.subr.mxu0 0.0
      %2525 = vmatpush1.msra.mxu0 0.0
      %2526 = vmatprep.subr.mxu0 0.0
      %2527 = vmatpush1.msra.mxu0 0.0
      %2528 = vmatprep.subr.mxu0 0.0
      %2529 = vmatpush1.msra.mxu0 0.0
      %2530 = vmatprep.subr.mxu0 0.0
      %2531 = vmatpush1.msra.mxu0 0.0
      %2532 = vmatprep.subr.mxu0 0.0
      %2533 = vmatpush1.msra.mxu0 0.0
      %2534 = vmatprep.subr.mxu0 0.0
      %2535 = vmatpush1.msra.mxu0 0.0
      %2536 = vmatprep.subr.mxu0 0.0
      %2537 = vmatpush1.msra.mxu0 0.0
      %2538 = vmatprep.subr.mxu0 0.0
      %2539 = vmatpush1.msra.mxu0 0.0
      %2540 = vmatprep.subr.mxu0 0.0
      %2541 = vmatpush1.msra.mxu0 0.0
      %2542 = vmatprep.subr.mxu0 0.0
      %2543 = vmatpush1.msra.mxu0 0.0
      %2544 = vmatprep.subr.mxu0 0.0
      %2545 = vmatpush1.msra.mxu0 0.0
      %2546 = vmatprep.subr.mxu0 0.0
      %2547 = vmatpush1.msra.mxu0 0.0
      %2548 = vmatprep.subr.mxu0 0.0
      %2549 = vmatpush1.msra.mxu0 0.0
      %2550 = vmatprep.subr.mxu0 0.0
      %2551 = vmatpush1.msra.mxu0 0.0
      %2552 = vmatprep.mubr.f32.mxu0 0.0
      %2553 = vmatmul.mubr.f32.gmra.mrb[0].mxu0 %v2477
      %v2554 = vpop.f32.mrb[0].mxu0
      %v2555 = vadd.f32 %v396, %v2554
      %v2556 = vpop.f32.mrb[0].mxu0
      %2557 = vmatprep.mubr.f32.mxu0 0.0
      %2558 = vmatmul.mubr.f32.gmra.mrb[0].mxu0 %v2480
      %v2559 = vpop.f32.mrb[0].mxu0
      %v2560 = vadd.f32 %v396, %v2559
      %v2561 = vpop.f32.mrb[0].mxu0
      %2562 = vmatprep.mubr.f32.mxu0 0.0
      %2563 = vmatmul.mubr.f32.gmra.mrb[0].mxu0 %v2483
      %v2564 = vpop.f32.mrb[0].mxu0
      %v2565 = vadd.f32 %v396, %v2564
      %v2566 = vpop.f32.mrb[0].mxu0
      %2567 = vmatprep.mubr.f32.mxu0 0.0
      %2568 = vmatmul.mubr.f32.gmra.mrb[0].mxu0 %v2486
      %v2569 = vpop.f32.mrb[0].mxu0
      %v2570 = vadd.f32 %v396, %v2569
      %v2571 = vpop.f32.mrb[0].mxu0
      %2572 = vdwg.mxu0
      %vm2573 = vcmp.gt.f32.partialorder %v2453, 0.0
      %vm2574 = vcmp.gt.f32.partialorder %v2458, 0.0
      %vm2575 = vcmp.gt.f32.partialorder %v2463, 0.0
      %vm2576 = vcmp.gt.f32.partialorder %v2468, 0.0
      %v2577 = vmul.f32 %v2453, 1.442695
      %v2578 = vpow.pop %v2577
      %v2579 = vmul.f32 %v2458, 1.442695
      %v2580 = vpow.pop %v2579
      %v2581 = vmul.f32 %v2463, 1.442695
      %v2582 = vpow.pop %v2581
      %v2583 = vmul.f32 %v2468, 1.442695
      %v2584 = vpow.pop %v2583
      %v2585 = vsub.f32 %v2578, 1.0
      %v2586 = vsub.f32 %v2580, 1.0
      %v2587 = vsub.f32 %v2582, 1.0
      %v2588 = vsub.f32 %v2584, 1.0
      %v2589 = vsel %vm2573, %v2453, %v2585
      %v2590 = vsel %vm2574, %v2458, %v2586
      %v2591 = vsel %vm2575, %v2463, %v2587
      %v2592 = vsel %vm2576, %v2468, %v2588
      %vm2593 = vcmp.gt.f32.partialorder %v2555, 0.0
      %vm2594 = vcmp.gt.f32.partialorder %v2560, 0.0
      %vm2595 = vcmp.gt.f32.partialorder %v2565, 0.0
      %vm2596 = vcmp.gt.f32.partialorder %v2570, 0.0
      %v2597 = vmul.f32 %v2555, 1.442695
      %v2598 = vpow.pop %v2597
      %v2599 = vmul.f32 %v2560, 1.442695
      %v2600 = vpow.pop %v2599
      %v2601 = vmul.f32 %v2565, 1.442695
      %v2602 = vpow.pop %v2601
      %v2603 = vmul.f32 %v2570, 1.442695
      %v2604 = vpow.pop %v2603
      %v2605 = vsub.f32 %v2598, 1.0
      %v2606 = vsub.f32 %v2600, 1.0
      %v2607 = vsub.f32 %v2602, 1.0
      %v2608 = vsub.f32 %v2604, 1.0
      %v2609 = vsel %vm2593, %v2555, %v2605
      %v2610 = vsel %vm2594, %v2560, %v2606
      %v2611 = vsel %vm2595, %v2565, %v2607
      %v2612 = vsel %vm2596, %v2570, %v2608
      %v2613 = vmax.f32 %v2589, %v2609
      %v2614 = vmax.f32 %v2590, %v2610
      %v2615 = vmax.f32 %v2591, %v2611
      %v2616 = vmax.f32 %v2592, %v2612
      %v2621 = vrot.slane %v2613, 1
      %v2622 = vrot.slane %v2614, 1
      %v2623 = vsel %vm650, %v2621, %v2622
      %v2624 = vrot.slane %v2615, 1
      %v2625 = vsel %vm650, %v2622, %v2624
      %v2626 = vrot.slane %v2616, 1
      %v2627 = vsel %vm650, %v2624, %v2626
      %v2632 = vrot.slane %v2613, 2
      %v2633 = vrot.slane %v2614, 2
      %v2634 = vsel %vm662, %v2632, %v2633
      %v2635 = vrot.slane %v2615, 2
      %v2636 = vsel %vm662, %v2633, %v2635
      %v2637 = vrot.slane %v2616, 2
      %v2638 = vsel %vm662, %v2635, %v2637
      %2643 = vmatprep.subr.mxu0 0.0
      %2644 = vmatpush1.msra.mxu0 %v290
      %2645 = vmatprep.subr.mxu0 0.0
      %2646 = vmatpush1.msra.mxu0 %v291
      %2647 = vmatprep.subr.mxu0 0.0
      %2648 = vmatpush1.msra.mxu0 %v292
      %2649 = vmatprep.subr.mxu0 0.0
      %2650 = vmatpush1.msra.mxu0 %v293
      %2651 = vmatprep.subr.mxu0 0.0
      %2652 = vmatpush1.msra.mxu0 %v294
      %2653 = vmatprep.subr.mxu0 0.0
      %2654 = vmatpush1.msra.mxu0 %v295
      %2655 = vmatprep.subr.mxu0 0.0
      %2656 = vmatpush1.msra.mxu0 %v296
      %2657 = vmatprep.subr.mxu0 0.0
      %2658 = vmatpush1.msra.mxu0 %v297
      %2659 = vmatprep.subr.mxu0 0.0
      %2660 = vmatpush1.msra.mxu0 %v298
      %2661 = vmatprep.subr.mxu0 0.0
      %2662 = vmatpush1.msra.mxu0 %v299
      %2663 = vmatprep.subr.mxu0 0.0
      %2664 = vmatpush1.msra.mxu0 %v300
      %2665 = vmatprep.subr.mxu0 0.0
      %2666 = vmatpush1.msra.mxu0 %v301
      %2667 = vmatprep.subr.mxu0 0.0
      %2668 = vmatpush1.msra.mxu0 %v302
      %2669 = vmatprep.subr.mxu0 0.0
      %2670 = vmatpush1.msra.mxu0 %v303
      %2671 = vmatprep.subr.mxu0 0.0
      %2672 = vmatpush1.msra.mxu0 %v304
      %2673 = vmatprep.subr.mxu0 0.0
      %2674 = vmatpush1.msra.mxu0 %v305
      %2675 = vmatprep.subr.mxu0 0.0
      %2676 = vmatpush1.msra.mxu0 %v306
      %2677 = vmatprep.subr.mxu0 0.0
      %2678 = vmatpush1.msra.mxu0 %v307
      %2679 = vmatprep.subr.mxu0 0.0
      %2680 = vmatpush1.msra.mxu0 %v308
      %2681 = vmatprep.subr.mxu0 0.0
      %2682 = vmatpush1.msra.mxu0 %v309
      %2683 = vmatprep.subr.mxu0 0.0
      %2684 = vmatpush1.msra.mxu0 %v310
      %2685 = vmatprep.subr.mxu0 0.0
      %2686 = vmatpush1.msra.mxu0 %v311
      %2687 = vmatprep.subr.mxu0 0.0
      %2688 = vmatpush1.msra.mxu0 %v312
      %2689 = vmatprep.subr.mxu0 0.0
      %2690 = vmatpush1.msra.mxu0 %v313
      %2691 = vmatprep.subr.mxu0 0.0
      %2692 = vmatpush1.msra.mxu0 %v314
      %2693 = vmatprep.subr.mxu0 0.0
      %2694 = vmatpush1.msra.mxu0 %v315
      %2695 = vmatprep.subr.mxu0 0.0
      %2696 = vmatpush1.msra.mxu0 %v316
      %2697 = vmatprep.subr.mxu0 0.0
      %2698 = vmatpush1.msra.mxu0 %v317
      %2699 = vmatprep.subr.mxu0 0.0
      %2700 = vmatpush1.msra.mxu0 %v318
      %2701 = vmatprep.subr.mxu0 0.0
      %2702 = vmatpush1.msra.mxu0 %v319
      %2703 = vmatprep.subr.mxu0 0.0
      %2704 = vmatpush1.msra.mxu0 %v320
      %2705 = vmatprep.subr.mxu0 0.0
      %2706 = vmatpush1.msra.mxu0 %v321
      %2707 = vmatprep.mubr.f32.mxu0 %v2623
      %2708 = vmatmul.mubr.f32.gmra.mrb[0].mxu0 %v2613
      %v2709 = vpop.f32.mrb[0].mxu0
      %v2710 = vadd.f32 %v678, %v2709
      %v2711 = vpop.f32.mrb[0].mxu0
      %2712 = vmatprep.mubr.f32.mxu0 %v2625
      %2713 = vmatmul.mubr.f32.gmra.mrb[0].mxu0 %v2614
      %v2714 = vpop.f32.mrb[0].mxu0
      %v2715 = vadd.f32 %v678, %v2714
      %v2716 = vpop.f32.mrb[0].mxu0
      %2717 = vmatprep.mubr.f32.mxu0 %v2627
      %2718 = vmatmul.mubr.f32.gmra.mrb[0].mxu0 %v2615
      %v2719 = vpop.f32.mrb[0].mxu0
      %v2720 = vadd.f32 %v678, %v2719
      %v2721 = vpop.f32.mrb[0].mxu0
      %2722 = vmatprep.mubr.f32.mxu0 %v2626
      %2723 = vmatmul.mubr.f32.gmra.mrb[0].mxu0 %v2616
      %v2724 = vpop.f32.mrb[0].mxu0
      %v2725 = vadd.f32 %v678, %v2724
      %v2726 = vpop.f32.mrb[0].mxu0
      %2727 = vdwg.mxu0
      %2728 = vmatprep.subr.mxu0 0.0
      %2729 = vmatpush1.msra.mxu0 %v322
      %2730 = vmatprep.subr.mxu0 0.0
      %2731 = vmatpush1.msra.mxu0 %v323
      %2732 = vmatprep.subr.mxu0 0.0
      %2733 = vmatpush1.msra.mxu0 %v324
      %2734 = vmatprep.subr.mxu0 0.0
      %2735 = vmatpush1.msra.mxu0 %v325
      %2736 = vmatprep.subr.mxu0 0.0
      %2737 = vmatpush1.msra.mxu0 %v326
      %2738 = vmatprep.subr.mxu0 0.0
      %2739 = vmatpush1.msra.mxu0 %v327
      %2740 = vmatprep.subr.mxu0 0.0
      %2741 = vmatpush1.msra.mxu0 %v328
      %2742 = vmatprep.subr.mxu0 0.0
      %2743 = vmatpush1.msra.mxu0 %v329
      %2744 = vmatprep.subr.mxu0 0.0
      %2745 = vmatpush1.msra.mxu0 %v330
      %2746 = vmatprep.subr.mxu0 0.0
      %2747 = vmatpush1.msra.mxu0 %v331
      %2748 = vmatprep.subr.mxu0 0.0
      %2749 = vmatpush1.msra.mxu0 %v332
      %2750 = vmatprep.subr.mxu0 0.0
      %2751 = vmatpush1.msra.mxu0 %v333
      %2752 = vmatprep.subr.mxu0 0.0
      %2753 = vmatpush1.msra.mxu0 %v334
      %2754 = vmatprep.subr.mxu0 0.0
      %2755 = vmatpush1.msra.mxu0 %v335
      %2756 = vmatprep.subr.mxu0 0.0
      %2757 = vmatpush1.msra.mxu0 %v336
      %2758 = vmatprep.subr.mxu0 0.0
      %2759 = vmatpush1.msra.mxu0 %v337
      %2760 = vmatprep.subr.mxu0 0.0
      %2761 = vmatpush1.msra.mxu0 0.0
      %2762 = vmatprep.subr.mxu0 0.0
      %2763 = vmatpush1.msra.mxu0 0.0
      %2764 = vmatprep.subr.mxu0 0.0
      %2765 = vmatpush1.msra.mxu0 0.0
      %2766 = vmatprep.subr.mxu0 0.0
      %2767 = vmatpush1.msra.mxu0 0.0
      %2768 = vmatprep.subr.mxu0 0.0
      %2769 = vmatpush1.msra.mxu0 0.0
      %2770 = vmatprep.subr.mxu0 0.0
      %2771 = vmatpush1.msra.mxu0 0.0
      %2772 = vmatprep.subr.mxu0 0.0
      %2773 = vmatpush1.msra.mxu0 0.0
      %2774 = vmatprep.subr.mxu0 0.0
      %2775 = vmatpush1.msra.mxu0 0.0
      %2776 = vmatprep.subr.mxu0 0.0
      %2777 = vmatpush1.msra.mxu0 0.0
      %2778 = vmatprep.subr.mxu0 0.0
      %2779 = vmatpush1.msra.mxu0 0.0
      %2780 = vmatprep.subr.mxu0 0.0
      %2781 = vmatpush1.msra.mxu0 0.0
      %2782 = vmatprep.subr.mxu0 0.0
      %2783 = vmatpush1.msra.mxu0 0.0
      %2784 = vmatprep.subr.mxu0 0.0
      %2785 = vmatpush1.msra.mxu0 0.0
      %2786 = vmatprep.subr.mxu0 0.0
      %2787 = vmatpush1.msra.mxu0 0.0
      %2788 = vmatprep.subr.mxu0 0.0
      %2789 = vmatpush1.msra.mxu0 0.0
      %2790 = vmatprep.subr.mxu0 0.0
      %2791 = vmatpush1.msra.mxu0 0.0
      %2792 = vmatprep.mubr.f32.mxu0 0.0
      %2793 = vmatmul.mubr.f32.gmra.mrb[0].mxu0 %v2634
      %v2794 = vpop.f32.mrb[0].mxu0
      %v2795 = vadd.f32 %v2710, %v2794
      %v2796 = vpop.f32.mrb[0].mxu0
      %2797 = vmatprep.mubr.f32.mxu0 0.0
      %2798 = vmatmul.mubr.f32.gmra.mrb[0].mxu0 %v2636
      %v2799 = vpop.f32.mrb[0].mxu0
      %v2800 = vadd.f32 %v2715, %v2799
      %v2801 = vpop.f32.mrb[0].mxu0
      %2802 = vmatprep.mubr.f32.mxu0 0.0
      %2803 = vmatmul.mubr.f32.gmra.mrb[0].mxu0 %v2638
      %v2804 = vpop.f32.mrb[0].mxu0
      %v2805 = vadd.f32 %v2720, %v2804
      %v2806 = vpop.f32.mrb[0].mxu0
      %2807 = vmatprep.mubr.f32.mxu0 0.0
      %2808 = vmatmul.mubr.f32.gmra.mrb[0].mxu0 %v2637
      %v2809 = vpop.f32.mrb[0].mxu0
      %v2810 = vadd.f32 %v2725, %v2809
      %v2811 = vpop.f32.mrb[0].mxu0
      %2812 = vdwg.mxu0
      %vm2813 = vcmp.gt.f32.partialorder %v2795, 0.0
      %vm2814 = vcmp.gt.f32.partialorder %v2800, 0.0
      %vm2815 = vcmp.gt.f32.partialorder %v2805, 0.0
      %vm2816 = vcmp.gt.f32.partialorder %v2810, 0.0
      %v2817 = vmul.f32 %v2795, 1.442695
      %v2818 = vpow.pop %v2817
      %v2819 = vmul.f32 %v2800, 1.442695
      %v2820 = vpow.pop %v2819
      %v2821 = vmul.f32 %v2805, 1.442695
      %v2822 = vpow.pop %v2821
      %v2823 = vmul.f32 %v2810, 1.442695
      %v2824 = vpow.pop %v2823
      %v2825 = vsub.f32 %v2818, 1.0
      %v2826 = vsub.f32 %v2820, 1.0
      %v2827 = vsub.f32 %v2822, 1.0
      %v2828 = vsub.f32 %v2824, 1.0
      %v2829 = vsel %vm2813, %v2795, %v2825
      %v2830 = vsel %vm2814, %v2800, %v2826
      %v2831 = vsel %vm2815, %v2805, %v2827
      %v2832 = vsel %vm2816, %v2810, %v2828
      %2833 = vst [vmem:[#allocation2 + $0x60] sm:$0xff] %v2829
      %2834 = vst [vmem:[#allocation2 + $0x68] sm:$0xff] %v2830
      %2835 = vst [vmem:[#allocation2 + $0x70] sm:$0xff] %v2831
      %2836 = vst [vmem:[#allocation2 + $0x78] sm:$0x1f] %v2832
      %s2837 = scalar_lea.vmem [#allocation2], 96
      %v2838 = vld [vmem:[%s2837] ss:$2 sm:$0xff]
      %s2839 = scalar_lea.vmem [#allocation2], 112
      %v2840 = vld [vmem:[%s2839] ss:$2 sm:$0x3f]
      %s2841 = scalar_lea.vmem [#allocation2], 97
      %v2842 = vld [vmem:[%s2841] ss:$2 sm:$0xff]
      %s2843 = scalar_lea.vmem [#allocation2], 113
      %v2844 = vld [vmem:[%s2843] ss:$2 sm:$0x3f]
      %v2845 = vmax.f32 %v2838, %v2842
      %v2846 = vmax.f32 %v2840, %v2844
      %v2849 = vrot.slane %v2845, 1
      %v2850 = vrot.slane %v2846, 1
      %v2851 = vsel %vm650, %v2849, %v2850
      %v2854 = vrot.slane %v2845, 2
      %v2855 = vrot.slane %v2846, 2
      %v2856 = vsel %vm662, %v2854, %v2855
      %2859 = vmatprep.subr.mxu0 0.0
      %2860 = vmatpush1.msra.mxu0 %v339
      %2861 = vmatprep.subr.mxu0 0.0
      %2862 = vmatpush1.msra.mxu0 %v340
      %2863 = vmatprep.subr.mxu0 0.0
      %2864 = vmatpush1.msra.mxu0 %v341
      %2865 = vmatprep.subr.mxu0 0.0
      %2866 = vmatpush1.msra.mxu0 %v342
      %2867 = vmatprep.subr.mxu0 0.0
      %2868 = vmatpush1.msra.mxu0 %v343
      %2869 = vmatprep.subr.mxu0 0.0
      %2870 = vmatpush1.msra.mxu0 %v344
      %2871 = vmatprep.subr.mxu0 0.0
      %2872 = vmatpush1.msra.mxu0 %v345
      %2873 = vmatprep.subr.mxu0 0.0
      %2874 = vmatpush1.msra.mxu0 %v346
      %2875 = vmatprep.subr.mxu0 0.0
      %2876 = vmatpush1.msra.mxu0 %v347
      %2877 = vmatprep.subr.mxu0 0.0
      %2878 = vmatpush1.msra.mxu0 %v348
      %2879 = vmatprep.subr.mxu0 0.0
      %2880 = vmatpush1.msra.mxu0 %v349
      %2881 = vmatprep.subr.mxu0 0.0
      %2882 = vmatpush1.msra.mxu0 %v350
      %2883 = vmatprep.subr.mxu0 0.0
      %2884 = vmatpush1.msra.mxu0 %v351
      %2885 = vmatprep.subr.mxu0 0.0
      %2886 = vmatpush1.msra.mxu0 %v352
      %2887 = vmatprep.subr.mxu0 0.0
      %2888 = vmatpush1.msra.mxu0 %v353
      %2889 = vmatprep.subr.mxu0 0.0
      %2890 = vmatpush1.msra.mxu0 %v354
      %2891 = vmatprep.subr.mxu0 0.0
      %2892 = vmatpush1.msra.mxu0 %v355
      %2893 = vmatprep.subr.mxu0 0.0
      %2894 = vmatpush1.msra.mxu0 %v356
      %2895 = vmatprep.subr.mxu0 0.0
      %2896 = vmatpush1.msra.mxu0 %v357
      %2897 = vmatprep.subr.mxu0 0.0
      %2898 = vmatpush1.msra.mxu0 %v358
      %2899 = vmatprep.subr.mxu0 0.0
      %2900 = vmatpush1.msra.mxu0 %v359
      %2901 = vmatprep.subr.mxu0 0.0
      %2902 = vmatpush1.msra.mxu0 %v360
      %2903 = vmatprep.subr.mxu0 0.0
      %2904 = vmatpush1.msra.mxu0 %v361
      %2905 = vmatprep.subr.mxu0 0.0
      %2906 = vmatpush1.msra.mxu0 %v362
      %2907 = vmatprep.subr.mxu0 0.0
      %2908 = vmatpush1.msra.mxu0 %v363
      %2909 = vmatprep.subr.mxu0 0.0
      %2910 = vmatpush1.msra.mxu0 %v364
      %2911 = vmatprep.subr.mxu0 0.0
      %2912 = vmatpush1.msra.mxu0 %v365
      %2913 = vmatprep.subr.mxu0 0.0
      %2914 = vmatpush1.msra.mxu0 %v366
      %2915 = vmatprep.subr.mxu0 0.0
      %2916 = vmatpush1.msra.mxu0 %v367
      %2917 = vmatprep.subr.mxu0 0.0
      %2918 = vmatpush1.msra.mxu0 %v368
      %2919 = vmatprep.subr.mxu0 0.0
      %2920 = vmatpush1.msra.mxu0 %v369
      %2921 = vmatprep.subr.mxu0 0.0
      %2922 = vmatpush1.msra.mxu0 %v370
      %2923 = vmatprep.mubr.f32.mxu0 %v2851
      %2924 = vmatmul.mubr.f32.gmra.mrb[0].mxu0 %v2845
      %v2925 = vpop.f32.mrb[0].mxu0
      %v2926 = vadd.f32 %v899, %v2925
      %v2927 = vpop.f32.mrb[0].mxu0
      %2928 = vmatprep.mubr.f32.mxu0 %v2850
      %2929 = vmatmul.mubr.f32.gmra.mrb[0].mxu0 %v2846
      %v2930 = vpop.f32.mrb[0].mxu0
      %v2931 = vadd.f32 %v899, %v2930
      %v2932 = vpop.f32.mrb[0].mxu0
      %2933 = vdwg.mxu0
      %2934 = vmatprep.subr.mxu0 0.0
      %2935 = vmatpush1.msra.mxu0 %v371
      %2936 = vmatprep.subr.mxu0 0.0
      %2937 = vmatpush1.msra.mxu0 %v372
      %2938 = vmatprep.subr.mxu0 0.0
      %2939 = vmatpush1.msra.mxu0 %v373
      %2940 = vmatprep.subr.mxu0 0.0
      %2941 = vmatpush1.msra.mxu0 %v374
      %2942 = vmatprep.subr.mxu0 0.0
      %2943 = vmatpush1.msra.mxu0 %v375
      %2944 = vmatprep.subr.mxu0 0.0
      %2945 = vmatpush1.msra.mxu0 %v376
      %2946 = vmatprep.subr.mxu0 0.0
      %2947 = vmatpush1.msra.mxu0 %v377
      %2948 = vmatprep.subr.mxu0 0.0
      %2949 = vmatpush1.msra.mxu0 %v378
      %2950 = vmatprep.subr.mxu0 0.0
      %2951 = vmatpush1.msra.mxu0 %v379
      %2952 = vmatprep.subr.mxu0 0.0
      %2953 = vmatpush1.msra.mxu0 %v380
      %2954 = vmatprep.subr.mxu0 0.0
      %2955 = vmatpush1.msra.mxu0 %v381
      %2956 = vmatprep.subr.mxu0 0.0
      %2957 = vmatpush1.msra.mxu0 %v382
      %2958 = vmatprep.subr.mxu0 0.0
      %2959 = vmatpush1.msra.mxu0 %v383
      %2960 = vmatprep.subr.mxu0 0.0
      %2961 = vmatpush1.msra.mxu0 %v384
      %2962 = vmatprep.subr.mxu0 0.0
      %2963 = vmatpush1.msra.mxu0 %v385
      %2964 = vmatprep.subr.mxu0 0.0
      %2965 = vmatpush1.msra.mxu0 %v386
      %2966 = vmatprep.subr.mxu0 0.0
      %2967 = vmatpush1.msra.mxu0 0.0
      %2968 = vmatprep.subr.mxu0 0.0
      %2969 = vmatpush1.msra.mxu0 0.0
      %2970 = vmatprep.subr.mxu0 0.0
      %2971 = vmatpush1.msra.mxu0 0.0
      %2972 = vmatprep.subr.mxu0 0.0
      %2973 = vmatpush1.msra.mxu0 0.0
      %2974 = vmatprep.subr.mxu0 0.0
      %2975 = vmatpush1.msra.mxu0 0.0
      %2976 = vmatprep.subr.mxu0 0.0
      %2977 = vmatpush1.msra.mxu0 0.0
      %2978 = vmatprep.subr.mxu0 0.0
      %2979 = vmatpush1.msra.mxu0 0.0
      %2980 = vmatprep.subr.mxu0 0.0
      %2981 = vmatpush1.msra.mxu0 0.0
      %2982 = vmatprep.subr.mxu0 0.0
      %2983 = vmatpush1.msra.mxu0 0.0
      %2984 = vmatprep.subr.mxu0 0.0
      %2985 = vmatpush1.msra.mxu0 0.0
      %2986 = vmatprep.subr.mxu0 0.0
      %2987 = vmatpush1.msra.mxu0 0.0
      %2988 = vmatprep.subr.mxu0 0.0
      %2989 = vmatpush1.msra.mxu0 0.0
      %2990 = vmatprep.subr.mxu0 0.0
      %2991 = vmatpush1.msra.mxu0 0.0
      %2992 = vmatprep.subr.mxu0 0.0
      %2993 = vmatpush1.msra.mxu0 0.0
      %2994 = vmatprep.subr.mxu0 0.0
      %2995 = vmatpush1.msra.mxu0 0.0
      %2996 = vmatprep.subr.mxu0 0.0
      %2997 = vmatpush1.msra.mxu0 0.0
      %2998 = vmatprep.mubr.f32.mxu0 0.0
      %2999 = vmatmul.mubr.f32.gmra.mrb[0].mxu0 %v2856
      %v3000 = vpop.f32.mrb[0].mxu0
      %v3001 = vadd.f32 %v2926, %v3000
      %v3002 = vpop.f32.mrb[0].mxu0
      %3003 = vmatprep.mubr.f32.mxu0 0.0
      %3004 = vmatmul.mubr.f32.gmra.mrb[0].mxu0 %v2855
      %v3005 = vpop.f32.mrb[0].mxu0
      %v3006 = vadd.f32 %v2931, %v3005
      %v3007 = vpop.f32.mrb[0].mxu0
      %3008 = vdwg.mxu0
      %vm3009 = vcmp.gt.f32.partialorder %v3001, 0.0
      %vm3010 = vcmp.gt.f32.partialorder %v3006, 0.0
      %v3011 = vmul.f32 %v3001, 1.442695
      %v3012 = vpow.pop %v3011
      %v3013 = vmul.f32 %v3006, 1.442695
      %v3014 = vpow.pop %v3013
      %v3015 = vsub.f32 %v3012, 1.0
      %v3016 = vsub.f32 %v3014, 1.0
      %v3017 = vsel %vm3009, %v3001, %v3015
      %v3018 = vsel %vm3010, %v3006, %v3016
      %s3019 = scalar_lea.vmem %s285, 48
      %3020 = vst [vmem:[%s3019] sm:$0xff] %v3017
      %3021 = vst [vmem:[%s3019 + $0x8] sm:$0xf] %v3018
      %s3022 = smul.u32 4, %s18
      %p3023 = scmp.lt.s32.totalorder %s3022, 7
      %s3024 = scalar_select %p3023, %s3022, 7
      %s3025 = smul.addr %s3024, 2
      %s3026 = smul.addr %s3025, 8
      %s3027 = scalar_lea.vmem %s7, %s3026
      // Predicated region
      $region49: #{encode_pallas.1} parent=47 // pred_check
        %p3028 = pneg %p188
      $region50: #{encode_pallas.1} parent=47 // pred_check_branch
        %3030 = sbr.rel (%p3028) target = $region52
      $region51: #{encode_pallas.1} parent=47 // pred_region
        %s3031 = smul.u32 4, %s18
      $region52: #{encode_pallas.1} parent=47 // pred_fallthru
        _
    $region48: #{encode_pallas.1} parent=5 // pred_fallthru
      _
    %p3032 = scmp.le.s32.totalorder 2, %s13
    // Predicated region
    $region53: #{encode_pallas.1} parent=5 // pred_check
      %p3033 = pneg %p3032
    $region54: #{encode_pallas.1} parent=5 // pred_check_branch
      %3035 = sbr.rel (%p3033) target = $region56
    $region55: #{encode_pallas.1} parent=5 // pred_region
      %s3036 = ssub.s32 %s13, 2
      // Predicated region
      $region57: #{encode_pallas.1} parent=55 // pred_check
        %p3037 = pneg %p194
      $region58: #{encode_pallas.1} parent=55 // pred_check_branch
        %3039 = sbr.rel (%p3037) target = $region60
      $region59: #{encode_pallas.1} parent=55 // pred_region
        %s3040 = smul.u32 4, %s19
        %p3041 = scmp.lt.s32.totalorder %s3040, 7
        %s3042 = scalar_select %p3041, %s3040, 7
        %s3043 = smul.addr %s3042, 2
        %s3044 = smul.addr %s3043, 8
        %s3045 = scalar_lea.vmem %s7, %s3044
      $region60: #{encode_pallas.1} parent=55 // pred_fallthru
        _
    $region56: #{encode_pallas.1} parent=5 // pred_fallthru
      _
  $region6: #{encode_pallas.1} parent=0 // loop_footer
    %s17 = sadd.s32 1, %s13
  $region7: #{encode_pallas.1} parent=0 // loop_footer_branch
    %12 = sbr.rel target = $region3
  $region8: #{encode_pallas.1} parent=0 // loop_exit
    _

</llo_original>
